<compile_context>
chip_gen: v6e
topology: v6e:2x2x1
jax: 0.10.0
libtpu: 0.0.40
codegen_flags: <defaults>
</compile_context>

<pallas_src>
import jax
import jax.numpy as jnp
from jax.experimental import pallas as pl
from jax.experimental.pallas import tpu as pltpu


def _lfa_fused_kernel(feat_ref, idx_ref, wcat_ref, bcat_ref, w2_ref, b2_ref,
                      w4_ref, b4_ref, out_ref, rcat_sc, p_sc):
    # feat_ref: [1, d_in, N]          full per-batch features (re-DMA'd only on batch change)
    # idx_ref:  [1, K, TN]            neighbour indices for this point tile (int32)
    # wcat_ref: [d_in+2*d_out, d_in]  stacked folded weights [W1; Ws; W3]
    # bcat_ref: [d_in+2*d_out, 1]     stacked folded biases
    # w2/b2, w4/b4:                   LFE.mlp2 and LFA.mlp (BN folded)
    # out_ref:  [1, d_out, TN]
    # rcat_sc:  [d_in+d_out, N]       VMEM scratch: gather source [R1; Rs]
    # p_sc:     [d_out, N]            VMEM scratch: self terms Rs + H3
    i = pl.program_id(1)
    d_in = feat_ref.shape[1]
    d_r = rcat_sc.shape[0]
    N = rcat_sc.shape[1]

    # ---- Stage 1 (once per batch row): fused per-point MLPs, kept in VMEM ----
    @pl.when(i == 0)
    def _():
        x = feat_ref[0]                                               # [d_in, N]
        h = jnp.dot(wcat_ref[...], x,
                    preferred_element_type=jnp.float32) + bcat_ref[...]
        h = jnp.maximum(h, 0.0)                                       # [d_in+2*d_out, N]
        rcat_sc[...] = h[:d_r]                                        # [R1; Rs]
        p_sc[...] = h[d_in:d_r] + h[d_r:]                             # Rs + H3

    # ---- Stage 2: neighbour aggregation for this point tile ----
    idx = idx_ref[0]                                                  # [K, TN]
    K, TN = idx.shape

    # Count matrix C[n, t] = #{k : idx[t, k] == n}.  Accumulated directly in
    # f32; rows is an [N, 1] column broadcast by the compare (no [N, TN] iota).
    rows = jax.lax.broadcasted_iota(jnp.int32, (N, 1), 0)
    cnt = (idx[0:1, :] == rows).astype(jnp.float32)
    for k in range(1, K):
        cnt = cnt + (idx[k:k + 1, :] == rows).astype(jnp.float32)
    # NOTE: out-of-range neighbour indices match no row and contribute zero.

    # Both neighbour sums (LFE + SPE branches) in a single MXU matmul.
    acc = jnp.dot(rcat_sc[...], cnt, preferred_element_type=jnp.float32)  # [d_r, TN]
    acc_lfe = acc[:d_in]                                              # sum_k ReLU(W1 x_k + b1)
    acc_spe = acc[d_in:]                                              # sum_k ReLU(Ws x_k + bs)

    start = pl.multiple_of(i * TN, TN)
    p_tile = p_sc[:, pl.ds(start, TN)]                                # (Rs + H3) for this tile

    # lfe + spe = ReLU(W2 acc_lfe + b2) + acc_spe + (Rs + H3)
    f = jnp.maximum(
        jnp.dot(w2_ref[...], acc_lfe, preferred_element_type=jnp.float32) + b2_ref[...],
        0.0) + acc_spe + p_tile
    # Final LFA mlp (d_out -> d_out, conv+BN folded, ReLU).
    out = jnp.dot(w4_ref[...], f, preferred_element_type=jnp.float32) + b4_ref[...]
    out_ref[0] = jnp.maximum(out, 0.0).astype(out_ref.dtype)


def lfa_forward(feature_nchw, neigh_idx, params, *, tile_n=512):
    """feature_nchw: [B, d_in, N, 1] f32; neigh_idx: [B, N, K] int -> [B, d_out, N, 1]."""
    B, d_in, N, _ = feature_nchw.shape
    K = neigh_idx.shape[-1]
    d_out = params["w2"].shape[0]

    tile_n = min(tile_n, N)
    assert tile_n % 128 == 0, "tile_n must be a multiple of 128"
    assert N % tile_n == 0, "N must be a multiple of tile_n"

    feat = feature_nchw[..., 0]                                       # [B, d_in, N] lane-dense
    idx_t = jnp.transpose(neigh_idx, (0, 2, 1)).astype(jnp.int32)     # [B, K, N]

    # Fused stage-1 weights: rows = [W1; Ws; W3] (BN already folded).
    wcat = jnp.concatenate([params["w1"], params["ws"], params["w3"]], axis=0)
    bcat = jnp.concatenate([params["b1"], params["bs"], params["b3"]], axis=0)[:, None]
    d_s = d_in + 2 * d_out
    d_r = d_in + d_out

    # Explicit VMEM budget: scratch + double-buffered blocks + weights + the
    # in-kernel cnt/acc temporaries, with 2x headroom.  Cap at 40 MiB so the
    # limit stays well inside v7x's 64 MiB/TC; floor at 16 MiB (v5e default).
    f32 = 4
    need = ((d_r + d_out) * N                                    # rcat / p scratch
            + 2 * (d_in * N + K * tile_n + d_out * tile_n)       # double-buffered blocks
            + N * tile_n                                         # cnt
            + (d_r + 4 * d_out) * tile_n                         # acc/f/out/p_tile temps
            + 2 * (d_s * (d_in + 1) + d_out * (d_in + 1)
                   + d_out * (d_out + 1))) * f32                 # weight blocks
    vmem_limit = int(min(40 << 20, max(16 << 20, 2 * need)))

    const = lambda b, i: (0, 0)
    tiled = lambda b, i: (b, 0, i)

    out = pl.pallas_call(
        _lfa_fused_kernel,
        out_shape=jax.ShapeDtypeStruct((B, d_out, N), jnp.float32),
        grid_spec=pltpu.PrefetchScalarGridSpec(
            num_scalar_prefetch=0,
            grid=(B, N // tile_n),
            in_specs=[
                # Full per-batch feature row; index_map constant over the point
                # tile axis -> only re-DMA'd when the batch index changes.
                pl.BlockSpec((1, d_in, N), lambda b, i: (b, 0, 0)),
                pl.BlockSpec((1, K, tile_n), tiled),
                pl.BlockSpec((d_s, d_in), const),
                pl.BlockSpec((d_s, 1), const),
                pl.BlockSpec((d_out, d_in), const),
                pl.BlockSpec((d_out, 1), const),
                pl.BlockSpec((d_out, d_out), const),
                pl.BlockSpec((d_out, 1), const),
            ],
            out_specs=pl.BlockSpec((1, d_out, tile_n), tiled),
            scratch_shapes=[
                pltpu.VMEM((d_r, N), jnp.float32),    # Rcat = [R1; Rs]
                pltpu.VMEM((d_out, N), jnp.float32),  # P = Rs + H3
            ],
        ),
        compiler_params=pltpu.CompilerParams(
            # Scratch written at tile 0 and read by later tiles of the same
            # batch -> the point-tile axis must be "arbitrary".
            dimension_semantics=("parallel", "arbitrary"),
            vmem_limit_bytes=vmem_limit),
    )(feat, idx_t, wcat, bcat,
      params["w2"], params["b2"][:, None],
      params["w4"], params["b4"][:, None])

    return out[..., None]                                             # NCHW [B, d_out, N, 1]


def make_params(key, d_in, d_out, eps=1e-5):
    """Deterministic synthetic weights; BN (inference stats) folded into the 1x1 conv.

    Weights are channels-first: w [cout, cin], b [cout]."""
    ks = jax.random.split(key, 5)

    def conv_bn(cin, cout, k):
        kw, kg, kb, km, kv = jax.random.split(k, 5)
        w = jax.random.normal(kw, (cout, cin), jnp.float32) / jnp.sqrt(cin)
        gamma = 1.0 + 0.1 * jax.random.normal(kg, (cout,), jnp.float32)
        beta = 0.1 * jax.random.normal(kb, (cout,), jnp.float32)
        mean = 0.1 * jax.random.normal(km, (cout,), jnp.float32)
        var = 1.0 + 0.1 * jax.random.uniform(kv, (cout,), jnp.float32)
        s = gamma / jnp.sqrt(var + eps)
        return (w * s[:, None]).astype(jnp.float32), (beta - s * mean).astype(jnp.float32)

    w1, b1 = conv_bn(d_in, d_in, ks[0])      # LFE.mlp1
    w2, b2 = conv_bn(d_in, d_out, ks[1])     # LFE.mlp2
    w3, b3 = conv_bn(d_in, d_out, ks[2])     # LFE.mlp3
    ws, bs = conv_bn(d_in, d_out, ks[3])     # SPE.mlp2
    w4, b4 = conv_bn(d_out, d_out, ks[4])    # LFA.mlp
    return dict(w1=w1, b1=b1, w2=w2, b2=b2, w3=w3, b3=b3,
                ws=ws, bs=bs, w4=w4, b4=b4)


def lfa_reference(feature_nchw, neigh_idx, params):
    """Pure-JAX reference mirroring the PyTorch LFA forward (SPE + LFE + mlp)."""
    hp = jax.lax.Precision.HIGHEST
    feat = jnp.transpose(feature_nchw[..., 0], (0, 2, 1))             # [B, N, d_in]
    gathered = jax.vmap(lambda f, i: f[i])(feat, neigh_idx)           # [B, N, K, d_in]

    def mlp(x, w, b):                                                 # relu(x @ w.T + b)
        return jnp.maximum(jnp.einsum('...i,oi->...o', x, w, precision=hp) + b, 0.0)

    # SPE: concat the point itself with its K neighbours, mlp, sum over slots.
    cat = jnp.concatenate([feat[:, :, None, :], gathered], axis=2)    # [B,N,K+1,d_in]
    spe = mlp(cat, params["ws"], params["bs"]).sum(axis=2)            # [B,N,d_out]
    # LFE
    h1 = mlp(gathered, params["w1"], params["b1"]).sum(axis=2)        # [B,N,d_in]
    lfe = mlp(h1, params["w2"], params["b2"]) + mlp(feat, params["w3"], params["b3"])
    # LFA: final mlp on spe + lfe
    out = mlp(spe + lfe, params["w4"], params["b4"])                  # [B,N,d_out]
    return jnp.transpose(out, (0, 2, 1))[..., None]                   # [B,d_out,N,1]


if __name__ == "__main__":
    B, d_in, d_out, N, K = 2, 8, 16, 256, 8
    key = jax.random.PRNGKey(0)
    kf, ki, kp = jax.random.split(key, 3)

    feature = jax.random.normal(kf, (B, d_in, N, 1), dtype=jnp.float32)   # NCHW like PyTorch
    neigh_idx = jax.random.randint(ki, (B, N, K), 0, N, dtype=jnp.int32)
    params = make_params(kp, d_in, d_out)

    ref = lfa_reference(feature, neigh_idx, params)

    # Default large tile (clamped to N -> single tile per batch row here).
    out = jax.block_until_ready(lfa_forward(feature, neigh_idx, params))
    assert out.shape == (B, d_out, N, 1), out.shape
    assert jnp.allclose(out, ref, atol=2e-4, rtol=2e-4), "mismatch vs reference (single tile)"

    # Multi-tile path: exercises the pl.when stage-1 + scratch re-read across tiles.
    out_mt = jax.block_until_ready(lfa_forward(feature, neigh_idx, params, tile_n=128))
    assert jnp.allclose(out_mt, ref, atol=2e-4, rtol=2e-4), "mismatch vs reference (multi tile)"

    print("KERNEL_OK")
</pallas_src>

<mosaic_0001>
module attributes {stable_mosaic.version = 11 : i64} {
  func.func @_lfa_fused_kernel(%arg0: i32, %arg1: i32, %arg2: memref<1x8x256xf32, #tpu.memory_space<vmem>>, %arg3: memref<1x8x256xi32, #tpu.memory_space<vmem>>, %arg4: memref<40x8xf32, #tpu.memory_space<vmem>>, %arg5: memref<40x1xf32, #tpu.memory_space<vmem>>, %arg6: memref<16x8xf32, #tpu.memory_space<vmem>>, %arg7: memref<16x1xf32, #tpu.memory_space<vmem>>, %arg8: memref<16x16xf32, #tpu.memory_space<vmem>>, %arg9: memref<16x1xf32, #tpu.memory_space<vmem>>, %arg10: memref<1x16x256xf32, #tpu.memory_space<vmem>>, %arg11: memref<24x256xf32, #tpu.memory_space<vmem>>, %arg12: memref<16x256xf32, #tpu.memory_space<vmem>>) attributes {dimension_semantics = [#tpu.dimension_semantics<parallel>, #tpu.dimension_semantics<arbitrary>], iteration_bounds = array<i64: 2, 1>, scalar_prefetch = 0 : i64, scratch_operands = 2 : i64, tpu.core_type = #tpu.core_type<tc>, window_params = [{transform_indices = @transform_0, window_bounds = array<i64: 1, 8, 256>}, {transform_indices = @transform_1, window_bounds = array<i64: 1, 8, 256>}, {pipeline_mode = #tpu.pipeline_mode<synchronous>, transform_indices = @transform_2, window_bounds = array<i64: 40, 8>}, {pipeline_mode = #tpu.pipeline_mode<synchronous>, transform_indices = @transform_3, window_bounds = array<i64: 40, 1>}, {pipeline_mode = #tpu.pipeline_mode<synchronous>, transform_indices = @transform_4, window_bounds = array<i64: 16, 8>}, {pipeline_mode = #tpu.pipeline_mode<synchronous>, transform_indices = @transform_5, window_bounds = array<i64: 16, 1>}, {pipeline_mode = #tpu.pipeline_mode<synchronous>, transform_indices = @transform_6, window_bounds = array<i64: 16, 16>}, {pipeline_mode = #tpu.pipeline_mode<synchronous>, transform_indices = @transform_7, window_bounds = array<i64: 16, 1>}, {transform_indices = @transform_8, window_bounds = array<i64: 1, 16, 256>}]} {
    %c0_i32 = arith.constant 0 : i32
    %0 = arith.cmpi eq, %arg1, %c0_i32 : i32
    %1 = arith.extui %0 : i1 to i32
    %c0_i32_0 = arith.constant 0 : i32
    %2 = arith.cmpi ne, %1, %c0_i32_0 : i32
    scf.if %2 {
      %c0_21 = arith.constant 0 : index
      %c0_22 = arith.constant 0 : index
      %c0_23 = arith.constant 0 : index
      %88 = vector.load %arg2[%c0_21, %c0_22, %c0_23] : memref<1x8x256xf32, #tpu.memory_space<vmem>>, vector<1x8x256xf32>
      %89 = vector.shape_cast %88 : vector<1x8x256xf32> to vector<8x256xf32>
      %c0_24 = arith.constant 0 : index
      %c0_25 = arith.constant 0 : index
      %90 = vector.load %arg4[%c0_24, %c0_25] : memref<40x8xf32, #tpu.memory_space<vmem>>, vector<40x8xf32>
      %cst_26 = arith.constant dense<0.000000e+00> : vector<40x256xf32>
      %91 = tpu.matmul %90, %89, %cst_26 {dimension_numbers = #tpu.dot_dimension_numbers<[1], [0], [0], [1], [0, 0, 1, 1], [], []>} : vector<40x8xf32>, vector<8x256xf32>, vector<40x256xf32> -> vector<40x256xf32>
      %c0_27 = arith.constant 0 : index
      %c0_28 = arith.constant 0 : index
      %92 = vector.load %arg5[%c0_27, %c0_28] : memref<40x1xf32, #tpu.memory_space<vmem>>, vector<40x1xf32>
      %93 = vector.broadcast %92 : vector<40x1xf32> to vector<40x256xf32>
      %94 = arith.addf %91, %93 : vector<40x256xf32>
      %cst_29 = arith.constant 0.000000e+00 : f32
      %95 = vector.broadcast %cst_29 : f32 to vector<40x256xf32>
      %96 = arith.maximumf %94, %95 : vector<40x256xf32>
      %97 = vector.extract_strided_slice %96 {offsets = [0, 0], sizes = [24, 256], strides = [1, 1]} : vector<40x256xf32> to vector<24x256xf32>
      %c0_30 = arith.constant 0 : index
      %c0_31 = arith.constant 0 : index
      %98 = vector.load %arg11[%c0_30, %c0_31] : memref<24x256xf32, #tpu.memory_space<vmem>>, vector<24x256xf32>
      tpu.vector_store %arg11[%c0_30, %c0_31], %97 {strides = array<i32>} : memref<24x256xf32, #tpu.memory_space<vmem>>, vector<24x256xf32>,
      %99 = vector.extract_strided_slice %96 {offsets = [8, 0], sizes = [16, 256], strides = [1, 1]} : vector<40x256xf32> to vector<16x256xf32>
      %100 = vector.extract_strided_slice %96 {offsets = [24, 0], sizes = [16, 256], strides = [1, 1]} : vector<40x256xf32> to vector<16x256xf32>
      %101 = arith.addf %99, %100 : vector<16x256xf32>
      %c0_32 = arith.constant 0 : index
      %c0_33 = arith.constant 0 : index
      %102 = vector.load %arg12[%c0_32, %c0_33] : memref<16x256xf32, #tpu.memory_space<vmem>>, vector<16x256xf32>
      tpu.vector_store %arg12[%c0_32, %c0_33], %101 {strides = array<i32>} : memref<16x256xf32, #tpu.memory_space<vmem>>, vector<16x256xf32>,
    } else {
    }
    %c0 = arith.constant 0 : index
    %c0_1 = arith.constant 0 : index
    %c0_2 = arith.constant 0 : index
    %3 = vector.load %arg3[%c0, %c0_1, %c0_2] : memref<1x8x256xi32, #tpu.memory_space<vmem>>, vector<1x8x256xi32>
    %4 = vector.shape_cast %3 : vector<1x8x256xi32> to vector<8x256xi32>
    %5 = tpu.iota {dimensions = array<i32: 0>} : vector<256x1xi32>
    %6 = vector.extract_strided_slice %4 {offsets = [0, 0], sizes = [1, 256], strides = [1, 1]} : vector<8x256xi32> to vector<1x256xi32>
    %7 = vector.broadcast %6 : vector<1x256xi32> to vector<256x256xi32>
    %8 = vector.broadcast %5 : vector<256x1xi32> to vector<256x256xi32>
    %9 = arith.cmpi eq, %7, %8 : vector<256x256xi32>
    %10 = arith.extui %9 : vector<256x256xi1> to vector<256x256xi32>
    %11 = arith.sitofp %10 : vector<256x256xi32> to vector<256x256xf32>
    %12 = vector.extract_strided_slice %4 {offsets = [1, 0], sizes = [1, 256], strides = [1, 1]} : vector<8x256xi32> to vector<1x256xi32>
    %13 = vector.broadcast %12 : vector<1x256xi32> to vector<256x256xi32>
    %14 = vector.broadcast %5 : vector<256x1xi32> to vector<256x256xi32>
    %15 = arith.cmpi eq, %13, %14 : vector<256x256xi32>
    %16 = arith.extui %15 : vector<256x256xi1> to vector<256x256xi32>
    %17 = arith.sitofp %16 : vector<256x256xi32> to vector<256x256xf32>
    %18 = arith.addf %11, %17 : vector<256x256xf32>
    %19 = vector.extract_strided_slice %4 {offsets = [2, 0], sizes = [1, 256], strides = [1, 1]} : vector<8x256xi32> to vector<1x256xi32>
    %20 = vector.broadcast %19 : vector<1x256xi32> to vector<256x256xi32>
    %21 = vector.broadcast %5 : vector<256x1xi32> to vector<256x256xi32>
    %22 = arith.cmpi eq, %20, %21 : vector<256x256xi32>
    %23 = arith.extui %22 : vector<256x256xi1> to vector<256x256xi32>
    %24 = arith.sitofp %23 : vector<256x256xi32> to vector<256x256xf32>
    %25 = arith.addf %18, %24 : vector<256x256xf32>
    %26 = vector.extract_strided_slice %4 {offsets = [3, 0], sizes = [1, 256], strides = [1, 1]} : vector<8x256xi32> to vector<1x256xi32>
    %27 = vector.broadcast %26 : vector<1x256xi32> to vector<256x256xi32>
    %28 = vector.broadcast %5 : vector<256x1xi32> to vector<256x256xi32>
    %29 = arith.cmpi eq, %27, %28 : vector<256x256xi32>
    %30 = arith.extui %29 : vector<256x256xi1> to vector<256x256xi32>
    %31 = arith.sitofp %30 : vector<256x256xi32> to vector<256x256xf32>
    %32 = arith.addf %25, %31 : vector<256x256xf32>
    %33 = vector.extract_strided_slice %4 {offsets = [4, 0], sizes = [1, 256], strides = [1, 1]} : vector<8x256xi32> to vector<1x256xi32>
    %34 = vector.broadcast %33 : vector<1x256xi32> to vector<256x256xi32>
    %35 = vector.broadcast %5 : vector<256x1xi32> to vector<256x256xi32>
    %36 = arith.cmpi eq, %34, %35 : vector<256x256xi32>
    %37 = arith.extui %36 : vector<256x256xi1> to vector<256x256xi32>
    %38 = arith.sitofp %37 : vector<256x256xi32> to vector<256x256xf32>
    %39 = arith.addf %32, %38 : vector<256x256xf32>
    %40 = vector.extract_strided_slice %4 {offsets = [5, 0], sizes = [1, 256], strides = [1, 1]} : vector<8x256xi32> to vector<1x256xi32>
    %41 = vector.broadcast %40 : vector<1x256xi32> to vector<256x256xi32>
    %42 = vector.broadcast %5 : vector<256x1xi32> to vector<256x256xi32>
    %43 = arith.cmpi eq, %41, %42 : vector<256x256xi32>
    %44 = arith.extui %43 : vector<256x256xi1> to vector<256x256xi32>
    %45 = arith.sitofp %44 : vector<256x256xi32> to vector<256x256xf32>
    %46 = arith.addf %39, %45 : vector<256x256xf32>
    %47 = vector.extract_strided_slice %4 {offsets = [6, 0], sizes = [1, 256], strides = [1, 1]} : vector<8x256xi32> to vector<1x256xi32>
    %48 = vector.broadcast %47 : vector<1x256xi32> to vector<256x256xi32>
    %49 = vector.broadcast %5 : vector<256x1xi32> to vector<256x256xi32>
    %50 = arith.cmpi eq, %48, %49 : vector<256x256xi32>
    %51 = arith.extui %50 : vector<256x256xi1> to vector<256x256xi32>
    %52 = arith.sitofp %51 : vector<256x256xi32> to vector<256x256xf32>
    %53 = arith.addf %46, %52 : vector<256x256xf32>
    %54 = vector.extract_strided_slice %4 {offsets = [7, 0], sizes = [1, 256], strides = [1, 1]} : vector<8x256xi32> to vector<1x256xi32>
    %55 = vector.broadcast %54 : vector<1x256xi32> to vector<256x256xi32>
    %56 = vector.broadcast %5 : vector<256x1xi32> to vector<256x256xi32>
    %57 = arith.cmpi eq, %55, %56 : vector<256x256xi32>
    %58 = arith.extui %57 : vector<256x256xi1> to vector<256x256xi32>
    %59 = arith.sitofp %58 : vector<256x256xi32> to vector<256x256xf32>
    %60 = arith.addf %53, %59 : vector<256x256xf32>
    %c0_3 = arith.constant 0 : index
    %c0_4 = arith.constant 0 : index
    %61 = vector.load %arg11[%c0_3, %c0_4] : memref<24x256xf32, #tpu.memory_space<vmem>>, vector<24x256xf32>
    %cst = arith.constant dense<0.000000e+00> : vector<24x256xf32>
    %62 = tpu.matmul %61, %60, %cst {dimension_numbers = #tpu.dot_dimension_numbers<[1], [0], [0], [1], [0, 0, 1, 1], [], []>} : vector<24x256xf32>, vector<256x256xf32>, vector<24x256xf32> -> vector<24x256xf32>
    %63 = vector.extract_strided_slice %62 {offsets = [0, 0], sizes = [8, 256], strides = [1, 1]} : vector<24x256xf32> to vector<8x256xf32>
    %64 = vector.extract_strided_slice %62 {offsets = [8, 0], sizes = [16, 256], strides = [1, 1]} : vector<24x256xf32> to vector<16x256xf32>
    %c256_i32 = arith.constant 256 : i32
    %65 = arith.muli %arg1, %c256_i32 : i32
    %66 = tpu.assume_multiple %65, 256 : i32
    %c0_5 = arith.constant 0 : index
    %67 = arith.index_cast %66 : i32 to index
    %68 = vector.load %arg12[%c0_5, %67] : memref<16x256xf32, #tpu.memory_space<vmem>>, vector<16x256xf32>
    %c0_6 = arith.constant 0 : index
    %c0_7 = arith.constant 0 : index
    %69 = vector.load %arg6[%c0_6, %c0_7] : memref<16x8xf32, #tpu.memory_space<vmem>>, vector<16x8xf32>
    %cst_8 = arith.constant dense<0.000000e+00> : vector<16x256xf32>
    %70 = tpu.matmul %69, %63, %cst_8 {dimension_numbers = #tpu.dot_dimension_numbers<[1], [0], [0], [1], [0, 0, 1, 1], [], []>} : vector<16x8xf32>, vector<8x256xf32>, vector<16x256xf32> -> vector<16x256xf32>
    %c0_9 = arith.constant 0 : index
    %c0_10 = arith.constant 0 : index
    %71 = vector.load %arg7[%c0_9, %c0_10] : memref<16x1xf32, #tpu.memory_space<vmem>>, vector<16x1xf32>
    %72 = vector.broadcast %71 : vector<16x1xf32> to vector<16x256xf32>
    %73 = arith.addf %70, %72 : vector<16x256xf32>
    %cst_11 = arith.constant 0.000000e+00 : f32
    %74 = vector.broadcast %cst_11 : f32 to vector<16x256xf32>
    %75 = arith.maximumf %73, %74 : vector<16x256xf32>
    %76 = arith.addf %75, %64 : vector<16x256xf32>
    %77 = arith.addf %76, %68 : vector<16x256xf32>
    %c0_12 = arith.constant 0 : index
    %c0_13 = arith.constant 0 : index
    %78 = vector.load %arg8[%c0_12, %c0_13] : memref<16x16xf32, #tpu.memory_space<vmem>>, vector<16x16xf32>
    %cst_14 = arith.constant dense<0.000000e+00> : vector<16x256xf32>
    %79 = tpu.matmul %78, %77, %cst_14 {dimension_numbers = #tpu.dot_dimension_numbers<[1], [0], [0], [1], [0, 0, 1, 1], [], []>} : vector<16x16xf32>, vector<16x256xf32>, vector<16x256xf32> -> vector<16x256xf32>
    %c0_15 = arith.constant 0 : index
    %c0_16 = arith.constant 0 : index
    %80 = vector.load %arg9[%c0_15, %c0_16] : memref<16x1xf32, #tpu.memory_space<vmem>>, vector<16x1xf32>
    %81 = vector.broadcast %80 : vector<16x1xf32> to vector<16x256xf32>
    %82 = arith.addf %79, %81 : vector<16x256xf32>
    %cst_17 = arith.constant 0.000000e+00 : f32
    %83 = vector.broadcast %cst_17 : f32 to vector<16x256xf32>
    %84 = arith.maximumf %82, %83 : vector<16x256xf32>
    %c0_18 = arith.constant 0 : index
    %c0_19 = arith.constant 0 : index
    %c0_20 = arith.constant 0 : index
    %85 = vector.load %arg10[%c0_18, %c0_19, %c0_20] : memref<1x16x256xf32, #tpu.memory_space<vmem>>, vector<1x16x256xf32>
    %86 = vector.shape_cast %85 : vector<1x16x256xf32> to vector<16x256xf32>
    %87 = vector.shape_cast %84 : vector<16x256xf32> to vector<1x16x256xf32>
    tpu.vector_store %arg10[%c0_18, %c0_19, %c0_20], %87 {strides = array<i32>} : memref<1x16x256xf32, #tpu.memory_space<vmem>>, vector<1x16x256xf32>,
    return
  }
  func.func @transform_0(%arg0: i32, %arg1: i32) -> (i32, i32, i32) {
    %c0_i32 = arith.constant 0 : i32
    %c0_i32_0 = arith.constant 0 : i32
    %c0_i32_1 = arith.constant 0 : i32
    return %arg0, %c0_i32, %c0_i32_0 : i32, i32, i32
  }
  func.func @transform_1(%arg0: i32, %arg1: i32) -> (i32, i32, i32) {
    %c0_i32 = arith.constant 0 : i32
    %c0_i32_0 = arith.constant 0 : i32
    return %arg0, %c0_i32, %arg1 : i32, i32, i32
  }
  func.func @transform_2(%arg0: i32, %arg1: i32) -> (i32, i32) {
    %c0_i32 = arith.constant 0 : i32
    %c0_i32_0 = arith.constant 0 : i32
    %c0_i32_1 = arith.constant 0 : i32
    return %c0_i32, %c0_i32_0 : i32, i32
  }
  func.func @transform_3(%arg0: i32, %arg1: i32) -> (i32, i32) {
    %c0_i32 = arith.constant 0 : i32
    %c0_i32_0 = arith.constant 0 : i32
    %c0_i32_1 = arith.constant 0 : i32
    return %c0_i32, %c0_i32_0 : i32, i32
  }
  func.func @transform_4(%arg0: i32, %arg1: i32) -> (i32, i32) {
    %c0_i32 = arith.constant 0 : i32
    %c0_i32_0 = arith.constant 0 : i32
    %c0_i32_1 = arith.constant 0 : i32
    return %c0_i32, %c0_i32_0 : i32, i32
  }
  func.func @transform_5(%arg0: i32, %arg1: i32) -> (i32, i32) {
    %c0_i32 = arith.constant 0 : i32
    %c0_i32_0 = arith.constant 0 : i32
    %c0_i32_1 = arith.constant 0 : i32
    return %c0_i32, %c0_i32_0 : i32, i32
  }
  func.func @transform_6(%arg0: i32, %arg1: i32) -> (i32, i32) {
    %c0_i32 = arith.constant 0 : i32
    %c0_i32_0 = arith.constant 0 : i32
    %c0_i32_1 = arith.constant 0 : i32
    return %c0_i32, %c0_i32_0 : i32, i32
  }
  func.func @transform_7(%arg0: i32, %arg1: i32) -> (i32, i32) {
    %c0_i32 = arith.constant 0 : i32
    %c0_i32_0 = arith.constant 0 : i32
    %c0_i32_1 = arith.constant 0 : i32
    return %c0_i32, %c0_i32_0 : i32, i32
  }
  func.func @transform_8(%arg0: i32, %arg1: i32) -> (i32, i32, i32) {
    %c0_i32 = arith.constant 0 : i32
    %c0_i32_0 = arith.constant 0 : i32
    return %arg0, %c0_i32, %arg1 : i32, i32, i32
  }
}

</mosaic_0001>

<llo_original>
// kernel: tpu_custom_call.1
$region0: #{tpu_custom_call.1}
  #allocation0 [shape = 'u32[]', space=smem, size = 0x4, offset = 0x4, fixed_abs, tag = 'smem constant byte address 0x4 - core index']
  #allocation1 [shape = 'u32[144,128]{1,0:T(1,128)}', space=vmem, size = 0x12000, scoped, tag = 'internal scratch']
  #allocation2 [shape = 'f32[24,256]{1,0:T(8,128)}', space=vmem, size = 0x6000, scoped, tag = 'scratch operand']
  #allocation3 [shape = 'f32[16,256]{1,0:T(8,128)}', space=vmem, size = 0x4000, scoped, tag = 'scratch operand']
  %s0 = inlined_call_operand.vmem [shape: f32[2,8,256], index: 0, kind: input, shape index: {}]
  %s1 = inlined_call_operand.vmem [shape: s32[2,8,256], index: 1, kind: input, shape index: {}]
  %s2 = inlined_call_operand.vmem [shape: f32[40,8], index: 2, kind: input, shape index: {}]
  %s3 = inlined_call_operand.vmem [shape: f32[40,1], index: 3, kind: input, shape index: {}]
  %s4 = inlined_call_operand.vmem [shape: f32[16,8], index: 4, kind: input, shape index: {}]
  %s5 = inlined_call_operand.vmem [shape: f32[16,1], index: 5, kind: input, shape index: {}]
  %s6 = inlined_call_operand.vmem [shape: f32[16,16], index: 6, kind: input, shape index: {}]
  %s7 = inlined_call_operand.vmem [shape: f32[16,1], index: 7, kind: input, shape index: {}]
  %s8 = inlined_call_operand.hbm [shape: f32[2,16,256], index: 8, kind: output, shape index: {}]
  %s9 = sld [smem:[#allocation0]]
  $region69: #{tpu_custom_call.1} parent=0
    _
  %s11 = ssub.s32 1, %s9
  %s12 = scalar_select 0, %s11, %s9
  $region1: #{tpu_custom_call.1} parent=0
    #allocation4 [shape = 'u8[32768]{0}', space=vmem, size = 0x8000, scoped, tag = 'output window, operand 0']
    #allocation5 [shape = 's32[2]{0}', space=sflag, size = 0x8, scoped, tag = 'scoped memory for tpu_custom_call.1']
    %13 = vsyncpa [#allocation5], 0
    %s14 = scalar_lea.sflag [#allocation5], 1
    %15 = vsyncpa %s14, 0
    loop: start=0, step=1, limit=4
    $region2: #{tpu_custom_call.1} parent=1 // loop_pre_header
      _
    $region3: #{tpu_custom_call.1} parent=1 // loop_header
      %s17 = sphi 0, %s21
      %p18 = scmp.ge.s32.totalorder %s17, 4
      %s24 = sphi 0, %s36
      %s25 = sphi 0, %s32
      %s26 = sphi 0, %s24
      %s27 = sphi 0, %s25
      %s28 = sphi 0, %s26
      %s29 = sphi 0, %s27
      %s39 = sphi 0, %s41
      %s42 = sphi 0, %s39
      %s43 = sphi 0, %s42
      %s59 = sphi 0, %s43
      %s67 = sphi 0, %s69
      %s70 = sphi 0, %s67
      %s71 = sphi 0, %s70
      %s87 = sphi 0, %s71
      %s91 = sphi 0, %s91
      %s93 = sphi 0, %s91
      %s94 = sphi 0, %s93
      %s108 = sphi 0, %s94
      %s112 = sphi 0, %s112
      %s114 = sphi 0, %s112
      %s115 = sphi 0, %s114
      %s129 = sphi 0, %s115
      %s133 = sphi 0, %s133
      %s135 = sphi 0, %s133
      %s136 = sphi 0, %s135
      %s150 = sphi 0, %s136
      %s154 = sphi 0, %s154
      %s156 = sphi 0, %s154
      %s157 = sphi 0, %s156
      %s171 = sphi 0, %s157
      %s175 = sphi 0, %s175
      %s177 = sphi 0, %s175
      %s178 = sphi 0, %s177
      %s192 = sphi 0, %s178
      %s196 = sphi 0, %s196
      %s198 = sphi 0, %s196
      %s199 = sphi 0, %s198
      %s213 = sphi 0, %s199
      %s221 = sphi 0, %s223
      %s224 = sphi 0, %s221
      %s225 = sphi 0, %s224
      %s241 = sphi 0, %s225
    $region4: #{tpu_custom_call.1} parent=1 // loop_header_branch
      %20 = sbr.rel (%p18) target = $region8
    $region5: #{tpu_custom_call.1} parent=1 // loop_body
      %s22 = ssub.s32 %s17, 1
      %s23 = ssub.s32 %s17, 2
      %s30 = sadd.s32 1, %s25
      %p31 = scmp.ge.s32.totalorder %s30, 1
      %s32 = scalar_select %p31, 0, %s30
      %s33 = sadd.s32 1, %s24
      %s34 = scalar_select %p31, %s33, %s24
      %p35 = scmp.ge.s32.totalorder %s34, 2
      %s36 = scalar_select %p35, 0, %s34
      %s37 = ssub.s32 %s24, %s36
      %p38 = scmp.eq.s32.totalorder %s37, 0
      %s40 = sadd.s32 %s39, 1
      %s41 = scalar_select %p38, %s39, %s40
      %p44 = pneg %p38
      %p45 = scmp.eq.s32.totalorder %s17, 1
      %p46 = por %p44, %p45
      %p47 = scmp.ne.s32.totalorder %s39, %s42
      %p48 = scmp.eq.s32.totalorder %s17, 0
      %p49 = por %p47, %p48
      %p50 = scmp.ne.s32.totalorder %s39, %s42
      %p51 = scmp.eq.s32.totalorder %s22, 1
      %p52 = por %p50, %p51
      %p53 = scmp.ne.s32.totalorder %s42, %s43
      %p54 = scmp.eq.s32.totalorder %s22, 0
      %p55 = por %p53, %p54
      %p56 = scmp.ne.s32.totalorder %s42, %s43
      %p57 = scmp.eq.s32.totalorder %s23, 1
      %p58 = por %p56, %p57
      %p60 = scmp.ne.s32.totalorder %s43, %s59
      %p61 = scmp.eq.s32.totalorder %s23, 0
      %p62 = por %p60, %p61
      %s63 = ssub.s32 %s24, %s36
      %s64 = ssub.s32 %s25, %s32
      %s65 = sor.u32 %s63, %s64
      %p66 = scmp.eq.s32.totalorder %s65, 0
      %s68 = sadd.s32 %s67, 1
      %s69 = scalar_select %p66, %s67, %s68
      %p72 = pneg %p66
      %p73 = scmp.eq.s32.totalorder %s17, 1
      %p74 = por %p72, %p73
      %p75 = scmp.ne.s32.totalorder %s67, %s70
      %p76 = scmp.eq.s32.totalorder %s17, 0
      %p77 = por %p75, %p76
      %p78 = scmp.ne.s32.totalorder %s67, %s70
      %p79 = scmp.eq.s32.totalorder %s22, 1
      %p80 = por %p78, %p79
      %p81 = scmp.ne.s32.totalorder %s70, %s71
      %p82 = scmp.eq.s32.totalorder %s22, 0
      %p83 = por %p81, %p82
      %p84 = scmp.ne.s32.totalorder %s70, %s71
      %p85 = scmp.eq.s32.totalorder %s23, 1
      %p86 = por %p84, %p85
      %p88 = scmp.ne.s32.totalorder %s71, %s87
      %p89 = scmp.eq.s32.totalorder %s23, 0
      %p90 = por %p88, %p89
      %s92 = sadd.s32 %s91, 1
      %p95 = scmp.eq.s32.totalorder %s17, 1
      %p96 = scmp.ne.s32.totalorder %s91, %s93
      %p97 = scmp.eq.s32.totalorder %s17, 0
      %p98 = por %p96, %p97
      %p99 = scmp.ne.s32.totalorder %s91, %s93
      %p100 = scmp.eq.s32.totalorder %s22, 1
      %p101 = por %p99, %p100
      %p102 = scmp.ne.s32.totalorder %s93, %s94
      %p103 = scmp.eq.s32.totalorder %s22, 0
      %p104 = por %p102, %p103
      %p105 = scmp.ne.s32.totalorder %s93, %s94
      %p106 = scmp.eq.s32.totalorder %s23, 1
      %p107 = por %p105, %p106
      %p109 = scmp.ne.s32.totalorder %s94, %s108
      %p110 = scmp.eq.s32.totalorder %s23, 0
      %p111 = por %p109, %p110
      %s113 = sadd.s32 %s112, 1
      %p116 = scmp.eq.s32.totalorder %s17, 1
      %p117 = scmp.ne.s32.totalorder %s112, %s114
      %p118 = scmp.eq.s32.totalorder %s17, 0
      %p119 = por %p117, %p118
      %p120 = scmp.ne.s32.totalorder %s112, %s114
      %p121 = scmp.eq.s32.totalorder %s22, 1
      %p122 = por %p120, %p121
      %p123 = scmp.ne.s32.totalorder %s114, %s115
      %p124 = scmp.eq.s32.totalorder %s22, 0
      %p125 = por %p123, %p124
      %p126 = scmp.ne.s32.totalorder %s114, %s115
      %p127 = scmp.eq.s32.totalorder %s23, 1
      %p128 = por %p126, %p127
      %p130 = scmp.ne.s32.totalorder %s115, %s129
      %p131 = scmp.eq.s32.totalorder %s23, 0
      %p132 = por %p130, %p131
      %s134 = sadd.s32 %s133, 1
      %p137 = scmp.eq.s32.totalorder %s17, 1
      %p138 = scmp.ne.s32.totalorder %s133, %s135
      %p139 = scmp.eq.s32.totalorder %s17, 0
      %p140 = por %p138, %p139
      %p141 = scmp.ne.s32.totalorder %s133, %s135
      %p142 = scmp.eq.s32.totalorder %s22, 1
      %p143 = por %p141, %p142
      %p144 = scmp.ne.s32.totalorder %s135, %s136
      %p145 = scmp.eq.s32.totalorder %s22, 0
      %p146 = por %p144, %p145
      %p147 = scmp.ne.s32.totalorder %s135, %s136
      %p148 = scmp.eq.s32.totalorder %s23, 1
      %p149 = por %p147, %p148
      %p151 = scmp.ne.s32.totalorder %s136, %s150
      %p152 = scmp.eq.s32.totalorder %s23, 0
      %p153 = por %p151, %p152
      %s155 = sadd.s32 %s154, 1
      %p158 = scmp.eq.s32.totalorder %s17, 1
      %p159 = scmp.ne.s32.totalorder %s154, %s156
      %p160 = scmp.eq.s32.totalorder %s17, 0
      %p161 = por %p159, %p160
      %p162 = scmp.ne.s32.totalorder %s154, %s156
      %p163 = scmp.eq.s32.totalorder %s22, 1
      %p164 = por %p162, %p163
      %p165 = scmp.ne.s32.totalorder %s156, %s157
      %p166 = scmp.eq.s32.totalorder %s22, 0
      %p167 = por %p165, %p166
      %p168 = scmp.ne.s32.totalorder %s156, %s157
      %p169 = scmp.eq.s32.totalorder %s23, 1
      %p170 = por %p168, %p169
      %p172 = scmp.ne.s32.totalorder %s157, %s171
      %p173 = scmp.eq.s32.totalorder %s23, 0
      %p174 = por %p172, %p173
      %s176 = sadd.s32 %s175, 1
      %p179 = scmp.eq.s32.totalorder %s17, 1
      %p180 = scmp.ne.s32.totalorder %s175, %s177
      %p181 = scmp.eq.s32.totalorder %s17, 0
      %p182 = por %p180, %p181
      %p183 = scmp.ne.s32.totalorder %s175, %s177
      %p184 = scmp.eq.s32.totalorder %s22, 1
      %p185 = por %p183, %p184
      %p186 = scmp.ne.s32.totalorder %s177, %s178
      %p187 = scmp.eq.s32.totalorder %s22, 0
      %p188 = por %p186, %p187
      %p189 = scmp.ne.s32.totalorder %s177, %s178
      %p190 = scmp.eq.s32.totalorder %s23, 1
      %p191 = por %p189, %p190
      %p193 = scmp.ne.s32.totalorder %s178, %s192
      %p194 = scmp.eq.s32.totalorder %s23, 0
      %p195 = por %p193, %p194
      %s197 = sadd.s32 %s196, 1
      %p200 = scmp.eq.s32.totalorder %s17, 1
      %p201 = scmp.ne.s32.totalorder %s196, %s198
      %p202 = scmp.eq.s32.totalorder %s17, 0
      %p203 = por %p201, %p202
      %p204 = scmp.ne.s32.totalorder %s196, %s198
      %p205 = scmp.eq.s32.totalorder %s22, 1
      %p206 = por %p204, %p205
      %p207 = scmp.ne.s32.totalorder %s198, %s199
      %p208 = scmp.eq.s32.totalorder %s22, 0
      %p209 = por %p207, %p208
      %p210 = scmp.ne.s32.totalorder %s198, %s199
      %p211 = scmp.eq.s32.totalorder %s23, 1
      %p212 = por %p210, %p211
      %p214 = scmp.ne.s32.totalorder %s199, %s213
      %p215 = scmp.eq.s32.totalorder %s23, 0
      %p216 = por %p214, %p215
      %s217 = ssub.s32 %s24, %s36
      %s218 = ssub.s32 %s25, %s32
      %s219 = sor.u32 %s217, %s218
      %p220 = scmp.eq.s32.totalorder %s219, 0
      %s222 = sadd.s32 %s221, 1
      %s223 = scalar_select %p220, %s221, %s222
      %p226 = pneg %p220
      %p227 = scmp.eq.s32.totalorder %s17, 1
      %p228 = por %p226, %p227
      %p229 = scmp.ne.s32.totalorder %s221, %s224
      %p230 = scmp.eq.s32.totalorder %s17, 0
      %p231 = por %p229, %p230
      %p232 = scmp.ne.s32.totalorder %s221, %s224
      %p233 = scmp.eq.s32.totalorder %s22, 1
      %p234 = por %p232, %p233
      %p235 = scmp.ne.s32.totalorder %s224, %s225
      %p236 = scmp.eq.s32.totalorder %s22, 0
      %p237 = por %p235, %p236
      %p238 = scmp.ne.s32.totalorder %s224, %s225
      %p239 = scmp.eq.s32.totalorder %s23, 1
      %p240 = por %p238, %p239
      %p242 = scmp.ne.s32.totalorder %s225, %s241
      %p243 = scmp.eq.s32.totalorder %s23, 0
      %p244 = por %p242, %p243
      %p245 = scmp.le.s32.totalorder 1, %s17
      %p246 = scmp.lt.s32.totalorder %s17, 3
      %p247 = pnand %p245, %p246
      %p248 = pneg %p247
      // Predicated region
      $region9: #{tpu_custom_call.1} parent=5 // pred_check
        _
      $region10: #{tpu_custom_call.1} parent=5 // pred_check_branch
        %250 = sbr.rel (%p247) target = $region12
      $region11: #{tpu_custom_call.1} parent=5 // pred_region
        %s251 = ssub.s32 %s17, 1
        // Predicated region
        $region13: #{tpu_custom_call.1} parent=11 // pred_check
          %p252 = pneg %p104
        $region14: #{tpu_custom_call.1} parent=11 // pred_check_branch
          %254 = sbr.rel (%p252) target = $region16
        $region15: #{tpu_custom_call.1} parent=11 // pred_region
          _
        $region16: #{tpu_custom_call.1} parent=11 // pred_fallthru
          _
        // Predicated region
        $region17: #{tpu_custom_call.1} parent=11 // pred_check
          %p255 = pneg %p125
        $region18: #{tpu_custom_call.1} parent=11 // pred_check_branch
          %257 = sbr.rel (%p255) target = $region20
        $region19: #{tpu_custom_call.1} parent=11 // pred_region
          _
        $region20: #{tpu_custom_call.1} parent=11 // pred_fallthru
          _
        // Predicated region
        $region21: #{tpu_custom_call.1} parent=11 // pred_check
          %p258 = pneg %p146
        $region22: #{tpu_custom_call.1} parent=11 // pred_check_branch
          %260 = sbr.rel (%p258) target = $region24
        $region23: #{tpu_custom_call.1} parent=11 // pred_region
          _
        $region24: #{tpu_custom_call.1} parent=11 // pred_fallthru
          _
        // Predicated region
        $region25: #{tpu_custom_call.1} parent=11 // pred_check
          %p261 = pneg %p167
        $region26: #{tpu_custom_call.1} parent=11 // pred_check_branch
          %263 = sbr.rel (%p261) target = $region28
        $region27: #{tpu_custom_call.1} parent=11 // pred_region
          _
        $region28: #{tpu_custom_call.1} parent=11 // pred_fallthru
          _
        // Predicated region
        $region29: #{tpu_custom_call.1} parent=11 // pred_check
          %p264 = pneg %p188
        $region30: #{tpu_custom_call.1} parent=11 // pred_check_branch
          %266 = sbr.rel (%p264) target = $region32
        $region31: #{tpu_custom_call.1} parent=11 // pred_region
          _
        $region32: #{tpu_custom_call.1} parent=11 // pred_fallthru
          _
        // Predicated region
        $region33: #{tpu_custom_call.1} parent=11 // pred_check
          %p267 = pneg %p209
        $region34: #{tpu_custom_call.1} parent=11 // pred_check_branch
          %269 = sbr.rel (%p267) target = $region36
        $region35: #{tpu_custom_call.1} parent=11 // pred_region
          _
        $region36: #{tpu_custom_call.1} parent=11 // pred_fallthru
          _
      $region12: #{tpu_custom_call.1} parent=5 // pred_fallthru
        _
      %p270 = scmp.lt.s32.totalorder %s17, 2
      // Predicated region
      $region37: #{tpu_custom_call.1} parent=5 // pred_check
        %p271 = pneg %p270
      $region38: #{tpu_custom_call.1} parent=5 // pred_check_branch
        %273 = sbr.rel (%p271) target = $region40
      $region39: #{tpu_custom_call.1} parent=5 // pred_region
        // Predicated region
        $region41: #{tpu_custom_call.1} parent=39 // pred_check
          %p274 = pneg %p49
        $region42: #{tpu_custom_call.1} parent=39 // pred_check_branch
          %276 = sbr.rel (%p274) target = $region44
        $region43: #{tpu_custom_call.1} parent=39 // pred_region
          %p277 = scmp.lt.s32.totalorder %s24, 1
          %s278 = scalar_select %p277, %s24, 1
          %s279 = smul.addr %s278, 2
          %s280 = smul.addr %s279, 8
          %s281 = scalar_lea.vmem %s0, %s280
        $region44: #{tpu_custom_call.1} parent=39 // pred_fallthru
          _
        // Predicated region
        $region45: #{tpu_custom_call.1} parent=39 // pred_check
          %p282 = pneg %p77
        $region46: #{tpu_custom_call.1} parent=39 // pred_check_branch
          %284 = sbr.rel (%p282) target = $region48
        $region47: #{tpu_custom_call.1} parent=39 // pred_region
          %s285 = smul.u32 2, %s25
          %p286 = scmp.lt.s32.totalorder %s24, 1
          %s287 = scalar_select %p286, %s24, 1
          %p288 = scmp.lt.s32.totalorder %s285, 1
          %s289 = scalar_select %p288, %s285, 1
          %s290 = smul.addr %s287, 2
          %s291 = sadd.s32 %s289, %s290
          %s292 = smul.addr %s291, 8
          %s293 = scalar_lea.vmem %s1, %s292
          %s294 = smul.u32 2, %s25
        $region48: #{tpu_custom_call.1} parent=39 // pred_fallthru
          _
      $region40: #{tpu_custom_call.1} parent=5 // pred_fallthru
        _
      %p295 = scmp.le.s32.totalorder 1, %s17
      %p296 = scmp.lt.s32.totalorder %s17, 3
      %p297 = pnand %p295, %p296
      %p298 = pneg %p297
      // Predicated region
      $region49: #{tpu_custom_call.1} parent=5 // pred_check
        _
      $region50: #{tpu_custom_call.1} parent=5 // pred_check_branch
        %300 = sbr.rel (%p297) target = $region52
      $region51: #{tpu_custom_call.1} parent=5 // pred_region
        %s301 = ssub.s32 %s17, 1
        %p302 = scmp.lt.s32.totalorder %s26, 1
        %s303 = scalar_select %p302, %s26, 1
        %s304 = smul.addr %s303, 2
        %s305 = smul.addr %s304, 8
        %s306 = scalar_lea.vmem %s0, %s305
        %p307 = pneg %p55
        %p308 = pneg %p52
        %s309 = smul.u32 2, %s27
        %p310 = scmp.lt.s32.totalorder %s26, 1
        %s311 = scalar_select %p310, %s26, 1
        %p312 = scmp.lt.s32.totalorder %s309, 1
        %s313 = scalar_select %p312, %s309, 1
        %s314 = smul.addr %s311, 2
        %s315 = sadd.s32 %s313, %s314
        %s316 = smul.addr %s315, 8
        %s317 = scalar_lea.vmem %s1, %s316
        %p318 = pneg %p83
        %p319 = pneg %p80
        %p320 = pneg %p104
        %p321 = pneg %p101
        %p322 = pneg %p125
        %p323 = pneg %p122
        %p324 = pneg %p146
        %p325 = pneg %p143
        %p326 = pneg %p167
        %p327 = pneg %p164
        %p328 = pneg %p188
        %p329 = pneg %p185
        %p330 = pneg %p209
        %p331 = pneg %p206
        %p332 = pneg %p237
        %p333 = pneg %p234
        %s334 = sand.u32 %s224, 1
        %s335 = scalar_lea.sflag [#allocation5], %s334
        %s336 = sand.u32 %s224, 1
        %s337 = smul.addr %s336, 32
        %s338 = scalar_lea.vmem [#allocation4], %s337
        %p339 = scmp.lt.s32.totalorder %s26, 1
        %s340 = scalar_select %p339, %s26, 1
        %s341 = smul.addr %s340, 2
        %s342 = smul.addr %s341, 8
        %s343 = scalar_lea.vmem %s0, %s342
        %s344 = smul.u32 2, %s27
        %p345 = scmp.lt.s32.totalorder %s26, 1
        %s346 = scalar_select %p345, %s26, 1
        %p347 = scmp.lt.s32.totalorder %s344, 1
        %s348 = scalar_select %p347, %s344, 1
        %s349 = smul.addr %s346, 2
        %s350 = sadd.s32 %s348, %s349
        %s351 = smul.addr %s350, 8
        %s352 = scalar_lea.vmem %s1, %s351
        %s353 = smul.u32 2, %s27
        %s354 = smul.u32 2, %s27
        %p355 = scmp.eq.s32.totalorder %s27, 0
        // Predicated region
        $region53: #{tpu_custom_call.1} parent=51 // pred_check
          %p356 = pneg %p355
        $region54: #{tpu_custom_call.1} parent=51 // pred_check_branch
          %358 = sbr.rel (%p356) target = $region56
        $region55: #{tpu_custom_call.1} parent=51 // pred_region
          %v359 = vld [vmem:[%s343] sm:$0xff]
          %v360 = vld [vmem:[%s343 + $0x8] sm:$0xff]
          %v361 = vld [vmem:[%s2] sm:$0xff]
          %v362 = vld [vmem:[%s2 + $0x8] sm:$0xff]
          %v363 = vld [vmem:[%s2 + $0x10] sm:$0xff]
          %v364 = vld [vmem:[%s2 + $0x18] sm:$0xff]
          %v365 = vld [vmem:[%s2 + $0x20] sm:$0xff]
          %v366 = vld [vmem:[%s3] sm:$0xff]
          %v367 = vld [vmem:[%s3 + $0x8] sm:$0xff]
          %v368 = vld [vmem:[%s3 + $0x10] sm:$0xff]
          %v369 = vld [vmem:[%s3 + $0x18] sm:$0xff]
          %v370 = vld [vmem:[%s3 + $0x20] sm:$0xff]
          %372 = vset.pattern.permute.xlu0 0
          %373 = vperm.xlu0 %372, %v366
          %v374 = vpop.permute.xlu0 %373
          %377 = vset.pattern.permute.xlu0 0
          %378 = vperm.xlu0 %377, %v367
          %v379 = vpop.permute.xlu0 %378
          %382 = vset.pattern.permute.xlu0 0
          %383 = vperm.xlu0 %382, %v368
          %v384 = vpop.permute.xlu0 %383
          %387 = vset.pattern.permute.xlu0 0
          %388 = vperm.xlu0 %387, %v369
          %v389 = vpop.permute.xlu0 %388
          %392 = vset.pattern.permute.xlu0 0
          %393 = vperm.xlu0 %392, %v370
          %v394 = vpop.permute.xlu0 %393
          %vm396 = vcmask 64512
          %v398 = vsel %vm396, %v361, 0
          %v401 = vsel %vm396, %v362, 0
          %v404 = vsel %vm396, %v363, 0
          %v407 = vsel %vm396, %v364, 0
          %v410 = vsel %vm396, %v365, 0
          %412 = vmatprep.subr.mxu0 0.0
          %413 = vmatpush1.msra.mxu0 0.0
          %414 = vmatprep.subr.mxu0 0.0
          %415 = vmatpush1.msra.mxu0 0.0
          %416 = vmatprep.subr.mxu0 0.0
          %417 = vmatpush1.msra.mxu0 0.0
          %418 = vmatprep.subr.mxu0 0.0
          %419 = vmatpush1.msra.mxu0 0.0
          %420 = vmatprep.subr.mxu0 0.0
          %421 = vmatpush1.msra.mxu0 0.0
          %422 = vmatprep.subr.mxu0 0.0
          %423 = vmatpush1.msra.mxu0 0.0
          %424 = vmatprep.subr.mxu0 0.0
          %425 = vmatpush1.msra.mxu0 0.0
          %426 = vmatprep.subr.mxu0 0.0
          %427 = vmatpush1.msra.mxu0 0.0
          %428 = vmatprep.subr.mxu0 0.0
          %429 = vmatpush1.msra.mxu0 0.0
          %430 = vmatprep.subr.mxu0 0.0
          %431 = vmatpush1.msra.mxu0 0.0
          %432 = vmatprep.subr.mxu0 0.0
          %433 = vmatpush1.msra.mxu0 0.0
          %434 = vmatprep.subr.mxu0 0.0
          %435 = vmatpush1.msra.mxu0 0.0
          %436 = vmatprep.subr.mxu0 0.0
          %437 = vmatpush1.msra.mxu0 0.0
          %438 = vmatprep.subr.mxu0 0.0
          %439 = vmatpush1.msra.mxu0 0.0
          %440 = vmatprep.subr.mxu0 0.0
          %441 = vmatpush1.msra.mxu0 0.0
          %442 = vmatprep.subr.mxu0 %v360
          %443 = vmatpush1.msra.mxu0 %v359
          %444 = vmatprep.subr.mxu0 0.0
          %445 = vmatpush2.msra.mxu0 0.0
          %446 = vmatprep.subr.mxu0 0.0
          %447 = vmatpush2.msra.mxu0 0.0
          %448 = vmatprep.subr.mxu0 0.0
          %449 = vmatpush2.msra.mxu0 0.0
          %450 = vmatprep.subr.mxu0 0.0
          %451 = vmatpush2.msra.mxu0 0.0
          %452 = vmatprep.subr.mxu0 0.0
          %453 = vmatpush2.msra.mxu0 0.0
          %454 = vmatprep.subr.mxu0 0.0
          %455 = vmatpush2.msra.mxu0 0.0
          %456 = vmatprep.subr.mxu0 0.0
          %457 = vmatpush2.msra.mxu0 0.0
          %458 = vmatprep.subr.mxu0 0.0
          %459 = vmatpush2.msra.mxu0 0.0
          %460 = vmatprep.subr.mxu0 0.0
          %461 = vmatpush2.msra.mxu0 0.0
          %462 = vmatprep.subr.mxu0 0.0
          %463 = vmatpush2.msra.mxu0 0.0
          %464 = vmatprep.subr.mxu0 0.0
          %465 = vmatpush2.msra.mxu0 0.0
          %466 = vmatprep.subr.mxu0 0.0
          %467 = vmatpush2.msra.mxu0 0.0
          %468 = vmatprep.subr.mxu0 0.0
          %469 = vmatpush2.msra.mxu0 0.0
          %470 = vmatprep.subr.mxu0 0.0
          %471 = vmatpush2.msra.mxu0 0.0
          %472 = vmatprep.subr.mxu0 0.0
          %473 = vmatpush2.msra.mxu0 0.0
          %474 = vmatprep.subr.mxu0 0.0
          %475 = vmatpush2.msra.mxu0 0.0
          %476 = vmatprep.mubr.f32.mxu0 0.0
          %477 = vmatmul.mubr.f32.gmra.mxu0 %v398
          %v478 = vpop.f32.mrf.mxu0
          %v479 = vadd.f32 %v374, %v478
          %v480 = vpop.f32.mrf.mxu0
          %v481 = vadd.f32 %v374, %v480
          %482 = vmatprep.mubr.f32.mxu0 0.0
          %483 = vmatmul.mubr.f32.gmra.mxu0 %v401
          %v484 = vpop.f32.mrf.mxu0
          %v485 = vadd.f32 %v379, %v484
          %v486 = vpop.f32.mrf.mxu0
          %v487 = vadd.f32 %v379, %v486
          %488 = vmatprep.mubr.f32.mxu0 0.0
          %489 = vmatmul.mubr.f32.gmra.mxu0 %v404
          %v490 = vpop.f32.mrf.mxu0
          %v491 = vadd.f32 %v384, %v490
          %v492 = vpop.f32.mrf.mxu0
          %v493 = vadd.f32 %v384, %v492
          %494 = vmatprep.mubr.f32.mxu0 0.0
          %495 = vmatmul.mubr.f32.gmra.mxu0 %v407
          %v496 = vpop.f32.mrf.mxu0
          %v497 = vadd.f32 %v389, %v496
          %v498 = vpop.f32.mrf.mxu0
          %v499 = vadd.f32 %v389, %v498
          %500 = vmatprep.mubr.f32.mxu0 0.0
          %501 = vmatmul.mubr.f32.gmra.mxu0 %v410
          %v502 = vpop.f32.mrf.mxu0
          %v503 = vadd.f32 %v394, %v502
          %v504 = vpop.f32.mrf.mxu0
          %v505 = vadd.f32 %v394, %v504
          %506 = vdwg.mxu0
          %v507 = vmax.f32 %v479, 0.0
          %v508 = vmax.f32 %v481, 0.0
          %v509 = vmax.f32 %v485, 0.0
          %v510 = vmax.f32 %v487, 0.0
          %v511 = vmax.f32 %v491, 0.0
          %v512 = vmax.f32 %v493, 0.0
          %v513 = vmax.f32 %v497, 0.0
          %v514 = vmax.f32 %v499, 0.0
          %v515 = vmax.f32 %v503, 0.0
          %v516 = vmax.f32 %v505, 0.0
          %517 = vst [vmem:[#allocation2] sm:$0xff] %v507
          %518 = vst [vmem:[#allocation2 + $0x8] sm:$0xff] %v508
          %519 = vst [vmem:[#allocation2 + $0x10] sm:$0xff] %v509
          %520 = vst [vmem:[#allocation2 + $0x18] sm:$0xff] %v510
          %521 = vst [vmem:[#allocation2 + $0x20] sm:$0xff] %v511
          %522 = vst [vmem:[#allocation2 + $0x28] sm:$0xff] %v512
          %v523 = vadd.f32 %v509, %v513
          %v524 = vadd.f32 %v510, %v514
          %v525 = vadd.f32 %v511, %v515
          %v526 = vadd.f32 %v512, %v516
          %527 = vst [vmem:[#allocation3] sm:$0xff] %v523
          %528 = vst [vmem:[#allocation3 + $0x8] sm:$0xff] %v524
          %529 = vst [vmem:[#allocation3 + $0x10] sm:$0xff] %v525
          %530 = vst [vmem:[#allocation3 + $0x18] sm:$0xff] %v526
        $region56: #{tpu_custom_call.1} parent=51 // pred_fallthru
          _
        %v531 = vld [vmem:[%s352] sm:$0xff]
        %v532 = vld [vmem:[%s352 + $0x8] sm:$0xff]
        %v533 = vlaneseq
        %v534 = vshrl.u32 %v533, 7
        %v535 = vadd.s32 %v534, 8
        %v536 = vadd.s32 %v534, 16
        %v537 = vadd.s32 %v534, 24
        %v538 = vadd.s32 %v534, 32
        %v539 = vadd.s32 %v534, 40
        %v540 = vadd.s32 %v534, 48
        %v541 = vadd.s32 %v534, 56
        %v542 = vadd.s32 %v534, 64
        %v543 = vadd.s32 %v534, 72
        %v544 = vadd.s32 %v534, 80
        %v545 = vadd.s32 %v534, 88
        %v546 = vadd.s32 %v534, 96
        %v547 = vadd.s32 %v534, 104
        %v548 = vadd.s32 %v534, 112
        %v549 = vadd.s32 %v534, 120
        %v550 = vadd.s32 %v534, 128
        %v551 = vadd.s32 %v534, 136
        %v552 = vadd.s32 %v534, 144
        %v553 = vadd.s32 %v534, 152
        %v554 = vadd.s32 %v534, 160
        %v555 = vadd.s32 %v534, 168
        %v556 = vadd.s32 %v534, 176
        %v557 = vadd.s32 %v534, 184
        %v558 = vadd.s32 %v534, 192
        %v559 = vadd.s32 %v534, 200
        %v560 = vadd.s32 %v534, 208
        %v561 = vadd.s32 %v534, 216
        %v562 = vadd.s32 %v534, 224
        %v563 = vadd.s32 %v534, 232
        %v564 = vadd.s32 %v534, 240
        %v565 = vadd.s32 %v534, 248
        %v566 = vlaneseq
        %v567 = vshrl.u32 %v566, 7
        %v568 = vsub.s32 0, %v567
        %v569 = vrot.slane %v531, %v568
        %v570 = vlaneseq
        %v571 = vshrl.u32 %v570, 7
        %v572 = vsub.s32 0, %v571
        %v573 = vrot.slane %v532, %v572
        %vm574 = vcmp.eq.s32.totalorder %v569, %v534
        %vm575 = vcmp.eq.s32.totalorder %v573, %v534
        %vm576 = vcmp.eq.s32.totalorder %v569, %v535
        %vm577 = vcmp.eq.s32.totalorder %v573, %v535
        %vm578 = vcmp.eq.s32.totalorder %v569, %v536
        %vm579 = vcmp.eq.s32.totalorder %v573, %v536
        %vm580 = vcmp.eq.s32.totalorder %v569, %v537
        %vm581 = vcmp.eq.s32.totalorder %v573, %v537
        %vm582 = vcmp.eq.s32.totalorder %v569, %v538
        %vm583 = vcmp.eq.s32.totalorder %v573, %v538
        %vm584 = vcmp.eq.s32.totalorder %v569, %v539
        %vm585 = vcmp.eq.s32.totalorder %v573, %v539
        %vm586 = vcmp.eq.s32.totalorder %v569, %v540
        %vm587 = vcmp.eq.s32.totalorder %v573, %v540
        %vm588 = vcmp.eq.s32.totalorder %v569, %v541
        %vm589 = vcmp.eq.s32.totalorder %v573, %v541
        %vm590 = vcmp.eq.s32.totalorder %v569, %v542
        %vm591 = vcmp.eq.s32.totalorder %v573, %v542
        %vm592 = vcmp.eq.s32.totalorder %v569, %v543
        %vm593 = vcmp.eq.s32.totalorder %v573, %v543
        %vm594 = vcmp.eq.s32.totalorder %v569, %v544
        %vm595 = vcmp.eq.s32.totalorder %v573, %v544
        %vm596 = vcmp.eq.s32.totalorder %v569, %v545
        %vm597 = vcmp.eq.s32.totalorder %v573, %v545
        %vm598 = vcmp.eq.s32.totalorder %v569, %v546
        %vm599 = vcmp.eq.s32.totalorder %v573, %v546
        %vm600 = vcmp.eq.s32.totalorder %v569, %v547
        %vm601 = vcmp.eq.s32.totalorder %v573, %v547
        %vm602 = vcmp.eq.s32.totalorder %v569, %v548
        %vm603 = vcmp.eq.s32.totalorder %v573, %v548
        %vm604 = vcmp.eq.s32.totalorder %v569, %v549
        %vm605 = vcmp.eq.s32.totalorder %v573, %v549
        %vm606 = vcmp.eq.s32.totalorder %v569, %v550
        %vm607 = vcmp.eq.s32.totalorder %v573, %v550
        %vm608 = vcmp.eq.s32.totalorder %v569, %v551
        %vm609 = vcmp.eq.s32.totalorder %v573, %v551
        %vm610 = vcmp.eq.s32.totalorder %v569, %v552
        %vm611 = vcmp.eq.s32.totalorder %v573, %v552
        %vm612 = vcmp.eq.s32.totalorder %v569, %v553
        %vm613 = vcmp.eq.s32.totalorder %v573, %v553
        %vm614 = vcmp.eq.s32.totalorder %v569, %v554
        %vm615 = vcmp.eq.s32.totalorder %v573, %v554
        %vm616 = vcmp.eq.s32.totalorder %v569, %v555
        %vm617 = vcmp.eq.s32.totalorder %v573, %v555
        %vm618 = vcmp.eq.s32.totalorder %v569, %v556
        %vm619 = vcmp.eq.s32.totalorder %v573, %v556
        %vm620 = vcmp.eq.s32.totalorder %v569, %v557
        %vm621 = vcmp.eq.s32.totalorder %v573, %v557
        %vm622 = vcmp.eq.s32.totalorder %v569, %v558
        %vm623 = vcmp.eq.s32.totalorder %v573, %v558
        %vm624 = vcmp.eq.s32.totalorder %v569, %v559
        %vm625 = vcmp.eq.s32.totalorder %v573, %v559
        %vm626 = vcmp.eq.s32.totalorder %v569, %v560
        %vm627 = vcmp.eq.s32.totalorder %v573, %v560
        %vm628 = vcmp.eq.s32.totalorder %v569, %v561
        %vm629 = vcmp.eq.s32.totalorder %v573, %v561
        %vm630 = vcmp.eq.s32.totalorder %v569, %v562
        %vm631 = vcmp.eq.s32.totalorder %v573, %v562
        %vm632 = vcmp.eq.s32.totalorder %v569, %v563
        %vm633 = vcmp.eq.s32.totalorder %v573, %v563
        %vm634 = vcmp.eq.s32.totalorder %v569, %v564
        %vm635 = vcmp.eq.s32.totalorder %v573, %v564
        %vm636 = vcmp.eq.s32.totalorder %v569, %v565
        %vm637 = vcmp.eq.s32.totalorder %v573, %v565
        %v638 = vsel %vm574, 1, 0
        %v639 = vsel %vm575, 1, 0
        %v640 = vsel %vm576, 1, 0
        %v641 = vsel %vm577, 1, 0
        %v642 = vsel %vm578, 1, 0
        %v643 = vsel %vm579, 1, 0
        %v644 = vsel %vm580, 1, 0
        %v645 = vsel %vm581, 1, 0
        %v646 = vsel %vm582, 1, 0
        %v647 = vsel %vm583, 1, 0
        %v648 = vsel %vm584, 1, 0
        %v649 = vsel %vm585, 1, 0
        %v650 = vsel %vm586, 1, 0
        %v651 = vsel %vm587, 1, 0
        %v652 = vsel %vm588, 1, 0
        %v653 = vsel %vm589, 1, 0
        %v654 = vsel %vm590, 1, 0
        %v655 = vsel %vm591, 1, 0
        %v656 = vsel %vm592, 1, 0
        %v657 = vsel %vm593, 1, 0
        %v658 = vsel %vm594, 1, 0
        %v659 = vsel %vm595, 1, 0
        %v660 = vsel %vm596, 1, 0
        %v661 = vsel %vm597, 1, 0
        %v662 = vsel %vm598, 1, 0
        %v663 = vsel %vm599, 1, 0
        %v664 = vsel %vm600, 1, 0
        %v665 = vsel %vm601, 1, 0
        %v666 = vsel %vm602, 1, 0
        %v667 = vsel %vm603, 1, 0
        %v668 = vsel %vm604, 1, 0
        %v669 = vsel %vm605, 1, 0
        %v670 = vsel %vm606, 1, 0
        %v671 = vsel %vm607, 1, 0
        %v672 = vsel %vm608, 1, 0
        %v673 = vsel %vm609, 1, 0
        %v674 = vsel %vm610, 1, 0
        %v675 = vsel %vm611, 1, 0
        %v676 = vsel %vm612, 1, 0
        %v677 = vsel %vm613, 1, 0
        %v678 = vsel %vm614, 1, 0
        %v679 = vsel %vm615, 1, 0
        %v680 = vsel %vm616, 1, 0
        %v681 = vsel %vm617, 1, 0
        %v682 = vsel %vm618, 1, 0
        %v683 = vsel %vm619, 1, 0
        %v684 = vsel %vm620, 1, 0
        %v685 = vsel %vm621, 1, 0
        %v686 = vsel %vm622, 1, 0
        %v687 = vsel %vm623, 1, 0
        %v688 = vsel %vm624, 1, 0
        %v689 = vsel %vm625, 1, 0
        %v690 = vsel %vm626, 1, 0
        %v691 = vsel %vm627, 1, 0
        %v692 = vsel %vm628, 1, 0
        %v693 = vsel %vm629, 1, 0
        %v694 = vsel %vm630, 1, 0
        %v695 = vsel %vm631, 1, 0
        %v696 = vsel %vm632, 1, 0
        %v697 = vsel %vm633, 1, 0
        %v698 = vsel %vm634, 1, 0
        %v699 = vsel %vm635, 1, 0
        %v700 = vsel %vm636, 1, 0
        %v701 = vsel %vm637, 1, 0
        %v702 = vcvt.s32.f32 %v638
        %v703 = vcvt.s32.f32 %v639
        %v704 = vcvt.s32.f32 %v640
        %v705 = vcvt.s32.f32 %v641
        %v706 = vcvt.s32.f32 %v642
        %v707 = vcvt.s32.f32 %v643
        %v708 = vcvt.s32.f32 %v644
        %v709 = vcvt.s32.f32 %v645
        %v710 = vcvt.s32.f32 %v646
        %v711 = vcvt.s32.f32 %v647
        %v712 = vcvt.s32.f32 %v648
        %v713 = vcvt.s32.f32 %v649
        %v714 = vcvt.s32.f32 %v650
        %v715 = vcvt.s32.f32 %v651
        %v716 = vcvt.s32.f32 %v652
        %v717 = vcvt.s32.f32 %v653
        %v718 = vcvt.s32.f32 %v654
        %v719 = vcvt.s32.f32 %v655
        %v720 = vcvt.s32.f32 %v656
        %v721 = vcvt.s32.f32 %v657
        %v722 = vcvt.s32.f32 %v658
        %v723 = vcvt.s32.f32 %v659
        %v724 = vcvt.s32.f32 %v660
        %v725 = vcvt.s32.f32 %v661
        %v726 = vcvt.s32.f32 %v662
        %v727 = vcvt.s32.f32 %v663
        %v728 = vcvt.s32.f32 %v664
        %v729 = vcvt.s32.f32 %v665
        %v730 = vcvt.s32.f32 %v666
        %v731 = vcvt.s32.f32 %v667
        %v732 = vcvt.s32.f32 %v668
        %v733 = vcvt.s32.f32 %v669
        %v734 = vcvt.s32.f32 %v670
        %v735 = vcvt.s32.f32 %v671
        %v736 = vcvt.s32.f32 %v672
        %v737 = vcvt.s32.f32 %v673
        %v738 = vcvt.s32.f32 %v674
        %v739 = vcvt.s32.f32 %v675
        %v740 = vcvt.s32.f32 %v676
        %v741 = vcvt.s32.f32 %v677
        %v742 = vcvt.s32.f32 %v678
        %v743 = vcvt.s32.f32 %v679
        %v744 = vcvt.s32.f32 %v680
        %v745 = vcvt.s32.f32 %v681
        %v746 = vcvt.s32.f32 %v682
        %v747 = vcvt.s32.f32 %v683
        %v748 = vcvt.s32.f32 %v684
        %v749 = vcvt.s32.f32 %v685
        %v750 = vcvt.s32.f32 %v686
        %v751 = vcvt.s32.f32 %v687
        %v752 = vcvt.s32.f32 %v688
        %v753 = vcvt.s32.f32 %v689
        %v754 = vcvt.s32.f32 %v690
        %v755 = vcvt.s32.f32 %v691
        %v756 = vcvt.s32.f32 %v692
        %v757 = vcvt.s32.f32 %v693
        %v758 = vcvt.s32.f32 %v694
        %v759 = vcvt.s32.f32 %v695
        %v760 = vcvt.s32.f32 %v696
        %v761 = vcvt.s32.f32 %v697
        %v762 = vcvt.s32.f32 %v698
        %v763 = vcvt.s32.f32 %v699
        %v764 = vcvt.s32.f32 %v700
        %v765 = vcvt.s32.f32 %v701
        %v766 = vlaneseq
        %v767 = vshrl.u32 %v766, 7
        %v768 = vsub.s32 1, %v767
        %v769 = vrot.slane %v531, %v768
        %v770 = vlaneseq
        %v771 = vshrl.u32 %v770, 7
        %v772 = vsub.s32 1, %v771
        %v773 = vrot.slane %v532, %v772
        %vm774 = vcmp.eq.s32.totalorder %v769, %v534
        %vm775 = vcmp.eq.s32.totalorder %v773, %v534
        %vm776 = vcmp.eq.s32.totalorder %v769, %v535
        %vm777 = vcmp.eq.s32.totalorder %v773, %v535
        %vm778 = vcmp.eq.s32.totalorder %v769, %v536
        %vm779 = vcmp.eq.s32.totalorder %v773, %v536
        %vm780 = vcmp.eq.s32.totalorder %v769, %v537
        %vm781 = vcmp.eq.s32.totalorder %v773, %v537
        %vm782 = vcmp.eq.s32.totalorder %v769, %v538
        %vm783 = vcmp.eq.s32.totalorder %v773, %v538
        %vm784 = vcmp.eq.s32.totalorder %v769, %v539
        %vm785 = vcmp.eq.s32.totalorder %v773, %v539
        %vm786 = vcmp.eq.s32.totalorder %v769, %v540
        %vm787 = vcmp.eq.s32.totalorder %v773, %v540
        %vm788 = vcmp.eq.s32.totalorder %v769, %v541
        %vm789 = vcmp.eq.s32.totalorder %v773, %v541
        %vm790 = vcmp.eq.s32.totalorder %v769, %v542
        %vm791 = vcmp.eq.s32.totalorder %v773, %v542
        %vm792 = vcmp.eq.s32.totalorder %v769, %v543
        %vm793 = vcmp.eq.s32.totalorder %v773, %v543
        %vm794 = vcmp.eq.s32.totalorder %v769, %v544
        %vm795 = vcmp.eq.s32.totalorder %v773, %v544
        %vm796 = vcmp.eq.s32.totalorder %v769, %v545
        %vm797 = vcmp.eq.s32.totalorder %v773, %v545
        %vm798 = vcmp.eq.s32.totalorder %v769, %v546
        %vm799 = vcmp.eq.s32.totalorder %v773, %v546
        %vm800 = vcmp.eq.s32.totalorder %v769, %v547
        %vm801 = vcmp.eq.s32.totalorder %v773, %v547
        %vm802 = vcmp.eq.s32.totalorder %v769, %v548
        %vm803 = vcmp.eq.s32.totalorder %v773, %v548
        %vm804 = vcmp.eq.s32.totalorder %v769, %v549
        %vm805 = vcmp.eq.s32.totalorder %v773, %v549
        %vm806 = vcmp.eq.s32.totalorder %v769, %v550
        %vm807 = vcmp.eq.s32.totalorder %v773, %v550
        %vm808 = vcmp.eq.s32.totalorder %v769, %v551
        %vm809 = vcmp.eq.s32.totalorder %v773, %v551
        %vm810 = vcmp.eq.s32.totalorder %v769, %v552
        %vm811 = vcmp.eq.s32.totalorder %v773, %v552
        %vm812 = vcmp.eq.s32.totalorder %v769, %v553
        %vm813 = vcmp.eq.s32.totalorder %v773, %v553
        %vm814 = vcmp.eq.s32.totalorder %v769, %v554
        %vm815 = vcmp.eq.s32.totalorder %v773, %v554
        %vm816 = vcmp.eq.s32.totalorder %v769, %v555
        %vm817 = vcmp.eq.s32.totalorder %v773, %v555
        %vm818 = vcmp.eq.s32.totalorder %v769, %v556
        %vm819 = vcmp.eq.s32.totalorder %v773, %v556
        %vm820 = vcmp.eq.s32.totalorder %v769, %v557
        %vm821 = vcmp.eq.s32.totalorder %v773, %v557
        %vm822 = vcmp.eq.s32.totalorder %v769, %v558
        %vm823 = vcmp.eq.s32.totalorder %v773, %v558
        %vm824 = vcmp.eq.s32.totalorder %v769, %v559
        %vm825 = vcmp.eq.s32.totalorder %v773, %v559
        %vm826 = vcmp.eq.s32.totalorder %v769, %v560
        %vm827 = vcmp.eq.s32.totalorder %v773, %v560
        %vm828 = vcmp.eq.s32.totalorder %v769, %v561
        %vm829 = vcmp.eq.s32.totalorder %v773, %v561
        %vm830 = vcmp.eq.s32.totalorder %v769, %v562
        %vm831 = vcmp.eq.s32.totalorder %v773, %v562
        %vm832 = vcmp.eq.s32.totalorder %v769, %v563
        %vm833 = vcmp.eq.s32.totalorder %v773, %v563
        %vm834 = vcmp.eq.s32.totalorder %v769, %v564
        %vm835 = vcmp.eq.s32.totalorder %v773, %v564
        %vm836 = vcmp.eq.s32.totalorder %v769, %v565
        %vm837 = vcmp.eq.s32.totalorder %v773, %v565
        %v838 = vsel %vm774, 1, 0
        %v839 = vsel %vm775, 1, 0
        %v840 = vsel %vm776, 1, 0
        %v841 = vsel %vm777, 1, 0
        %v842 = vsel %vm778, 1, 0
        %v843 = vsel %vm779, 1, 0
        %v844 = vsel %vm780, 1, 0
        %v845 = vsel %vm781, 1, 0
        %v846 = vsel %vm782, 1, 0
        %v847 = vsel %vm783, 1, 0
        %v848 = vsel %vm784, 1, 0
        %v849 = vsel %vm785, 1, 0
        %v850 = vsel %vm786, 1, 0
        %v851 = vsel %vm787, 1, 0
        %v852 = vsel %vm788, 1, 0
        %v853 = vsel %vm789, 1, 0
        %v854 = vsel %vm790, 1, 0
        %v855 = vsel %vm791, 1, 0
        %v856 = vsel %vm792, 1, 0
        %v857 = vsel %vm793, 1, 0
        %v858 = vsel %vm794, 1, 0
        %v859 = vsel %vm795, 1, 0
        %v860 = vsel %vm796, 1, 0
        %v861 = vsel %vm797, 1, 0
        %v862 = vsel %vm798, 1, 0
        %v863 = vsel %vm799, 1, 0
        %v864 = vsel %vm800, 1, 0
        %v865 = vsel %vm801, 1, 0
        %v866 = vsel %vm802, 1, 0
        %v867 = vsel %vm803, 1, 0
        %v868 = vsel %vm804, 1, 0
        %v869 = vsel %vm805, 1, 0
        %v870 = vsel %vm806, 1, 0
        %v871 = vsel %vm807, 1, 0
        %v872 = vsel %vm808, 1, 0
        %v873 = vsel %vm809, 1, 0
        %v874 = vsel %vm810, 1, 0
        %v875 = vsel %vm811, 1, 0
        %v876 = vsel %vm812, 1, 0
        %v877 = vsel %vm813, 1, 0
        %v878 = vsel %vm814, 1, 0
        %v879 = vsel %vm815, 1, 0
        %v880 = vsel %vm816, 1, 0
        %v881 = vsel %vm817, 1, 0
        %v882 = vsel %vm818, 1, 0
        %v883 = vsel %vm819, 1, 0
        %v884 = vsel %vm820, 1, 0
        %v885 = vsel %vm821, 1, 0
        %v886 = vsel %vm822, 1, 0
        %v887 = vsel %vm823, 1, 0
        %v888 = vsel %vm824, 1, 0
        %v889 = vsel %vm825, 1, 0
        %v890 = vsel %vm826, 1, 0
        %v891 = vsel %vm827, 1, 0
        %v892 = vsel %vm828, 1, 0
        %v893 = vsel %vm829, 1, 0
        %v894 = vsel %vm830, 1, 0
        %v895 = vsel %vm831, 1, 0
        %v896 = vsel %vm832, 1, 0
        %v897 = vsel %vm833, 1, 0
        %v898 = vsel %vm834, 1, 0
        %v899 = vsel %vm835, 1, 0
        %v900 = vsel %vm836, 1, 0
        %v901 = vsel %vm837, 1, 0
        %v902 = vcvt.s32.f32 %v838
        %v903 = vcvt.s32.f32 %v839
        %v904 = vcvt.s32.f32 %v840
        %v905 = vcvt.s32.f32 %v841
        %v906 = vcvt.s32.f32 %v842
        %v907 = vcvt.s32.f32 %v843
        %v908 = vcvt.s32.f32 %v844
        %v909 = vcvt.s32.f32 %v845
        %v910 = vcvt.s32.f32 %v846
        %v911 = vcvt.s32.f32 %v847
        %v912 = vcvt.s32.f32 %v848
        %v913 = vcvt.s32.f32 %v849
        %v914 = vcvt.s32.f32 %v850
        %v915 = vcvt.s32.f32 %v851
        %v916 = vcvt.s32.f32 %v852
        %v917 = vcvt.s32.f32 %v853
        %v918 = vcvt.s32.f32 %v854
        %v919 = vcvt.s32.f32 %v855
        %v920 = vcvt.s32.f32 %v856
        %v921 = vcvt.s32.f32 %v857
        %v922 = vcvt.s32.f32 %v858
        %v923 = vcvt.s32.f32 %v859
        %v924 = vcvt.s32.f32 %v860
        %v925 = vcvt.s32.f32 %v861
        %v926 = vcvt.s32.f32 %v862
        %v927 = vcvt.s32.f32 %v863
        %v928 = vcvt.s32.f32 %v864
        %v929 = vcvt.s32.f32 %v865
        %v930 = vcvt.s32.f32 %v866
        %v931 = vcvt.s32.f32 %v867
        %v932 = vcvt.s32.f32 %v868
        %v933 = vcvt.s32.f32 %v869
        %v934 = vcvt.s32.f32 %v870
        %v935 = vcvt.s32.f32 %v871
        %v936 = vcvt.s32.f32 %v872
        %v937 = vcvt.s32.f32 %v873
        %v938 = vcvt.s32.f32 %v874
        %v939 = vcvt.s32.f32 %v875
        %v940 = vcvt.s32.f32 %v876
        %v941 = vcvt.s32.f32 %v877
        %v942 = vcvt.s32.f32 %v878
        %v943 = vcvt.s32.f32 %v879
        %v944 = vcvt.s32.f32 %v880
        %v945 = vcvt.s32.f32 %v881
        %v946 = vcvt.s32.f32 %v882
        %v947 = vcvt.s32.f32 %v883
        %v948 = vcvt.s32.f32 %v884
        %v949 = vcvt.s32.f32 %v885
        %v950 = vcvt.s32.f32 %v886
        %v951 = vcvt.s32.f32 %v887
        %v952 = vcvt.s32.f32 %v888
        %v953 = vcvt.s32.f32 %v889
        %v954 = vcvt.s32.f32 %v890
        %v955 = vcvt.s32.f32 %v891
        %v956 = vcvt.s32.f32 %v892
        %v957 = vcvt.s32.f32 %v893
        %v958 = vcvt.s32.f32 %v894
        %v959 = vcvt.s32.f32 %v895
        %v960 = vcvt.s32.f32 %v896
        %v961 = vcvt.s32.f32 %v897
        %v962 = vcvt.s32.f32 %v898
        %v963 = vcvt.s32.f32 %v899
        %v964 = vcvt.s32.f32 %v900
        %v965 = vcvt.s32.f32 %v901
        %v966 = vadd.f32 %v702, %v902
        %v967 = vadd.f32 %v703, %v903
        %v968 = vadd.f32 %v704, %v904
        %v969 = vadd.f32 %v705, %v905
        %v970 = vadd.f32 %v706, %v906
        %v971 = vadd.f32 %v707, %v907
        %v972 = vadd.f32 %v708, %v908
        %v973 = vadd.f32 %v709, %v909
        %v974 = vadd.f32 %v710, %v910
        %v975 = vadd.f32 %v711, %v911
        %v976 = vadd.f32 %v712, %v912
        %v977 = vadd.f32 %v713, %v913
        %v978 = vadd.f32 %v714, %v914
        %v979 = vadd.f32 %v715, %v915
        %v980 = vadd.f32 %v716, %v916
        %v981 = vadd.f32 %v717, %v917
        %v982 = vadd.f32 %v718, %v918
        %v983 = vadd.f32 %v719, %v919
        %v984 = vadd.f32 %v720, %v920
        %v985 = vadd.f32 %v721, %v921
        %v986 = vadd.f32 %v722, %v922
        %v987 = vadd.f32 %v723, %v923
        %v988 = vadd.f32 %v724, %v924
        %v989 = vadd.f32 %v725, %v925
        %v990 = vadd.f32 %v726, %v926
        %v991 = vadd.f32 %v727, %v927
        %v992 = vadd.f32 %v728, %v928
        %v993 = vadd.f32 %v729, %v929
        %v994 = vadd.f32 %v730, %v930
        %v995 = vadd.f32 %v731, %v931
        %v996 = vadd.f32 %v732, %v932
        %v997 = vadd.f32 %v733, %v933
        %v998 = vadd.f32 %v734, %v934
        %v999 = vadd.f32 %v735, %v935
        %v1000 = vadd.f32 %v736, %v936
        %v1001 = vadd.f32 %v737, %v937
        %v1002 = vadd.f32 %v738, %v938
        %v1003 = vadd.f32 %v739, %v939
        %v1004 = vadd.f32 %v740, %v940
        %v1005 = vadd.f32 %v741, %v941
        %v1006 = vadd.f32 %v742, %v942
        %v1007 = vadd.f32 %v743, %v943
        %v1008 = vadd.f32 %v744, %v944
        %v1009 = vadd.f32 %v745, %v945
        %v1010 = vadd.f32 %v746, %v946
        %v1011 = vadd.f32 %v747, %v947
        %v1012 = vadd.f32 %v748, %v948
        %v1013 = vadd.f32 %v749, %v949
        %v1014 = vadd.f32 %v750, %v950
        %v1015 = vadd.f32 %v751, %v951
        %v1016 = vadd.f32 %v752, %v952
        %v1017 = vadd.f32 %v753, %v953
        %v1018 = vadd.f32 %v754, %v954
        %v1019 = vadd.f32 %v755, %v955
        %v1020 = vadd.f32 %v756, %v956
        %v1021 = vadd.f32 %v757, %v957
        %v1022 = vadd.f32 %v758, %v958
        %v1023 = vadd.f32 %v759, %v959
        %v1024 = vadd.f32 %v760, %v960
        %v1025 = vadd.f32 %v761, %v961
        %v1026 = vadd.f32 %v762, %v962
        %v1027 = vadd.f32 %v763, %v963
        %v1028 = vadd.f32 %v764, %v964
        %v1029 = vadd.f32 %v765, %v965
        %v1030 = vlaneseq
        %v1031 = vshrl.u32 %v1030, 7
        %v1032 = vsub.s32 2, %v1031
        %v1033 = vrot.slane %v531, %v1032
        %v1034 = vlaneseq
        %v1035 = vshrl.u32 %v1034, 7
        %v1036 = vsub.s32 2, %v1035
        %v1037 = vrot.slane %v532, %v1036
        %vm1038 = vcmp.eq.s32.totalorder %v1033, %v534
        %vm1039 = vcmp.eq.s32.totalorder %v1037, %v534
        %vm1040 = vcmp.eq.s32.totalorder %v1033, %v535
        %vm1041 = vcmp.eq.s32.totalorder %v1037, %v535
        %vm1042 = vcmp.eq.s32.totalorder %v1033, %v536
        %vm1043 = vcmp.eq.s32.totalorder %v1037, %v536
        %vm1044 = vcmp.eq.s32.totalorder %v1033, %v537
        %vm1045 = vcmp.eq.s32.totalorder %v1037, %v537
        %vm1046 = vcmp.eq.s32.totalorder %v1033, %v538
        %vm1047 = vcmp.eq.s32.totalorder %v1037, %v538
        %vm1048 = vcmp.eq.s32.totalorder %v1033, %v539
        %vm1049 = vcmp.eq.s32.totalorder %v1037, %v539
        %vm1050 = vcmp.eq.s32.totalorder %v1033, %v540
        %vm1051 = vcmp.eq.s32.totalorder %v1037, %v540
        %vm1052 = vcmp.eq.s32.totalorder %v1033, %v541
        %vm1053 = vcmp.eq.s32.totalorder %v1037, %v541
        %vm1054 = vcmp.eq.s32.totalorder %v1033, %v542
        %vm1055 = vcmp.eq.s32.totalorder %v1037, %v542
        %vm1056 = vcmp.eq.s32.totalorder %v1033, %v543
        %vm1057 = vcmp.eq.s32.totalorder %v1037, %v543
        %vm1058 = vcmp.eq.s32.totalorder %v1033, %v544
        %vm1059 = vcmp.eq.s32.totalorder %v1037, %v544
        %vm1060 = vcmp.eq.s32.totalorder %v1033, %v545
        %vm1061 = vcmp.eq.s32.totalorder %v1037, %v545
        %vm1062 = vcmp.eq.s32.totalorder %v1033, %v546
        %vm1063 = vcmp.eq.s32.totalorder %v1037, %v546
        %vm1064 = vcmp.eq.s32.totalorder %v1033, %v547
        %vm1065 = vcmp.eq.s32.totalorder %v1037, %v547
        %vm1066 = vcmp.eq.s32.totalorder %v1033, %v548
        %vm1067 = vcmp.eq.s32.totalorder %v1037, %v548
        %vm1068 = vcmp.eq.s32.totalorder %v1033, %v549
        %vm1069 = vcmp.eq.s32.totalorder %v1037, %v549
        %vm1070 = vcmp.eq.s32.totalorder %v1033, %v550
        %vm1071 = vcmp.eq.s32.totalorder %v1037, %v550
        %vm1072 = vcmp.eq.s32.totalorder %v1033, %v551
        %vm1073 = vcmp.eq.s32.totalorder %v1037, %v551
        %vm1074 = vcmp.eq.s32.totalorder %v1033, %v552
        %vm1075 = vcmp.eq.s32.totalorder %v1037, %v552
        %vm1076 = vcmp.eq.s32.totalorder %v1033, %v553
        %vm1077 = vcmp.eq.s32.totalorder %v1037, %v553
        %vm1078 = vcmp.eq.s32.totalorder %v1033, %v554
        %vm1079 = vcmp.eq.s32.totalorder %v1037, %v554
        %vm1080 = vcmp.eq.s32.totalorder %v1033, %v555
        %vm1081 = vcmp.eq.s32.totalorder %v1037, %v555
        %vm1082 = vcmp.eq.s32.totalorder %v1033, %v556
        %vm1083 = vcmp.eq.s32.totalorder %v1037, %v556
        %vm1084 = vcmp.eq.s32.totalorder %v1033, %v557
        %vm1085 = vcmp.eq.s32.totalorder %v1037, %v557
        %vm1086 = vcmp.eq.s32.totalorder %v1033, %v558
        %vm1087 = vcmp.eq.s32.totalorder %v1037, %v558
        %vm1088 = vcmp.eq.s32.totalorder %v1033, %v559
        %vm1089 = vcmp.eq.s32.totalorder %v1037, %v559
        %vm1090 = vcmp.eq.s32.totalorder %v1033, %v560
        %vm1091 = vcmp.eq.s32.totalorder %v1037, %v560
        %vm1092 = vcmp.eq.s32.totalorder %v1033, %v561
        %vm1093 = vcmp.eq.s32.totalorder %v1037, %v561
        %vm1094 = vcmp.eq.s32.totalorder %v1033, %v562
        %vm1095 = vcmp.eq.s32.totalorder %v1037, %v562
        %vm1096 = vcmp.eq.s32.totalorder %v1033, %v563
        %vm1097 = vcmp.eq.s32.totalorder %v1037, %v563
        %vm1098 = vcmp.eq.s32.totalorder %v1033, %v564
        %vm1099 = vcmp.eq.s32.totalorder %v1037, %v564
        %vm1100 = vcmp.eq.s32.totalorder %v1033, %v565
        %vm1101 = vcmp.eq.s32.totalorder %v1037, %v565
        %v1102 = vsel %vm1038, 1, 0
        %v1103 = vsel %vm1039, 1, 0
        %v1104 = vsel %vm1040, 1, 0
        %v1105 = vsel %vm1041, 1, 0
        %v1106 = vsel %vm1042, 1, 0
        %v1107 = vsel %vm1043, 1, 0
        %v1108 = vsel %vm1044, 1, 0
        %v1109 = vsel %vm1045, 1, 0
        %v1110 = vsel %vm1046, 1, 0
        %v1111 = vsel %vm1047, 1, 0
        %v1112 = vsel %vm1048, 1, 0
        %v1113 = vsel %vm1049, 1, 0
        %v1114 = vsel %vm1050, 1, 0
        %v1115 = vsel %vm1051, 1, 0
        %v1116 = vsel %vm1052, 1, 0
        %v1117 = vsel %vm1053, 1, 0
        %v1118 = vsel %vm1054, 1, 0
        %v1119 = vsel %vm1055, 1, 0
        %v1120 = vsel %vm1056, 1, 0
        %v1121 = vsel %vm1057, 1, 0
        %v1122 = vsel %vm1058, 1, 0
        %v1123 = vsel %vm1059, 1, 0
        %v1124 = vsel %vm1060, 1, 0
        %v1125 = vsel %vm1061, 1, 0
        %v1126 = vsel %vm1062, 1, 0
        %v1127 = vsel %vm1063, 1, 0
        %v1128 = vsel %vm1064, 1, 0
        %v1129 = vsel %vm1065, 1, 0
        %v1130 = vsel %vm1066, 1, 0
        %v1131 = vsel %vm1067, 1, 0
        %v1132 = vsel %vm1068, 1, 0
        %v1133 = vsel %vm1069, 1, 0
        %v1134 = vsel %vm1070, 1, 0
        %v1135 = vsel %vm1071, 1, 0
        %v1136 = vsel %vm1072, 1, 0
        %v1137 = vsel %vm1073, 1, 0
        %v1138 = vsel %vm1074, 1, 0
        %v1139 = vsel %vm1075, 1, 0
        %v1140 = vsel %vm1076, 1, 0
        %v1141 = vsel %vm1077, 1, 0
        %v1142 = vsel %vm1078, 1, 0
        %v1143 = vsel %vm1079, 1, 0
        %v1144 = vsel %vm1080, 1, 0
        %v1145 = vsel %vm1081, 1, 0
        %v1146 = vsel %vm1082, 1, 0
        %v1147 = vsel %vm1083, 1, 0
        %v1148 = vsel %vm1084, 1, 0
        %v1149 = vsel %vm1085, 1, 0
        %v1150 = vsel %vm1086, 1, 0
        %v1151 = vsel %vm1087, 1, 0
        %v1152 = vsel %vm1088, 1, 0
        %v1153 = vsel %vm1089, 1, 0
        %v1154 = vsel %vm1090, 1, 0
        %v1155 = vsel %vm1091, 1, 0
        %v1156 = vsel %vm1092, 1, 0
        %v1157 = vsel %vm1093, 1, 0
        %v1158 = vsel %vm1094, 1, 0
        %v1159 = vsel %vm1095, 1, 0
        %v1160 = vsel %vm1096, 1, 0
        %v1161 = vsel %vm1097, 1, 0
        %v1162 = vsel %vm1098, 1, 0
        %v1163 = vsel %vm1099, 1, 0
        %v1164 = vsel %vm1100, 1, 0
        %v1165 = vsel %vm1101, 1, 0
        %v1166 = vcvt.s32.f32 %v1102
        %v1167 = vcvt.s32.f32 %v1103
        %v1168 = vcvt.s32.f32 %v1104
        %v1169 = vcvt.s32.f32 %v1105
        %v1170 = vcvt.s32.f32 %v1106
        %v1171 = vcvt.s32.f32 %v1107
        %v1172 = vcvt.s32.f32 %v1108
        %v1173 = vcvt.s32.f32 %v1109
        %v1174 = vcvt.s32.f32 %v1110
        %v1175 = vcvt.s32.f32 %v1111
        %v1176 = vcvt.s32.f32 %v1112
        %v1177 = vcvt.s32.f32 %v1113
        %v1178 = vcvt.s32.f32 %v1114
        %v1179 = vcvt.s32.f32 %v1115
        %v1180 = vcvt.s32.f32 %v1116
        %v1181 = vcvt.s32.f32 %v1117
        %v1182 = vcvt.s32.f32 %v1118
        %v1183 = vcvt.s32.f32 %v1119
        %v1184 = vcvt.s32.f32 %v1120
        %v1185 = vcvt.s32.f32 %v1121
        %v1186 = vcvt.s32.f32 %v1122
        %v1187 = vcvt.s32.f32 %v1123
        %v1188 = vcvt.s32.f32 %v1124
        %v1189 = vcvt.s32.f32 %v1125
        %v1190 = vcvt.s32.f32 %v1126
        %v1191 = vcvt.s32.f32 %v1127
        %v1192 = vcvt.s32.f32 %v1128
        %v1193 = vcvt.s32.f32 %v1129
        %v1194 = vcvt.s32.f32 %v1130
        %v1195 = vcvt.s32.f32 %v1131
        %v1196 = vcvt.s32.f32 %v1132
        %v1197 = vcvt.s32.f32 %v1133
        %v1198 = vcvt.s32.f32 %v1134
        %v1199 = vcvt.s32.f32 %v1135
        %v1200 = vcvt.s32.f32 %v1136
        %v1201 = vcvt.s32.f32 %v1137
        %v1202 = vcvt.s32.f32 %v1138
        %v1203 = vcvt.s32.f32 %v1139
        %v1204 = vcvt.s32.f32 %v1140
        %v1205 = vcvt.s32.f32 %v1141
        %v1206 = vcvt.s32.f32 %v1142
        %v1207 = vcvt.s32.f32 %v1143
        %v1208 = vcvt.s32.f32 %v1144
        %v1209 = vcvt.s32.f32 %v1145
        %v1210 = vcvt.s32.f32 %v1146
        %v1211 = vcvt.s32.f32 %v1147
        %v1212 = vcvt.s32.f32 %v1148
        %v1213 = vcvt.s32.f32 %v1149
        %v1214 = vcvt.s32.f32 %v1150
        %v1215 = vcvt.s32.f32 %v1151
        %v1216 = vcvt.s32.f32 %v1152
        %v1217 = vcvt.s32.f32 %v1153
        %v1218 = vcvt.s32.f32 %v1154
        %v1219 = vcvt.s32.f32 %v1155
        %v1220 = vcvt.s32.f32 %v1156
        %v1221 = vcvt.s32.f32 %v1157
        %v1222 = vcvt.s32.f32 %v1158
        %v1223 = vcvt.s32.f32 %v1159
        %v1224 = vcvt.s32.f32 %v1160
        %v1225 = vcvt.s32.f32 %v1161
        %v1226 = vcvt.s32.f32 %v1162
        %v1227 = vcvt.s32.f32 %v1163
        %v1228 = vcvt.s32.f32 %v1164
        %v1229 = vcvt.s32.f32 %v1165
        %v1230 = vadd.f32 %v966, %v1166
        %v1231 = vadd.f32 %v967, %v1167
        %v1232 = vadd.f32 %v968, %v1168
        %v1233 = vadd.f32 %v969, %v1169
        %v1234 = vadd.f32 %v970, %v1170
        %v1235 = vadd.f32 %v971, %v1171
        %v1236 = vadd.f32 %v972, %v1172
        %v1237 = vadd.f32 %v973, %v1173
        %v1238 = vadd.f32 %v974, %v1174
        %v1239 = vadd.f32 %v975, %v1175
        %v1240 = vadd.f32 %v976, %v1176
        %v1241 = vadd.f32 %v977, %v1177
        %v1242 = vadd.f32 %v978, %v1178
        %v1243 = vadd.f32 %v979, %v1179
        %v1244 = vadd.f32 %v980, %v1180
        %v1245 = vadd.f32 %v981, %v1181
        %v1246 = vadd.f32 %v982, %v1182
        %v1247 = vadd.f32 %v983, %v1183
        %v1248 = vadd.f32 %v984, %v1184
        %v1249 = vadd.f32 %v985, %v1185
        %v1250 = vadd.f32 %v986, %v1186
        %v1251 = vadd.f32 %v987, %v1187
        %v1252 = vadd.f32 %v988, %v1188
        %v1253 = vadd.f32 %v989, %v1189
        %v1254 = vadd.f32 %v990, %v1190
        %v1255 = vadd.f32 %v991, %v1191
        %v1256 = vadd.f32 %v992, %v1192
        %v1257 = vadd.f32 %v993, %v1193
        %v1258 = vadd.f32 %v994, %v1194
        %v1259 = vadd.f32 %v995, %v1195
        %v1260 = vadd.f32 %v996, %v1196
        %v1261 = vadd.f32 %v997, %v1197
        %v1262 = vadd.f32 %v998, %v1198
        %v1263 = vadd.f32 %v999, %v1199
        %v1264 = vadd.f32 %v1000, %v1200
        %v1265 = vadd.f32 %v1001, %v1201
        %v1266 = vadd.f32 %v1002, %v1202
        %v1267 = vadd.f32 %v1003, %v1203
        %v1268 = vadd.f32 %v1004, %v1204
        %v1269 = vadd.f32 %v1005, %v1205
        %v1270 = vadd.f32 %v1006, %v1206
        %v1271 = vadd.f32 %v1007, %v1207
        %v1272 = vadd.f32 %v1008, %v1208
        %v1273 = vadd.f32 %v1009, %v1209
        %v1274 = vadd.f32 %v1010, %v1210
        %v1275 = vadd.f32 %v1011, %v1211
        %v1276 = vadd.f32 %v1012, %v1212
        %v1277 = vadd.f32 %v1013, %v1213
        %v1278 = vadd.f32 %v1014, %v1214
        %v1279 = vadd.f32 %v1015, %v1215
        %v1280 = vadd.f32 %v1016, %v1216
        %v1281 = vadd.f32 %v1017, %v1217
        %v1282 = vadd.f32 %v1018, %v1218
        %v1283 = vadd.f32 %v1019, %v1219
        %v1284 = vadd.f32 %v1020, %v1220
        %v1285 = vadd.f32 %v1021, %v1221
        %v1286 = vadd.f32 %v1022, %v1222
        %v1287 = vadd.f32 %v1023, %v1223
        %v1288 = vadd.f32 %v1024, %v1224
        %v1289 = vadd.f32 %v1025, %v1225
        %v1290 = vadd.f32 %v1026, %v1226
        %v1291 = vadd.f32 %v1027, %v1227
        %v1292 = vadd.f32 %v1028, %v1228
        %v1293 = vadd.f32 %v1029, %v1229
        %v1294 = vlaneseq
        %v1295 = vshrl.u32 %v1294, 7
        %v1296 = vsub.s32 3, %v1295
        %v1297 = vrot.slane %v531, %v1296
        %v1298 = vlaneseq
        %v1299 = vshrl.u32 %v1298, 7
        %v1300 = vsub.s32 3, %v1299
        %v1301 = vrot.slane %v532, %v1300
        %vm1302 = vcmp.eq.s32.totalorder %v1297, %v534
        %vm1303 = vcmp.eq.s32.totalorder %v1301, %v534
        %vm1304 = vcmp.eq.s32.totalorder %v1297, %v535
        %vm1305 = vcmp.eq.s32.totalorder %v1301, %v535
        %vm1306 = vcmp.eq.s32.totalorder %v1297, %v536
        %vm1307 = vcmp.eq.s32.totalorder %v1301, %v536
        %vm1308 = vcmp.eq.s32.totalorder %v1297, %v537
        %vm1309 = vcmp.eq.s32.totalorder %v1301, %v537
        %vm1310 = vcmp.eq.s32.totalorder %v1297, %v538
        %vm1311 = vcmp.eq.s32.totalorder %v1301, %v538
        %vm1312 = vcmp.eq.s32.totalorder %v1297, %v539
        %vm1313 = vcmp.eq.s32.totalorder %v1301, %v539
        %vm1314 = vcmp.eq.s32.totalorder %v1297, %v540
        %vm1315 = vcmp.eq.s32.totalorder %v1301, %v540
        %vm1316 = vcmp.eq.s32.totalorder %v1297, %v541
        %vm1317 = vcmp.eq.s32.totalorder %v1301, %v541
        %vm1318 = vcmp.eq.s32.totalorder %v1297, %v542
        %vm1319 = vcmp.eq.s32.totalorder %v1301, %v542
        %vm1320 = vcmp.eq.s32.totalorder %v1297, %v543
        %vm1321 = vcmp.eq.s32.totalorder %v1301, %v543
        %vm1322 = vcmp.eq.s32.totalorder %v1297, %v544
        %vm1323 = vcmp.eq.s32.totalorder %v1301, %v544
        %vm1324 = vcmp.eq.s32.totalorder %v1297, %v545
        %vm1325 = vcmp.eq.s32.totalorder %v1301, %v545
        %vm1326 = vcmp.eq.s32.totalorder %v1297, %v546
        %vm1327 = vcmp.eq.s32.totalorder %v1301, %v546
        %vm1328 = vcmp.eq.s32.totalorder %v1297, %v547
        %vm1329 = vcmp.eq.s32.totalorder %v1301, %v547
        %vm1330 = vcmp.eq.s32.totalorder %v1297, %v548
        %vm1331 = vcmp.eq.s32.totalorder %v1301, %v548
        %vm1332 = vcmp.eq.s32.totalorder %v1297, %v549
        %vm1333 = vcmp.eq.s32.totalorder %v1301, %v549
        %vm1334 = vcmp.eq.s32.totalorder %v1297, %v550
        %vm1335 = vcmp.eq.s32.totalorder %v1301, %v550
        %vm1336 = vcmp.eq.s32.totalorder %v1297, %v551
        %vm1337 = vcmp.eq.s32.totalorder %v1301, %v551
        %vm1338 = vcmp.eq.s32.totalorder %v1297, %v552
        %vm1339 = vcmp.eq.s32.totalorder %v1301, %v552
        %vm1340 = vcmp.eq.s32.totalorder %v1297, %v553
        %vm1341 = vcmp.eq.s32.totalorder %v1301, %v553
        %vm1342 = vcmp.eq.s32.totalorder %v1297, %v554
        %vm1343 = vcmp.eq.s32.totalorder %v1301, %v554
        %vm1344 = vcmp.eq.s32.totalorder %v1297, %v555
        %vm1345 = vcmp.eq.s32.totalorder %v1301, %v555
        %vm1346 = vcmp.eq.s32.totalorder %v1297, %v556
        %vm1347 = vcmp.eq.s32.totalorder %v1301, %v556
        %vm1348 = vcmp.eq.s32.totalorder %v1297, %v557
        %vm1349 = vcmp.eq.s32.totalorder %v1301, %v557
        %vm1350 = vcmp.eq.s32.totalorder %v1297, %v558
        %vm1351 = vcmp.eq.s32.totalorder %v1301, %v558
        %vm1352 = vcmp.eq.s32.totalorder %v1297, %v559
        %vm1353 = vcmp.eq.s32.totalorder %v1301, %v559
        %vm1354 = vcmp.eq.s32.totalorder %v1297, %v560
        %vm1355 = vcmp.eq.s32.totalorder %v1301, %v560
        %vm1356 = vcmp.eq.s32.totalorder %v1297, %v561
        %vm1357 = vcmp.eq.s32.totalorder %v1301, %v561
        %vm1358 = vcmp.eq.s32.totalorder %v1297, %v562
        %vm1359 = vcmp.eq.s32.totalorder %v1301, %v562
        %vm1360 = vcmp.eq.s32.totalorder %v1297, %v563
        %vm1361 = vcmp.eq.s32.totalorder %v1301, %v563
        %vm1362 = vcmp.eq.s32.totalorder %v1297, %v564
        %vm1363 = vcmp.eq.s32.totalorder %v1301, %v564
        %vm1364 = vcmp.eq.s32.totalorder %v1297, %v565
        %vm1365 = vcmp.eq.s32.totalorder %v1301, %v565
        %v1366 = vsel %vm1302, 1, 0
        %v1367 = vsel %vm1303, 1, 0
        %v1368 = vsel %vm1304, 1, 0
        %v1369 = vsel %vm1305, 1, 0
        %v1370 = vsel %vm1306, 1, 0
        %v1371 = vsel %vm1307, 1, 0
        %v1372 = vsel %vm1308, 1, 0
        %v1373 = vsel %vm1309, 1, 0
        %v1374 = vsel %vm1310, 1, 0
        %v1375 = vsel %vm1311, 1, 0
        %v1376 = vsel %vm1312, 1, 0
        %v1377 = vsel %vm1313, 1, 0
        %v1378 = vsel %vm1314, 1, 0
        %v1379 = vsel %vm1315, 1, 0
        %v1380 = vsel %vm1316, 1, 0
        %v1381 = vsel %vm1317, 1, 0
        %v1382 = vsel %vm1318, 1, 0
        %v1383 = vsel %vm1319, 1, 0
        %v1384 = vsel %vm1320, 1, 0
        %v1385 = vsel %vm1321, 1, 0
        %v1386 = vsel %vm1322, 1, 0
        %v1387 = vsel %vm1323, 1, 0
        %v1388 = vsel %vm1324, 1, 0
        %v1389 = vsel %vm1325, 1, 0
        %v1390 = vsel %vm1326, 1, 0
        %v1391 = vsel %vm1327, 1, 0
        %v1392 = vsel %vm1328, 1, 0
        %v1393 = vsel %vm1329, 1, 0
        %v1394 = vsel %vm1330, 1, 0
        %v1395 = vsel %vm1331, 1, 0
        %v1396 = vsel %vm1332, 1, 0
        %v1397 = vsel %vm1333, 1, 0
        %v1398 = vsel %vm1334, 1, 0
        %v1399 = vsel %vm1335, 1, 0
        %v1400 = vsel %vm1336, 1, 0
        %v1401 = vsel %vm1337, 1, 0
        %v1402 = vsel %vm1338, 1, 0
        %v1403 = vsel %vm1339, 1, 0
        %v1404 = vsel %vm1340, 1, 0
        %v1405 = vsel %vm1341, 1, 0
        %v1406 = vsel %vm1342, 1, 0
        %v1407 = vsel %vm1343, 1, 0
        %v1408 = vsel %vm1344, 1, 0
        %v1409 = vsel %vm1345, 1, 0
        %v1410 = vsel %vm1346, 1, 0
        %v1411 = vsel %vm1347, 1, 0
        %v1412 = vsel %vm1348, 1, 0
        %v1413 = vsel %vm1349, 1, 0
        %v1414 = vsel %vm1350, 1, 0
        %v1415 = vsel %vm1351, 1, 0
        %v1416 = vsel %vm1352, 1, 0
        %v1417 = vsel %vm1353, 1, 0
        %v1418 = vsel %vm1354, 1, 0
        %v1419 = vsel %vm1355, 1, 0
        %v1420 = vsel %vm1356, 1, 0
        %v1421 = vsel %vm1357, 1, 0
        %v1422 = vsel %vm1358, 1, 0
        %v1423 = vsel %vm1359, 1, 0
        %v1424 = vsel %vm1360, 1, 0
        %v1425 = vsel %vm1361, 1, 0
        %v1426 = vsel %vm1362, 1, 0
        %v1427 = vsel %vm1363, 1, 0
        %v1428 = vsel %vm1364, 1, 0
        %v1429 = vsel %vm1365, 1, 0
        %v1430 = vcvt.s32.f32 %v1366
        %v1431 = vcvt.s32.f32 %v1367
        %v1432 = vcvt.s32.f32 %v1368
        %v1433 = vcvt.s32.f32 %v1369
        %v1434 = vcvt.s32.f32 %v1370
        %v1435 = vcvt.s32.f32 %v1371
        %v1436 = vcvt.s32.f32 %v1372
        %v1437 = vcvt.s32.f32 %v1373
        %v1438 = vcvt.s32.f32 %v1374
        %v1439 = vcvt.s32.f32 %v1375
        %v1440 = vcvt.s32.f32 %v1376
        %v1441 = vcvt.s32.f32 %v1377
        %v1442 = vcvt.s32.f32 %v1378
        %v1443 = vcvt.s32.f32 %v1379
        %v1444 = vcvt.s32.f32 %v1380
        %v1445 = vcvt.s32.f32 %v1381
        %v1446 = vcvt.s32.f32 %v1382
        %v1447 = vcvt.s32.f32 %v1383
        %v1448 = vcvt.s32.f32 %v1384
        %v1449 = vcvt.s32.f32 %v1385
        %v1450 = vcvt.s32.f32 %v1386
        %v1451 = vcvt.s32.f32 %v1387
        %v1452 = vcvt.s32.f32 %v1388
        %v1453 = vcvt.s32.f32 %v1389
        %v1454 = vcvt.s32.f32 %v1390
        %v1455 = vcvt.s32.f32 %v1391
        %v1456 = vcvt.s32.f32 %v1392
        %v1457 = vcvt.s32.f32 %v1393
        %v1458 = vcvt.s32.f32 %v1394
        %v1459 = vcvt.s32.f32 %v1395
        %v1460 = vcvt.s32.f32 %v1396
        %v1461 = vcvt.s32.f32 %v1397
        %v1462 = vcvt.s32.f32 %v1398
        %v1463 = vcvt.s32.f32 %v1399
        %v1464 = vcvt.s32.f32 %v1400
        %v1465 = vcvt.s32.f32 %v1401
        %v1466 = vcvt.s32.f32 %v1402
        %v1467 = vcvt.s32.f32 %v1403
        %v1468 = vcvt.s32.f32 %v1404
        %v1469 = vcvt.s32.f32 %v1405
        %v1470 = vcvt.s32.f32 %v1406
        %v1471 = vcvt.s32.f32 %v1407
        %v1472 = vcvt.s32.f32 %v1408
        %v1473 = vcvt.s32.f32 %v1409
        %v1474 = vcvt.s32.f32 %v1410
        %v1475 = vcvt.s32.f32 %v1411
        %v1476 = vcvt.s32.f32 %v1412
        %v1477 = vcvt.s32.f32 %v1413
        %v1478 = vcvt.s32.f32 %v1414
        %v1479 = vcvt.s32.f32 %v1415
        %v1480 = vcvt.s32.f32 %v1416
        %v1481 = vcvt.s32.f32 %v1417
        %v1482 = vcvt.s32.f32 %v1418
        %v1483 = vcvt.s32.f32 %v1419
        %v1484 = vcvt.s32.f32 %v1420
        %v1485 = vcvt.s32.f32 %v1421
        %v1486 = vcvt.s32.f32 %v1422
        %v1487 = vcvt.s32.f32 %v1423
        %v1488 = vcvt.s32.f32 %v1424
        %v1489 = vcvt.s32.f32 %v1425
        %v1490 = vcvt.s32.f32 %v1426
        %v1491 = vcvt.s32.f32 %v1427
        %v1492 = vcvt.s32.f32 %v1428
        %v1493 = vcvt.s32.f32 %v1429
        %v1494 = vadd.f32 %v1230, %v1430
        %v1495 = vadd.f32 %v1231, %v1431
        %v1496 = vadd.f32 %v1232, %v1432
        %v1497 = vadd.f32 %v1233, %v1433
        %v1498 = vadd.f32 %v1234, %v1434
        %v1499 = vadd.f32 %v1235, %v1435
        %v1500 = vadd.f32 %v1236, %v1436
        %v1501 = vadd.f32 %v1237, %v1437
        %v1502 = vadd.f32 %v1238, %v1438
        %v1503 = vadd.f32 %v1239, %v1439
        %v1504 = vadd.f32 %v1240, %v1440
        %v1505 = vadd.f32 %v1241, %v1441
        %v1506 = vadd.f32 %v1242, %v1442
        %v1507 = vadd.f32 %v1243, %v1443
        %v1508 = vadd.f32 %v1244, %v1444
        %v1509 = vadd.f32 %v1245, %v1445
        %v1510 = vadd.f32 %v1246, %v1446
        %v1511 = vadd.f32 %v1247, %v1447
        %v1512 = vadd.f32 %v1248, %v1448
        %v1513 = vadd.f32 %v1249, %v1449
        %v1514 = vadd.f32 %v1250, %v1450
        %v1515 = vadd.f32 %v1251, %v1451
        %v1516 = vadd.f32 %v1252, %v1452
        %v1517 = vadd.f32 %v1253, %v1453
        %v1518 = vadd.f32 %v1254, %v1454
        %v1519 = vadd.f32 %v1255, %v1455
        %v1520 = vadd.f32 %v1256, %v1456
        %v1521 = vadd.f32 %v1257, %v1457
        %v1522 = vadd.f32 %v1258, %v1458
        %v1523 = vadd.f32 %v1259, %v1459
        %v1524 = vadd.f32 %v1260, %v1460
        %v1525 = vadd.f32 %v1261, %v1461
        %v1526 = vadd.f32 %v1262, %v1462
        %v1527 = vadd.f32 %v1263, %v1463
        %v1528 = vadd.f32 %v1264, %v1464
        %v1529 = vadd.f32 %v1265, %v1465
        %v1530 = vadd.f32 %v1266, %v1466
        %v1531 = vadd.f32 %v1267, %v1467
        %v1532 = vadd.f32 %v1268, %v1468
        %v1533 = vadd.f32 %v1269, %v1469
        %v1534 = vadd.f32 %v1270, %v1470
        %v1535 = vadd.f32 %v1271, %v1471
        %v1536 = vadd.f32 %v1272, %v1472
        %v1537 = vadd.f32 %v1273, %v1473
        %v1538 = vadd.f32 %v1274, %v1474
        %v1539 = vadd.f32 %v1275, %v1475
        %v1540 = vadd.f32 %v1276, %v1476
        %v1541 = vadd.f32 %v1277, %v1477
        %v1542 = vadd.f32 %v1278, %v1478
        %v1543 = vadd.f32 %v1279, %v1479
        %v1544 = vadd.f32 %v1280, %v1480
        %v1545 = vadd.f32 %v1281, %v1481
        %v1546 = vadd.f32 %v1282, %v1482
        %v1547 = vadd.f32 %v1283, %v1483
        %v1548 = vadd.f32 %v1284, %v1484
        %v1549 = vadd.f32 %v1285, %v1485
        %v1550 = vadd.f32 %v1286, %v1486
        %v1551 = vadd.f32 %v1287, %v1487
        %v1552 = vadd.f32 %v1288, %v1488
        %v1553 = vadd.f32 %v1289, %v1489
        %v1554 = vadd.f32 %v1290, %v1490
        %v1555 = vadd.f32 %v1291, %v1491
        %v1556 = vadd.f32 %v1292, %v1492
        %v1557 = vadd.f32 %v1293, %v1493
        %v1558 = vlaneseq
        %v1559 = vshrl.u32 %v1558, 7
        %v1560 = vsub.s32 4, %v1559
        %v1561 = vrot.slane %v531, %v1560
        %v1562 = vlaneseq
        %v1563 = vshrl.u32 %v1562, 7
        %v1564 = vsub.s32 4, %v1563
        %v1565 = vrot.slane %v532, %v1564
        %vm1566 = vcmp.eq.s32.totalorder %v1561, %v534
        %vm1567 = vcmp.eq.s32.totalorder %v1565, %v534
        %vm1568 = vcmp.eq.s32.totalorder %v1561, %v535
        %vm1569 = vcmp.eq.s32.totalorder %v1565, %v535
        %vm1570 = vcmp.eq.s32.totalorder %v1561, %v536
        %vm1571 = vcmp.eq.s32.totalorder %v1565, %v536
        %vm1572 = vcmp.eq.s32.totalorder %v1561, %v537
        %vm1573 = vcmp.eq.s32.totalorder %v1565, %v537
        %vm1574 = vcmp.eq.s32.totalorder %v1561, %v538
        %vm1575 = vcmp.eq.s32.totalorder %v1565, %v538
        %vm1576 = vcmp.eq.s32.totalorder %v1561, %v539
        %vm1577 = vcmp.eq.s32.totalorder %v1565, %v539
        %vm1578 = vcmp.eq.s32.totalorder %v1561, %v540
        %vm1579 = vcmp.eq.s32.totalorder %v1565, %v540
        %vm1580 = vcmp.eq.s32.totalorder %v1561, %v541
        %vm1581 = vcmp.eq.s32.totalorder %v1565, %v541
        %vm1582 = vcmp.eq.s32.totalorder %v1561, %v542
        %vm1583 = vcmp.eq.s32.totalorder %v1565, %v542
        %vm1584 = vcmp.eq.s32.totalorder %v1561, %v543
        %vm1585 = vcmp.eq.s32.totalorder %v1565, %v543
        %vm1586 = vcmp.eq.s32.totalorder %v1561, %v544
        %vm1587 = vcmp.eq.s32.totalorder %v1565, %v544
        %vm1588 = vcmp.eq.s32.totalorder %v1561, %v545
        %vm1589 = vcmp.eq.s32.totalorder %v1565, %v545
        %vm1590 = vcmp.eq.s32.totalorder %v1561, %v546
        %vm1591 = vcmp.eq.s32.totalorder %v1565, %v546
        %vm1592 = vcmp.eq.s32.totalorder %v1561, %v547
        %vm1593 = vcmp.eq.s32.totalorder %v1565, %v547
        %vm1594 = vcmp.eq.s32.totalorder %v1561, %v548
        %vm1595 = vcmp.eq.s32.totalorder %v1565, %v548
        %vm1596 = vcmp.eq.s32.totalorder %v1561, %v549
        %vm1597 = vcmp.eq.s32.totalorder %v1565, %v549
        %vm1598 = vcmp.eq.s32.totalorder %v1561, %v550
        %vm1599 = vcmp.eq.s32.totalorder %v1565, %v550
        %vm1600 = vcmp.eq.s32.totalorder %v1561, %v551
        %vm1601 = vcmp.eq.s32.totalorder %v1565, %v551
        %vm1602 = vcmp.eq.s32.totalorder %v1561, %v552
        %vm1603 = vcmp.eq.s32.totalorder %v1565, %v552
        %vm1604 = vcmp.eq.s32.totalorder %v1561, %v553
        %vm1605 = vcmp.eq.s32.totalorder %v1565, %v553
        %vm1606 = vcmp.eq.s32.totalorder %v1561, %v554
        %vm1607 = vcmp.eq.s32.totalorder %v1565, %v554
        %vm1608 = vcmp.eq.s32.totalorder %v1561, %v555
        %vm1609 = vcmp.eq.s32.totalorder %v1565, %v555
        %vm1610 = vcmp.eq.s32.totalorder %v1561, %v556
        %vm1611 = vcmp.eq.s32.totalorder %v1565, %v556
        %vm1612 = vcmp.eq.s32.totalorder %v1561, %v557
        %vm1613 = vcmp.eq.s32.totalorder %v1565, %v557
        %vm1614 = vcmp.eq.s32.totalorder %v1561, %v558
        %vm1615 = vcmp.eq.s32.totalorder %v1565, %v558
        %vm1616 = vcmp.eq.s32.totalorder %v1561, %v559
        %vm1617 = vcmp.eq.s32.totalorder %v1565, %v559
        %vm1618 = vcmp.eq.s32.totalorder %v1561, %v560
        %vm1619 = vcmp.eq.s32.totalorder %v1565, %v560
        %vm1620 = vcmp.eq.s32.totalorder %v1561, %v561
        %vm1621 = vcmp.eq.s32.totalorder %v1565, %v561
        %vm1622 = vcmp.eq.s32.totalorder %v1561, %v562
        %vm1623 = vcmp.eq.s32.totalorder %v1565, %v562
        %vm1624 = vcmp.eq.s32.totalorder %v1561, %v563
        %vm1625 = vcmp.eq.s32.totalorder %v1565, %v563
        %vm1626 = vcmp.eq.s32.totalorder %v1561, %v564
        %vm1627 = vcmp.eq.s32.totalorder %v1565, %v564
        %vm1628 = vcmp.eq.s32.totalorder %v1561, %v565
        %vm1629 = vcmp.eq.s32.totalorder %v1565, %v565
        %v1630 = vsel %vm1566, 1, 0
        %v1631 = vsel %vm1567, 1, 0
        %v1632 = vsel %vm1568, 1, 0
        %v1633 = vsel %vm1569, 1, 0
        %v1634 = vsel %vm1570, 1, 0
        %v1635 = vsel %vm1571, 1, 0
        %v1636 = vsel %vm1572, 1, 0
        %v1637 = vsel %vm1573, 1, 0
        %v1638 = vsel %vm1574, 1, 0
        %v1639 = vsel %vm1575, 1, 0
        %v1640 = vsel %vm1576, 1, 0
        %v1641 = vsel %vm1577, 1, 0
        %v1642 = vsel %vm1578, 1, 0
        %v1643 = vsel %vm1579, 1, 0
        %v1644 = vsel %vm1580, 1, 0
        %v1645 = vsel %vm1581, 1, 0
        %v1646 = vsel %vm1582, 1, 0
        %v1647 = vsel %vm1583, 1, 0
        %v1648 = vsel %vm1584, 1, 0
        %v1649 = vsel %vm1585, 1, 0
        %v1650 = vsel %vm1586, 1, 0
        %v1651 = vsel %vm1587, 1, 0
        %v1652 = vsel %vm1588, 1, 0
        %v1653 = vsel %vm1589, 1, 0
        %v1654 = vsel %vm1590, 1, 0
        %v1655 = vsel %vm1591, 1, 0
        %v1656 = vsel %vm1592, 1, 0
        %v1657 = vsel %vm1593, 1, 0
        %v1658 = vsel %vm1594, 1, 0
        %v1659 = vsel %vm1595, 1, 0
        %v1660 = vsel %vm1596, 1, 0
        %v1661 = vsel %vm1597, 1, 0
        %v1662 = vsel %vm1598, 1, 0
        %v1663 = vsel %vm1599, 1, 0
        %v1664 = vsel %vm1600, 1, 0
        %v1665 = vsel %vm1601, 1, 0
        %v1666 = vsel %vm1602, 1, 0
        %v1667 = vsel %vm1603, 1, 0
        %v1668 = vsel %vm1604, 1, 0
        %v1669 = vsel %vm1605, 1, 0
        %v1670 = vsel %vm1606, 1, 0
        %v1671 = vsel %vm1607, 1, 0
        %v1672 = vsel %vm1608, 1, 0
        %v1673 = vsel %vm1609, 1, 0
        %v1674 = vsel %vm1610, 1, 0
        %v1675 = vsel %vm1611, 1, 0
        %v1676 = vsel %vm1612, 1, 0
        %v1677 = vsel %vm1613, 1, 0
        %v1678 = vsel %vm1614, 1, 0
        %v1679 = vsel %vm1615, 1, 0
        %v1680 = vsel %vm1616, 1, 0
        %v1681 = vsel %vm1617, 1, 0
        %v1682 = vsel %vm1618, 1, 0
        %v1683 = vsel %vm1619, 1, 0
        %v1684 = vsel %vm1620, 1, 0
        %v1685 = vsel %vm1621, 1, 0
        %v1686 = vsel %vm1622, 1, 0
        %v1687 = vsel %vm1623, 1, 0
        %v1688 = vsel %vm1624, 1, 0
        %v1689 = vsel %vm1625, 1, 0
        %v1690 = vsel %vm1626, 1, 0
        %v1691 = vsel %vm1627, 1, 0
        %v1692 = vsel %vm1628, 1, 0
        %v1693 = vsel %vm1629, 1, 0
        %v1694 = vcvt.s32.f32 %v1630
        %v1695 = vcvt.s32.f32 %v1631
        %v1696 = vcvt.s32.f32 %v1632
        %v1697 = vcvt.s32.f32 %v1633
        %v1698 = vcvt.s32.f32 %v1634
        %v1699 = vcvt.s32.f32 %v1635
        %v1700 = vcvt.s32.f32 %v1636
        %v1701 = vcvt.s32.f32 %v1637
        %v1702 = vcvt.s32.f32 %v1638
        %v1703 = vcvt.s32.f32 %v1639
        %v1704 = vcvt.s32.f32 %v1640
        %v1705 = vcvt.s32.f32 %v1641
        %v1706 = vcvt.s32.f32 %v1642
        %v1707 = vcvt.s32.f32 %v1643
        %v1708 = vcvt.s32.f32 %v1644
        %v1709 = vcvt.s32.f32 %v1645
        %v1710 = vcvt.s32.f32 %v1646
        %v1711 = vcvt.s32.f32 %v1647
        %v1712 = vcvt.s32.f32 %v1648
        %v1713 = vcvt.s32.f32 %v1649
        %v1714 = vcvt.s32.f32 %v1650
        %v1715 = vcvt.s32.f32 %v1651
        %v1716 = vcvt.s32.f32 %v1652
        %v1717 = vcvt.s32.f32 %v1653
        %v1718 = vcvt.s32.f32 %v1654
        %v1719 = vcvt.s32.f32 %v1655
        %v1720 = vcvt.s32.f32 %v1656
        %v1721 = vcvt.s32.f32 %v1657
        %v1722 = vcvt.s32.f32 %v1658
        %v1723 = vcvt.s32.f32 %v1659
        %v1724 = vcvt.s32.f32 %v1660
        %v1725 = vcvt.s32.f32 %v1661
        %v1726 = vcvt.s32.f32 %v1662
        %v1727 = vcvt.s32.f32 %v1663
        %v1728 = vcvt.s32.f32 %v1664
        %v1729 = vcvt.s32.f32 %v1665
        %v1730 = vcvt.s32.f32 %v1666
        %v1731 = vcvt.s32.f32 %v1667
        %v1732 = vcvt.s32.f32 %v1668
        %v1733 = vcvt.s32.f32 %v1669
        %v1734 = vcvt.s32.f32 %v1670
        %v1735 = vcvt.s32.f32 %v1671
        %v1736 = vcvt.s32.f32 %v1672
        %v1737 = vcvt.s32.f32 %v1673
        %v1738 = vcvt.s32.f32 %v1674
        %v1739 = vcvt.s32.f32 %v1675
        %v1740 = vcvt.s32.f32 %v1676
        %v1741 = vcvt.s32.f32 %v1677
        %v1742 = vcvt.s32.f32 %v1678
        %v1743 = vcvt.s32.f32 %v1679
        %v1744 = vcvt.s32.f32 %v1680
        %v1745 = vcvt.s32.f32 %v1681
        %v1746 = vcvt.s32.f32 %v1682
        %v1747 = vcvt.s32.f32 %v1683
        %v1748 = vcvt.s32.f32 %v1684
        %v1749 = vcvt.s32.f32 %v1685
        %v1750 = vcvt.s32.f32 %v1686
        %v1751 = vcvt.s32.f32 %v1687
        %v1752 = vcvt.s32.f32 %v1688
        %v1753 = vcvt.s32.f32 %v1689
        %v1754 = vcvt.s32.f32 %v1690
        %v1755 = vcvt.s32.f32 %v1691
        %v1756 = vcvt.s32.f32 %v1692
        %v1757 = vcvt.s32.f32 %v1693
        %v1758 = vadd.f32 %v1494, %v1694
        %v1759 = vadd.f32 %v1495, %v1695
        %v1760 = vadd.f32 %v1496, %v1696
        %v1761 = vadd.f32 %v1497, %v1697
        %v1762 = vadd.f32 %v1498, %v1698
        %v1763 = vadd.f32 %v1499, %v1699
        %v1764 = vadd.f32 %v1500, %v1700
        %v1765 = vadd.f32 %v1501, %v1701
        %v1766 = vadd.f32 %v1502, %v1702
        %v1767 = vadd.f32 %v1503, %v1703
        %v1768 = vadd.f32 %v1504, %v1704
        %v1769 = vadd.f32 %v1505, %v1705
        %v1770 = vadd.f32 %v1506, %v1706
        %v1771 = vadd.f32 %v1507, %v1707
        %v1772 = vadd.f32 %v1508, %v1708
        %v1773 = vadd.f32 %v1509, %v1709
        %v1774 = vadd.f32 %v1510, %v1710
        %v1775 = vadd.f32 %v1511, %v1711
        %v1776 = vadd.f32 %v1512, %v1712
        %v1777 = vadd.f32 %v1513, %v1713
        %v1778 = vadd.f32 %v1514, %v1714
        %v1779 = vadd.f32 %v1515, %v1715
        %v1780 = vadd.f32 %v1516, %v1716
        %v1781 = vadd.f32 %v1517, %v1717
        %v1782 = vadd.f32 %v1518, %v1718
        %v1783 = vadd.f32 %v1519, %v1719
        %v1784 = vadd.f32 %v1520, %v1720
        %v1785 = vadd.f32 %v1521, %v1721
        %v1786 = vadd.f32 %v1522, %v1722
        %v1787 = vadd.f32 %v1523, %v1723
        %v1788 = vadd.f32 %v1524, %v1724
        %v1789 = vadd.f32 %v1525, %v1725
        %v1790 = vadd.f32 %v1526, %v1726
        %v1791 = vadd.f32 %v1527, %v1727
        %v1792 = vadd.f32 %v1528, %v1728
        %v1793 = vadd.f32 %v1529, %v1729
        %v1794 = vadd.f32 %v1530, %v1730
        %v1795 = vadd.f32 %v1531, %v1731
        %v1796 = vadd.f32 %v1532, %v1732
        %v1797 = vadd.f32 %v1533, %v1733
        %v1798 = vadd.f32 %v1534, %v1734
        %v1799 = vadd.f32 %v1535, %v1735
        %v1800 = vadd.f32 %v1536, %v1736
        %v1801 = vadd.f32 %v1537, %v1737
        %v1802 = vadd.f32 %v1538, %v1738
        %v1803 = vadd.f32 %v1539, %v1739
        %v1804 = vadd.f32 %v1540, %v1740
        %v1805 = vadd.f32 %v1541, %v1741
        %v1806 = vadd.f32 %v1542, %v1742
        %v1807 = vadd.f32 %v1543, %v1743
        %v1808 = vadd.f32 %v1544, %v1744
        %v1809 = vadd.f32 %v1545, %v1745
        %v1810 = vadd.f32 %v1546, %v1746
        %v1811 = vadd.f32 %v1547, %v1747
        %v1812 = vadd.f32 %v1548, %v1748
        %v1813 = vadd.f32 %v1549, %v1749
        %v1814 = vadd.f32 %v1550, %v1750
        %v1815 = vadd.f32 %v1551, %v1751
        %v1816 = vadd.f32 %v1552, %v1752
        %v1817 = vadd.f32 %v1553, %v1753
        %v1818 = vadd.f32 %v1554, %v1754
        %v1819 = vadd.f32 %v1555, %v1755
        %v1820 = vadd.f32 %v1556, %v1756
        %v1821 = vadd.f32 %v1557, %v1757
        %v1822 = vlaneseq
        %v1823 = vshrl.u32 %v1822, 7
        %v1824 = vsub.s32 5, %v1823
        %v1825 = vrot.slane %v531, %v1824
        %v1826 = vlaneseq
        %v1827 = vshrl.u32 %v1826, 7
        %v1828 = vsub.s32 5, %v1827
        %v1829 = vrot.slane %v532, %v1828
        %vm1830 = vcmp.eq.s32.totalorder %v1825, %v534
        %vm1831 = vcmp.eq.s32.totalorder %v1829, %v534
        %vm1832 = vcmp.eq.s32.totalorder %v1825, %v535
        %vm1833 = vcmp.eq.s32.totalorder %v1829, %v535
        %vm1834 = vcmp.eq.s32.totalorder %v1825, %v536
        %vm1835 = vcmp.eq.s32.totalorder %v1829, %v536
        %vm1836 = vcmp.eq.s32.totalorder %v1825, %v537
        %vm1837 = vcmp.eq.s32.totalorder %v1829, %v537
        %vm1838 = vcmp.eq.s32.totalorder %v1825, %v538
        %vm1839 = vcmp.eq.s32.totalorder %v1829, %v538
        %vm1840 = vcmp.eq.s32.totalorder %v1825, %v539
        %vm1841 = vcmp.eq.s32.totalorder %v1829, %v539
        %vm1842 = vcmp.eq.s32.totalorder %v1825, %v540
        %vm1843 = vcmp.eq.s32.totalorder %v1829, %v540
        %vm1844 = vcmp.eq.s32.totalorder %v1825, %v541
        %vm1845 = vcmp.eq.s32.totalorder %v1829, %v541
        %vm1846 = vcmp.eq.s32.totalorder %v1825, %v542
        %vm1847 = vcmp.eq.s32.totalorder %v1829, %v542
        %vm1848 = vcmp.eq.s32.totalorder %v1825, %v543
        %vm1849 = vcmp.eq.s32.totalorder %v1829, %v543
        %vm1850 = vcmp.eq.s32.totalorder %v1825, %v544
        %vm1851 = vcmp.eq.s32.totalorder %v1829, %v544
        %vm1852 = vcmp.eq.s32.totalorder %v1825, %v545
        %vm1853 = vcmp.eq.s32.totalorder %v1829, %v545
        %vm1854 = vcmp.eq.s32.totalorder %v1825, %v546
        %vm1855 = vcmp.eq.s32.totalorder %v1829, %v546
        %vm1856 = vcmp.eq.s32.totalorder %v1825, %v547
        %vm1857 = vcmp.eq.s32.totalorder %v1829, %v547
        %vm1858 = vcmp.eq.s32.totalorder %v1825, %v548
        %vm1859 = vcmp.eq.s32.totalorder %v1829, %v548
        %vm1860 = vcmp.eq.s32.totalorder %v1825, %v549
        %vm1861 = vcmp.eq.s32.totalorder %v1829, %v549
        %vm1862 = vcmp.eq.s32.totalorder %v1825, %v550
        %vm1863 = vcmp.eq.s32.totalorder %v1829, %v550
        %vm1864 = vcmp.eq.s32.totalorder %v1825, %v551
        %vm1865 = vcmp.eq.s32.totalorder %v1829, %v551
        %vm1866 = vcmp.eq.s32.totalorder %v1825, %v552
        %vm1867 = vcmp.eq.s32.totalorder %v1829, %v552
        %vm1868 = vcmp.eq.s32.totalorder %v1825, %v553
        %vm1869 = vcmp.eq.s32.totalorder %v1829, %v553
        %vm1870 = vcmp.eq.s32.totalorder %v1825, %v554
        %vm1871 = vcmp.eq.s32.totalorder %v1829, %v554
        %vm1872 = vcmp.eq.s32.totalorder %v1825, %v555
        %vm1873 = vcmp.eq.s32.totalorder %v1829, %v555
        %vm1874 = vcmp.eq.s32.totalorder %v1825, %v556
        %vm1875 = vcmp.eq.s32.totalorder %v1829, %v556
        %vm1876 = vcmp.eq.s32.totalorder %v1825, %v557
        %vm1877 = vcmp.eq.s32.totalorder %v1829, %v557
        %vm1878 = vcmp.eq.s32.totalorder %v1825, %v558
        %vm1879 = vcmp.eq.s32.totalorder %v1829, %v558
        %vm1880 = vcmp.eq.s32.totalorder %v1825, %v559
        %vm1881 = vcmp.eq.s32.totalorder %v1829, %v559
        %vm1882 = vcmp.eq.s32.totalorder %v1825, %v560
        %vm1883 = vcmp.eq.s32.totalorder %v1829, %v560
        %vm1884 = vcmp.eq.s32.totalorder %v1825, %v561
        %vm1885 = vcmp.eq.s32.totalorder %v1829, %v561
        %vm1886 = vcmp.eq.s32.totalorder %v1825, %v562
        %vm1887 = vcmp.eq.s32.totalorder %v1829, %v562
        %vm1888 = vcmp.eq.s32.totalorder %v1825, %v563
        %vm1889 = vcmp.eq.s32.totalorder %v1829, %v563
        %vm1890 = vcmp.eq.s32.totalorder %v1825, %v564
        %vm1891 = vcmp.eq.s32.totalorder %v1829, %v564
        %vm1892 = vcmp.eq.s32.totalorder %v1825, %v565
        %vm1893 = vcmp.eq.s32.totalorder %v1829, %v565
        %v1894 = vsel %vm1830, 1, 0
        %v1895 = vsel %vm1831, 1, 0
        %v1896 = vsel %vm1832, 1, 0
        %v1897 = vsel %vm1833, 1, 0
        %v1898 = vsel %vm1834, 1, 0
        %v1899 = vsel %vm1835, 1, 0
        %v1900 = vsel %vm1836, 1, 0
        %v1901 = vsel %vm1837, 1, 0
        %v1902 = vsel %vm1838, 1, 0
        %v1903 = vsel %vm1839, 1, 0
        %v1904 = vsel %vm1840, 1, 0
        %v1905 = vsel %vm1841, 1, 0
        %v1906 = vsel %vm1842, 1, 0
        %v1907 = vsel %vm1843, 1, 0
        %v1908 = vsel %vm1844, 1, 0
        %v1909 = vsel %vm1845, 1, 0
        %v1910 = vsel %vm1846, 1, 0
        %v1911 = vsel %vm1847, 1, 0
        %v1912 = vsel %vm1848, 1, 0
        %v1913 = vsel %vm1849, 1, 0
        %v1914 = vsel %vm1850, 1, 0
        %v1915 = vsel %vm1851, 1, 0
        %v1916 = vsel %vm1852, 1, 0
        %v1917 = vsel %vm1853, 1, 0
        %v1918 = vsel %vm1854, 1, 0
        %v1919 = vsel %vm1855, 1, 0
        %v1920 = vsel %vm1856, 1, 0
        %v1921 = vsel %vm1857, 1, 0
        %v1922 = vsel %vm1858, 1, 0
        %v1923 = vsel %vm1859, 1, 0
        %v1924 = vsel %vm1860, 1, 0
        %v1925 = vsel %vm1861, 1, 0
        %v1926 = vsel %vm1862, 1, 0
        %v1927 = vsel %vm1863, 1, 0
        %v1928 = vsel %vm1864, 1, 0
        %v1929 = vsel %vm1865, 1, 0
        %v1930 = vsel %vm1866, 1, 0
        %v1931 = vsel %vm1867, 1, 0
        %v1932 = vsel %vm1868, 1, 0
        %v1933 = vsel %vm1869, 1, 0
        %v1934 = vsel %vm1870, 1, 0
        %v1935 = vsel %vm1871, 1, 0
        %v1936 = vsel %vm1872, 1, 0
        %v1937 = vsel %vm1873, 1, 0
        %v1938 = vsel %vm1874, 1, 0
        %v1939 = vsel %vm1875, 1, 0
        %v1940 = vsel %vm1876, 1, 0
        %v1941 = vsel %vm1877, 1, 0
        %v1942 = vsel %vm1878, 1, 0
        %v1943 = vsel %vm1879, 1, 0
        %v1944 = vsel %vm1880, 1, 0
        %v1945 = vsel %vm1881, 1, 0
        %v1946 = vsel %vm1882, 1, 0
        %v1947 = vsel %vm1883, 1, 0
        %v1948 = vsel %vm1884, 1, 0
        %v1949 = vsel %vm1885, 1, 0
        %v1950 = vsel %vm1886, 1, 0
        %v1951 = vsel %vm1887, 1, 0
        %v1952 = vsel %vm1888, 1, 0
        %v1953 = vsel %vm1889, 1, 0
        %v1954 = vsel %vm1890, 1, 0
        %v1955 = vsel %vm1891, 1, 0
        %v1956 = vsel %vm1892, 1, 0
        %v1957 = vsel %vm1893, 1, 0
        %v1958 = vcvt.s32.f32 %v1894
        %v1959 = vcvt.s32.f32 %v1895
        %v1960 = vcvt.s32.f32 %v1896
        %v1961 = vcvt.s32.f32 %v1897
        %v1962 = vcvt.s32.f32 %v1898
        %v1963 = vcvt.s32.f32 %v1899
        %v1964 = vcvt.s32.f32 %v1900
        %v1965 = vcvt.s32.f32 %v1901
        %v1966 = vcvt.s32.f32 %v1902
        %v1967 = vcvt.s32.f32 %v1903
        %v1968 = vcvt.s32.f32 %v1904
        %v1969 = vcvt.s32.f32 %v1905
        %v1970 = vcvt.s32.f32 %v1906
        %v1971 = vcvt.s32.f32 %v1907
        %v1972 = vcvt.s32.f32 %v1908
        %v1973 = vcvt.s32.f32 %v1909
        %v1974 = vcvt.s32.f32 %v1910
        %v1975 = vcvt.s32.f32 %v1911
        %v1976 = vcvt.s32.f32 %v1912
        %v1977 = vcvt.s32.f32 %v1913
        %v1978 = vcvt.s32.f32 %v1914
        %v1979 = vcvt.s32.f32 %v1915
        %v1980 = vcvt.s32.f32 %v1916
        %v1981 = vcvt.s32.f32 %v1917
        %v1982 = vcvt.s32.f32 %v1918
        %v1983 = vcvt.s32.f32 %v1919
        %v1984 = vcvt.s32.f32 %v1920
        %v1985 = vcvt.s32.f32 %v1921
        %v1986 = vcvt.s32.f32 %v1922
        %v1987 = vcvt.s32.f32 %v1923
        %v1988 = vcvt.s32.f32 %v1924
        %v1989 = vcvt.s32.f32 %v1925
        %v1990 = vcvt.s32.f32 %v1926
        %v1991 = vcvt.s32.f32 %v1927
        %v1992 = vcvt.s32.f32 %v1928
        %v1993 = vcvt.s32.f32 %v1929
        %v1994 = vcvt.s32.f32 %v1930
        %v1995 = vcvt.s32.f32 %v1931
        %v1996 = vcvt.s32.f32 %v1932
        %v1997 = vcvt.s32.f32 %v1933
        %v1998 = vcvt.s32.f32 %v1934
        %v1999 = vcvt.s32.f32 %v1935
        %v2000 = vcvt.s32.f32 %v1936
        %v2001 = vcvt.s32.f32 %v1937
        %v2002 = vcvt.s32.f32 %v1938
        %v2003 = vcvt.s32.f32 %v1939
        %v2004 = vcvt.s32.f32 %v1940
        %v2005 = vcvt.s32.f32 %v1941
        %v2006 = vcvt.s32.f32 %v1942
        %v2007 = vcvt.s32.f32 %v1943
        %v2008 = vcvt.s32.f32 %v1944
        %v2009 = vcvt.s32.f32 %v1945
        %v2010 = vcvt.s32.f32 %v1946
        %v2011 = vcvt.s32.f32 %v1947
        %v2012 = vcvt.s32.f32 %v1948
        %v2013 = vcvt.s32.f32 %v1949
        %v2014 = vcvt.s32.f32 %v1950
        %v2015 = vcvt.s32.f32 %v1951
        %v2016 = vcvt.s32.f32 %v1952
        %v2017 = vcvt.s32.f32 %v1953
        %v2018 = vcvt.s32.f32 %v1954
        %v2019 = vcvt.s32.f32 %v1955
        %v2020 = vcvt.s32.f32 %v1956
        %v2021 = vcvt.s32.f32 %v1957
        %v2022 = vadd.f32 %v1758, %v1958
        %v2023 = vadd.f32 %v1759, %v1959
        %v2024 = vadd.f32 %v1760, %v1960
        %v2025 = vadd.f32 %v1761, %v1961
        %v2026 = vadd.f32 %v1762, %v1962
        %v2027 = vadd.f32 %v1763, %v1963
        %v2028 = vadd.f32 %v1764, %v1964
        %v2029 = vadd.f32 %v1765, %v1965
        %v2030 = vadd.f32 %v1766, %v1966
        %v2031 = vadd.f32 %v1767, %v1967
        %v2032 = vadd.f32 %v1768, %v1968
        %v2033 = vadd.f32 %v1769, %v1969
        %v2034 = vadd.f32 %v1770, %v1970
        %v2035 = vadd.f32 %v1771, %v1971
        %v2036 = vadd.f32 %v1772, %v1972
        %v2037 = vadd.f32 %v1773, %v1973
        %v2038 = vadd.f32 %v1774, %v1974
        %v2039 = vadd.f32 %v1775, %v1975
        %v2040 = vadd.f32 %v1776, %v1976
        %v2041 = vadd.f32 %v1777, %v1977
        %v2042 = vadd.f32 %v1778, %v1978
        %v2043 = vadd.f32 %v1779, %v1979
        %v2044 = vadd.f32 %v1780, %v1980
        %v2045 = vadd.f32 %v1781, %v1981
        %v2046 = vadd.f32 %v1782, %v1982
        %v2047 = vadd.f32 %v1783, %v1983
        %v2048 = vadd.f32 %v1784, %v1984
        %v2049 = vadd.f32 %v1785, %v1985
        %v2050 = vadd.f32 %v1786, %v1986
        %v2051 = vadd.f32 %v1787, %v1987
        %v2052 = vadd.f32 %v1788, %v1988
        %v2053 = vadd.f32 %v1789, %v1989
        %v2054 = vadd.f32 %v1790, %v1990
        %v2055 = vadd.f32 %v1791, %v1991
        %v2056 = vadd.f32 %v1792, %v1992
        %v2057 = vadd.f32 %v1793, %v1993
        %v2058 = vadd.f32 %v1794, %v1994
        %v2059 = vadd.f32 %v1795, %v1995
        %v2060 = vadd.f32 %v1796, %v1996
        %v2061 = vadd.f32 %v1797, %v1997
        %v2062 = vadd.f32 %v1798, %v1998
        %v2063 = vadd.f32 %v1799, %v1999
        %v2064 = vadd.f32 %v1800, %v2000
        %v2065 = vadd.f32 %v1801, %v2001
        %v2066 = vadd.f32 %v1802, %v2002
        %v2067 = vadd.f32 %v1803, %v2003
        %v2068 = vadd.f32 %v1804, %v2004
        %v2069 = vadd.f32 %v1805, %v2005
        %v2070 = vadd.f32 %v1806, %v2006
        %v2071 = vadd.f32 %v1807, %v2007
        %v2072 = vadd.f32 %v1808, %v2008
        %v2073 = vadd.f32 %v1809, %v2009
        %v2074 = vadd.f32 %v1810, %v2010
        %v2075 = vadd.f32 %v1811, %v2011
        %v2076 = vadd.f32 %v1812, %v2012
        %v2077 = vadd.f32 %v1813, %v2013
        %v2078 = vadd.f32 %v1814, %v2014
        %v2079 = vadd.f32 %v1815, %v2015
        %v2080 = vadd.f32 %v1816, %v2016
        %v2081 = vadd.f32 %v1817, %v2017
        %v2082 = vadd.f32 %v1818, %v2018
        %v2083 = vadd.f32 %v1819, %v2019
        %v2084 = vadd.f32 %v1820, %v2020
        %v2085 = vadd.f32 %v1821, %v2021
        %v2086 = vlaneseq
        %v2087 = vshrl.u32 %v2086, 7
        %v2088 = vsub.s32 6, %v2087
        %v2089 = vrot.slane %v531, %v2088
        %v2090 = vlaneseq
        %v2091 = vshrl.u32 %v2090, 7
        %v2092 = vsub.s32 6, %v2091
        %v2093 = vrot.slane %v532, %v2092
        %vm2094 = vcmp.eq.s32.totalorder %v2089, %v534
        %vm2095 = vcmp.eq.s32.totalorder %v2093, %v534
        %vm2096 = vcmp.eq.s32.totalorder %v2089, %v535
        %vm2097 = vcmp.eq.s32.totalorder %v2093, %v535
        %vm2098 = vcmp.eq.s32.totalorder %v2089, %v536
        %vm2099 = vcmp.eq.s32.totalorder %v2093, %v536
        %vm2100 = vcmp.eq.s32.totalorder %v2089, %v537
        %vm2101 = vcmp.eq.s32.totalorder %v2093, %v537
        %vm2102 = vcmp.eq.s32.totalorder %v2089, %v538
        %vm2103 = vcmp.eq.s32.totalorder %v2093, %v538
        %vm2104 = vcmp.eq.s32.totalorder %v2089, %v539
        %vm2105 = vcmp.eq.s32.totalorder %v2093, %v539
        %vm2106 = vcmp.eq.s32.totalorder %v2089, %v540
        %vm2107 = vcmp.eq.s32.totalorder %v2093, %v540
        %vm2108 = vcmp.eq.s32.totalorder %v2089, %v541
        %vm2109 = vcmp.eq.s32.totalorder %v2093, %v541
        %vm2110 = vcmp.eq.s32.totalorder %v2089, %v542
        %vm2111 = vcmp.eq.s32.totalorder %v2093, %v542
        %vm2112 = vcmp.eq.s32.totalorder %v2089, %v543
        %vm2113 = vcmp.eq.s32.totalorder %v2093, %v543
        %vm2114 = vcmp.eq.s32.totalorder %v2089, %v544
        %vm2115 = vcmp.eq.s32.totalorder %v2093, %v544
        %vm2116 = vcmp.eq.s32.totalorder %v2089, %v545
        %vm2117 = vcmp.eq.s32.totalorder %v2093, %v545
        %vm2118 = vcmp.eq.s32.totalorder %v2089, %v546
        %vm2119 = vcmp.eq.s32.totalorder %v2093, %v546
        %vm2120 = vcmp.eq.s32.totalorder %v2089, %v547
        %vm2121 = vcmp.eq.s32.totalorder %v2093, %v547
        %vm2122 = vcmp.eq.s32.totalorder %v2089, %v548
        %vm2123 = vcmp.eq.s32.totalorder %v2093, %v548
        %vm2124 = vcmp.eq.s32.totalorder %v2089, %v549
        %vm2125 = vcmp.eq.s32.totalorder %v2093, %v549
        %vm2126 = vcmp.eq.s32.totalorder %v2089, %v550
        %vm2127 = vcmp.eq.s32.totalorder %v2093, %v550
        %vm2128 = vcmp.eq.s32.totalorder %v2089, %v551
        %vm2129 = vcmp.eq.s32.totalorder %v2093, %v551
        %vm2130 = vcmp.eq.s32.totalorder %v2089, %v552
        %vm2131 = vcmp.eq.s32.totalorder %v2093, %v552
        %vm2132 = vcmp.eq.s32.totalorder %v2089, %v553
        %vm2133 = vcmp.eq.s32.totalorder %v2093, %v553
        %vm2134 = vcmp.eq.s32.totalorder %v2089, %v554
        %vm2135 = vcmp.eq.s32.totalorder %v2093, %v554
        %vm2136 = vcmp.eq.s32.totalorder %v2089, %v555
        %vm2137 = vcmp.eq.s32.totalorder %v2093, %v555
        %vm2138 = vcmp.eq.s32.totalorder %v2089, %v556
        %vm2139 = vcmp.eq.s32.totalorder %v2093, %v556
        %vm2140 = vcmp.eq.s32.totalorder %v2089, %v557
        %vm2141 = vcmp.eq.s32.totalorder %v2093, %v557
        %vm2142 = vcmp.eq.s32.totalorder %v2089, %v558
        %vm2143 = vcmp.eq.s32.totalorder %v2093, %v558
        %vm2144 = vcmp.eq.s32.totalorder %v2089, %v559
        %vm2145 = vcmp.eq.s32.totalorder %v2093, %v559
        %vm2146 = vcmp.eq.s32.totalorder %v2089, %v560
        %vm2147 = vcmp.eq.s32.totalorder %v2093, %v560
        %vm2148 = vcmp.eq.s32.totalorder %v2089, %v561
        %vm2149 = vcmp.eq.s32.totalorder %v2093, %v561
        %vm2150 = vcmp.eq.s32.totalorder %v2089, %v562
        %vm2151 = vcmp.eq.s32.totalorder %v2093, %v562
        %vm2152 = vcmp.eq.s32.totalorder %v2089, %v563
        %vm2153 = vcmp.eq.s32.totalorder %v2093, %v563
        %vm2154 = vcmp.eq.s32.totalorder %v2089, %v564
        %vm2155 = vcmp.eq.s32.totalorder %v2093, %v564
        %vm2156 = vcmp.eq.s32.totalorder %v2089, %v565
        %vm2157 = vcmp.eq.s32.totalorder %v2093, %v565
        %v2158 = vsel %vm2094, 1, 0
        %v2159 = vsel %vm2095, 1, 0
        %v2160 = vsel %vm2096, 1, 0
        %v2161 = vsel %vm2097, 1, 0
        %v2162 = vsel %vm2098, 1, 0
        %v2163 = vsel %vm2099, 1, 0
        %v2164 = vsel %vm2100, 1, 0
        %v2165 = vsel %vm2101, 1, 0
        %v2166 = vsel %vm2102, 1, 0
        %v2167 = vsel %vm2103, 1, 0
        %v2168 = vsel %vm2104, 1, 0
        %v2169 = vsel %vm2105, 1, 0
        %v2170 = vsel %vm2106, 1, 0
        %v2171 = vsel %vm2107, 1, 0
        %v2172 = vsel %vm2108, 1, 0
        %v2173 = vsel %vm2109, 1, 0
        %v2174 = vsel %vm2110, 1, 0
        %v2175 = vsel %vm2111, 1, 0
        %v2176 = vsel %vm2112, 1, 0
        %v2177 = vsel %vm2113, 1, 0
        %v2178 = vsel %vm2114, 1, 0
        %v2179 = vsel %vm2115, 1, 0
        %v2180 = vsel %vm2116, 1, 0
        %v2181 = vsel %vm2117, 1, 0
        %v2182 = vsel %vm2118, 1, 0
        %v2183 = vsel %vm2119, 1, 0
        %v2184 = vsel %vm2120, 1, 0
        %v2185 = vsel %vm2121, 1, 0
        %v2186 = vsel %vm2122, 1, 0
        %v2187 = vsel %vm2123, 1, 0
        %v2188 = vsel %vm2124, 1, 0
        %v2189 = vsel %vm2125, 1, 0
        %v2190 = vsel %vm2126, 1, 0
        %v2191 = vsel %vm2127, 1, 0
        %v2192 = vsel %vm2128, 1, 0
        %v2193 = vsel %vm2129, 1, 0
        %v2194 = vsel %vm2130, 1, 0
        %v2195 = vsel %vm2131, 1, 0
        %v2196 = vsel %vm2132, 1, 0
        %v2197 = vsel %vm2133, 1, 0
        %v2198 = vsel %vm2134, 1, 0
        %v2199 = vsel %vm2135, 1, 0
        %v2200 = vsel %vm2136, 1, 0
        %v2201 = vsel %vm2137, 1, 0
        %v2202 = vsel %vm2138, 1, 0
        %v2203 = vsel %vm2139, 1, 0
        %v2204 = vsel %vm2140, 1, 0
        %v2205 = vsel %vm2141, 1, 0
        %v2206 = vsel %vm2142, 1, 0
        %v2207 = vsel %vm2143, 1, 0
        %v2208 = vsel %vm2144, 1, 0
        %v2209 = vsel %vm2145, 1, 0
        %v2210 = vsel %vm2146, 1, 0
        %v2211 = vsel %vm2147, 1, 0
        %v2212 = vsel %vm2148, 1, 0
        %v2213 = vsel %vm2149, 1, 0
        %v2214 = vsel %vm2150, 1, 0
        %v2215 = vsel %vm2151, 1, 0
        %v2216 = vsel %vm2152, 1, 0
        %v2217 = vsel %vm2153, 1, 0
        %v2218 = vsel %vm2154, 1, 0
        %v2219 = vsel %vm2155, 1, 0
        %v2220 = vsel %vm2156, 1, 0
        %v2221 = vsel %vm2157, 1, 0
        %v2222 = vcvt.s32.f32 %v2158
        %v2223 = vcvt.s32.f32 %v2159
        %v2224 = vcvt.s32.f32 %v2160
        %v2225 = vcvt.s32.f32 %v2161
        %v2226 = vcvt.s32.f32 %v2162
        %v2227 = vcvt.s32.f32 %v2163
        %v2228 = vcvt.s32.f32 %v2164
        %v2229 = vcvt.s32.f32 %v2165
        %v2230 = vcvt.s32.f32 %v2166
        %v2231 = vcvt.s32.f32 %v2167
        %v2232 = vcvt.s32.f32 %v2168
        %v2233 = vcvt.s32.f32 %v2169
        %v2234 = vcvt.s32.f32 %v2170
        %v2235 = vcvt.s32.f32 %v2171
        %v2236 = vcvt.s32.f32 %v2172
        %v2237 = vcvt.s32.f32 %v2173
        %v2238 = vcvt.s32.f32 %v2174
        %v2239 = vcvt.s32.f32 %v2175
        %v2240 = vcvt.s32.f32 %v2176
        %v2241 = vcvt.s32.f32 %v2177
        %v2242 = vcvt.s32.f32 %v2178
        %v2243 = vcvt.s32.f32 %v2179
        %v2244 = vcvt.s32.f32 %v2180
        %v2245 = vcvt.s32.f32 %v2181
        %v2246 = vcvt.s32.f32 %v2182
        %v2247 = vcvt.s32.f32 %v2183
        %v2248 = vcvt.s32.f32 %v2184
        %v2249 = vcvt.s32.f32 %v2185
        %v2250 = vcvt.s32.f32 %v2186
        %v2251 = vcvt.s32.f32 %v2187
        %v2252 = vcvt.s32.f32 %v2188
        %v2253 = vcvt.s32.f32 %v2189
        %v2254 = vcvt.s32.f32 %v2190
        %v2255 = vcvt.s32.f32 %v2191
        %v2256 = vcvt.s32.f32 %v2192
        %v2257 = vcvt.s32.f32 %v2193
        %v2258 = vcvt.s32.f32 %v2194
        %v2259 = vcvt.s32.f32 %v2195
        %v2260 = vcvt.s32.f32 %v2196
        %v2261 = vcvt.s32.f32 %v2197
        %v2262 = vcvt.s32.f32 %v2198
        %v2263 = vcvt.s32.f32 %v2199
        %v2264 = vcvt.s32.f32 %v2200
        %v2265 = vcvt.s32.f32 %v2201
        %v2266 = vcvt.s32.f32 %v2202
        %v2267 = vcvt.s32.f32 %v2203
        %v2268 = vcvt.s32.f32 %v2204
        %v2269 = vcvt.s32.f32 %v2205
        %v2270 = vcvt.s32.f32 %v2206
        %v2271 = vcvt.s32.f32 %v2207
        %v2272 = vcvt.s32.f32 %v2208
        %v2273 = vcvt.s32.f32 %v2209
        %v2274 = vcvt.s32.f32 %v2210
        %v2275 = vcvt.s32.f32 %v2211
        %v2276 = vcvt.s32.f32 %v2212
        %v2277 = vcvt.s32.f32 %v2213
        %v2278 = vcvt.s32.f32 %v2214
        %v2279 = vcvt.s32.f32 %v2215
        %v2280 = vcvt.s32.f32 %v2216
        %v2281 = vcvt.s32.f32 %v2217
        %v2282 = vcvt.s32.f32 %v2218
        %v2283 = vcvt.s32.f32 %v2219
        %v2284 = vcvt.s32.f32 %v2220
        %v2285 = vcvt.s32.f32 %v2221
        %v2286 = vadd.f32 %v2022, %v2222
        %v2287 = vadd.f32 %v2023, %v2223
        %v2288 = vadd.f32 %v2024, %v2224
        %v2289 = vadd.f32 %v2025, %v2225
        %v2290 = vadd.f32 %v2026, %v2226
        %v2291 = vadd.f32 %v2027, %v2227
        %v2292 = vadd.f32 %v2028, %v2228
        %v2293 = vadd.f32 %v2029, %v2229
        %v2294 = vadd.f32 %v2030, %v2230
        %v2295 = vadd.f32 %v2031, %v2231
        %v2296 = vadd.f32 %v2032, %v2232
        %v2297 = vadd.f32 %v2033, %v2233
        %v2298 = vadd.f32 %v2034, %v2234
        %v2299 = vadd.f32 %v2035, %v2235
        %v2300 = vadd.f32 %v2036, %v2236
        %v2301 = vadd.f32 %v2037, %v2237
        %v2302 = vadd.f32 %v2038, %v2238
        %v2303 = vadd.f32 %v2039, %v2239
        %v2304 = vadd.f32 %v2040, %v2240
        %v2305 = vadd.f32 %v2041, %v2241
        %v2306 = vadd.f32 %v2042, %v2242
        %v2307 = vadd.f32 %v2043, %v2243
        %v2308 = vadd.f32 %v2044, %v2244
        %v2309 = vadd.f32 %v2045, %v2245
        %v2310 = vadd.f32 %v2046, %v2246
        %v2311 = vadd.f32 %v2047, %v2247
        %v2312 = vadd.f32 %v2048, %v2248
        %v2313 = vadd.f32 %v2049, %v2249
        %v2314 = vadd.f32 %v2050, %v2250
        %v2315 = vadd.f32 %v2051, %v2251
        %v2316 = vadd.f32 %v2052, %v2252
        %v2317 = vadd.f32 %v2053, %v2253
        %v2318 = vadd.f32 %v2054, %v2254
        %v2319 = vadd.f32 %v2055, %v2255
        %v2320 = vadd.f32 %v2056, %v2256
        %v2321 = vadd.f32 %v2057, %v2257
        %v2322 = vadd.f32 %v2058, %v2258
        %v2323 = vadd.f32 %v2059, %v2259
        %v2324 = vadd.f32 %v2060, %v2260
        %v2325 = vadd.f32 %v2061, %v2261
        %v2326 = vadd.f32 %v2062, %v2262
        %v2327 = vadd.f32 %v2063, %v2263
        %v2328 = vadd.f32 %v2064, %v2264
        %v2329 = vadd.f32 %v2065, %v2265
        %v2330 = vadd.f32 %v2066, %v2266
        %v2331 = vadd.f32 %v2067, %v2267
        %v2332 = vadd.f32 %v2068, %v2268
        %v2333 = vadd.f32 %v2069, %v2269
        %v2334 = vadd.f32 %v2070, %v2270
        %v2335 = vadd.f32 %v2071, %v2271
        %v2336 = vadd.f32 %v2072, %v2272
        %v2337 = vadd.f32 %v2073, %v2273
        %v2338 = vadd.f32 %v2074, %v2274
        %v2339 = vadd.f32 %v2075, %v2275
        %v2340 = vadd.f32 %v2076, %v2276
        %v2341 = vadd.f32 %v2077, %v2277
        %v2342 = vadd.f32 %v2078, %v2278
        %v2343 = vadd.f32 %v2079, %v2279
        %v2344 = vadd.f32 %v2080, %v2280
        %v2345 = vadd.f32 %v2081, %v2281
        %v2346 = vadd.f32 %v2082, %v2282
        %v2347 = vadd.f32 %v2083, %v2283
        %v2348 = vadd.f32 %v2084, %v2284
        %v2349 = vadd.f32 %v2085, %v2285
        %v2350 = vlaneseq
        %v2351 = vshrl.u32 %v2350, 7
        %v2352 = vsub.s32 7, %v2351
        %v2353 = vrot.slane %v531, %v2352
        %v2354 = vlaneseq
        %v2355 = vshrl.u32 %v2354, 7
        %v2356 = vsub.s32 7, %v2355
        %v2357 = vrot.slane %v532, %v2356
        %vm2358 = vcmp.eq.s32.totalorder %v2353, %v534
        %vm2359 = vcmp.eq.s32.totalorder %v2357, %v534
        %vm2360 = vcmp.eq.s32.totalorder %v2353, %v535
        %vm2361 = vcmp.eq.s32.totalorder %v2357, %v535
        %vm2362 = vcmp.eq.s32.totalorder %v2353, %v536
        %vm2363 = vcmp.eq.s32.totalorder %v2357, %v536
        %vm2364 = vcmp.eq.s32.totalorder %v2353, %v537
        %vm2365 = vcmp.eq.s32.totalorder %v2357, %v537
        %vm2366 = vcmp.eq.s32.totalorder %v2353, %v538
        %vm2367 = vcmp.eq.s32.totalorder %v2357, %v538
        %vm2368 = vcmp.eq.s32.totalorder %v2353, %v539
        %vm2369 = vcmp.eq.s32.totalorder %v2357, %v539
        %vm2370 = vcmp.eq.s32.totalorder %v2353, %v540
        %vm2371 = vcmp.eq.s32.totalorder %v2357, %v540
        %vm2372 = vcmp.eq.s32.totalorder %v2353, %v541
        %vm2373 = vcmp.eq.s32.totalorder %v2357, %v541
        %vm2374 = vcmp.eq.s32.totalorder %v2353, %v542
        %vm2375 = vcmp.eq.s32.totalorder %v2357, %v542
        %vm2376 = vcmp.eq.s32.totalorder %v2353, %v543
        %vm2377 = vcmp.eq.s32.totalorder %v2357, %v543
        %vm2378 = vcmp.eq.s32.totalorder %v2353, %v544
        %vm2379 = vcmp.eq.s32.totalorder %v2357, %v544
        %vm2380 = vcmp.eq.s32.totalorder %v2353, %v545
        %vm2381 = vcmp.eq.s32.totalorder %v2357, %v545
        %vm2382 = vcmp.eq.s32.totalorder %v2353, %v546
        %vm2383 = vcmp.eq.s32.totalorder %v2357, %v546
        %vm2384 = vcmp.eq.s32.totalorder %v2353, %v547
        %vm2385 = vcmp.eq.s32.totalorder %v2357, %v547
        %vm2386 = vcmp.eq.s32.totalorder %v2353, %v548
        %vm2387 = vcmp.eq.s32.totalorder %v2357, %v548
        %vm2388 = vcmp.eq.s32.totalorder %v2353, %v549
        %vm2389 = vcmp.eq.s32.totalorder %v2357, %v549
        %vm2390 = vcmp.eq.s32.totalorder %v2353, %v550
        %vm2391 = vcmp.eq.s32.totalorder %v2357, %v550
        %vm2392 = vcmp.eq.s32.totalorder %v2353, %v551
        %vm2393 = vcmp.eq.s32.totalorder %v2357, %v551
        %vm2394 = vcmp.eq.s32.totalorder %v2353, %v552
        %vm2395 = vcmp.eq.s32.totalorder %v2357, %v552
        %vm2396 = vcmp.eq.s32.totalorder %v2353, %v553
        %vm2397 = vcmp.eq.s32.totalorder %v2357, %v553
        %vm2398 = vcmp.eq.s32.totalorder %v2353, %v554
        %vm2399 = vcmp.eq.s32.totalorder %v2357, %v554
        %vm2400 = vcmp.eq.s32.totalorder %v2353, %v555
        %vm2401 = vcmp.eq.s32.totalorder %v2357, %v555
        %vm2402 = vcmp.eq.s32.totalorder %v2353, %v556
        %vm2403 = vcmp.eq.s32.totalorder %v2357, %v556
        %vm2404 = vcmp.eq.s32.totalorder %v2353, %v557
        %vm2405 = vcmp.eq.s32.totalorder %v2357, %v557
        %vm2406 = vcmp.eq.s32.totalorder %v2353, %v558
        %vm2407 = vcmp.eq.s32.totalorder %v2357, %v558
        %vm2408 = vcmp.eq.s32.totalorder %v2353, %v559
        %vm2409 = vcmp.eq.s32.totalorder %v2357, %v559
        %vm2410 = vcmp.eq.s32.totalorder %v2353, %v560
        %vm2411 = vcmp.eq.s32.totalorder %v2357, %v560
        %vm2412 = vcmp.eq.s32.totalorder %v2353, %v561
        %vm2413 = vcmp.eq.s32.totalorder %v2357, %v561
        %vm2414 = vcmp.eq.s32.totalorder %v2353, %v562
        %vm2415 = vcmp.eq.s32.totalorder %v2357, %v562
        %vm2416 = vcmp.eq.s32.totalorder %v2353, %v563
        %vm2417 = vcmp.eq.s32.totalorder %v2357, %v563
        %vm2418 = vcmp.eq.s32.totalorder %v2353, %v564
        %vm2419 = vcmp.eq.s32.totalorder %v2357, %v564
        %vm2420 = vcmp.eq.s32.totalorder %v2353, %v565
        %vm2421 = vcmp.eq.s32.totalorder %v2357, %v565
        %v2422 = vsel %vm2358, 1, 0
        %v2423 = vsel %vm2359, 1, 0
        %v2424 = vsel %vm2360, 1, 0
        %v2425 = vsel %vm2361, 1, 0
        %v2426 = vsel %vm2362, 1, 0
        %v2427 = vsel %vm2363, 1, 0
        %v2428 = vsel %vm2364, 1, 0
        %v2429 = vsel %vm2365, 1, 0
        %v2430 = vsel %vm2366, 1, 0
        %v2431 = vsel %vm2367, 1, 0
        %v2432 = vsel %vm2368, 1, 0
        %v2433 = vsel %vm2369, 1, 0
        %v2434 = vsel %vm2370, 1, 0
        %v2435 = vsel %vm2371, 1, 0
        %v2436 = vsel %vm2372, 1, 0
        %v2437 = vsel %vm2373, 1, 0
        %v2438 = vsel %vm2374, 1, 0
        %v2439 = vsel %vm2375, 1, 0
        %v2440 = vsel %vm2376, 1, 0
        %v2441 = vsel %vm2377, 1, 0
        %v2442 = vsel %vm2378, 1, 0
        %v2443 = vsel %vm2379, 1, 0
        %v2444 = vsel %vm2380, 1, 0
        %v2445 = vsel %vm2381, 1, 0
        %v2446 = vsel %vm2382, 1, 0
        %v2447 = vsel %vm2383, 1, 0
        %v2448 = vsel %vm2384, 1, 0
        %v2449 = vsel %vm2385, 1, 0
        %v2450 = vsel %vm2386, 1, 0
        %v2451 = vsel %vm2387, 1, 0
        %v2452 = vsel %vm2388, 1, 0
        %v2453 = vsel %vm2389, 1, 0
        %v2454 = vsel %vm2390, 1, 0
        %v2455 = vsel %vm2391, 1, 0
        %v2456 = vsel %vm2392, 1, 0
        %v2457 = vsel %vm2393, 1, 0
        %v2458 = vsel %vm2394, 1, 0
        %v2459 = vsel %vm2395, 1, 0
        %v2460 = vsel %vm2396, 1, 0
        %v2461 = vsel %vm2397, 1, 0
        %v2462 = vsel %vm2398, 1, 0
        %v2463 = vsel %vm2399, 1, 0
        %v2464 = vsel %vm2400, 1, 0
        %v2465 = vsel %vm2401, 1, 0
        %v2466 = vsel %vm2402, 1, 0
        %v2467 = vsel %vm2403, 1, 0
        %v2468 = vsel %vm2404, 1, 0
        %v2469 = vsel %vm2405, 1, 0
        %v2470 = vsel %vm2406, 1, 0
        %v2471 = vsel %vm2407, 1, 0
        %v2472 = vsel %vm2408, 1, 0
        %v2473 = vsel %vm2409, 1, 0
        %v2474 = vsel %vm2410, 1, 0
        %v2475 = vsel %vm2411, 1, 0
        %v2476 = vsel %vm2412, 1, 0
        %v2477 = vsel %vm2413, 1, 0
        %v2478 = vsel %vm2414, 1, 0
        %v2479 = vsel %vm2415, 1, 0
        %v2480 = vsel %vm2416, 1, 0
        %v2481 = vsel %vm2417, 1, 0
        %v2482 = vsel %vm2418, 1, 0
        %v2483 = vsel %vm2419, 1, 0
        %v2484 = vsel %vm2420, 1, 0
        %v2485 = vsel %vm2421, 1, 0
        %v2486 = vcvt.s32.f32 %v2422
        %v2487 = vcvt.s32.f32 %v2423
        %v2488 = vcvt.s32.f32 %v2424
        %v2489 = vcvt.s32.f32 %v2425
        %v2490 = vcvt.s32.f32 %v2426
        %v2491 = vcvt.s32.f32 %v2427
        %v2492 = vcvt.s32.f32 %v2428
        %v2493 = vcvt.s32.f32 %v2429
        %v2494 = vcvt.s32.f32 %v2430
        %v2495 = vcvt.s32.f32 %v2431
        %v2496 = vcvt.s32.f32 %v2432
        %v2497 = vcvt.s32.f32 %v2433
        %v2498 = vcvt.s32.f32 %v2434
        %v2499 = vcvt.s32.f32 %v2435
        %v2500 = vcvt.s32.f32 %v2436
        %v2501 = vcvt.s32.f32 %v2437
        %v2502 = vcvt.s32.f32 %v2438
        %v2503 = vcvt.s32.f32 %v2439
        %v2504 = vcvt.s32.f32 %v2440
        %v2505 = vcvt.s32.f32 %v2441
        %v2506 = vcvt.s32.f32 %v2442
        %v2507 = vcvt.s32.f32 %v2443
        %v2508 = vcvt.s32.f32 %v2444
        %v2509 = vcvt.s32.f32 %v2445
        %v2510 = vcvt.s32.f32 %v2446
        %v2511 = vcvt.s32.f32 %v2447
        %v2512 = vcvt.s32.f32 %v2448
        %v2513 = vcvt.s32.f32 %v2449
        %v2514 = vcvt.s32.f32 %v2450
        %v2515 = vcvt.s32.f32 %v2451
        %v2516 = vcvt.s32.f32 %v2452
        %v2517 = vcvt.s32.f32 %v2453
        %v2518 = vcvt.s32.f32 %v2454
        %v2519 = vcvt.s32.f32 %v2455
        %v2520 = vcvt.s32.f32 %v2456
        %v2521 = vcvt.s32.f32 %v2457
        %v2522 = vcvt.s32.f32 %v2458
        %v2523 = vcvt.s32.f32 %v2459
        %v2524 = vcvt.s32.f32 %v2460
        %v2525 = vcvt.s32.f32 %v2461
        %v2526 = vcvt.s32.f32 %v2462
        %v2527 = vcvt.s32.f32 %v2463
        %v2528 = vcvt.s32.f32 %v2464
        %v2529 = vcvt.s32.f32 %v2465
        %v2530 = vcvt.s32.f32 %v2466
        %v2531 = vcvt.s32.f32 %v2467
        %v2532 = vcvt.s32.f32 %v2468
        %v2533 = vcvt.s32.f32 %v2469
        %v2534 = vcvt.s32.f32 %v2470
        %v2535 = vcvt.s32.f32 %v2471
        %v2536 = vcvt.s32.f32 %v2472
        %v2537 = vcvt.s32.f32 %v2473
        %v2538 = vcvt.s32.f32 %v2474
        %v2539 = vcvt.s32.f32 %v2475
        %v2540 = vcvt.s32.f32 %v2476
        %v2541 = vcvt.s32.f32 %v2477
        %v2542 = vcvt.s32.f32 %v2478
        %v2543 = vcvt.s32.f32 %v2479
        %v2544 = vcvt.s32.f32 %v2480
        %v2545 = vcvt.s32.f32 %v2481
        %v2546 = vcvt.s32.f32 %v2482
        %v2547 = vcvt.s32.f32 %v2483
        %v2548 = vcvt.s32.f32 %v2484
        %v2549 = vcvt.s32.f32 %v2485
        %v2550 = vadd.f32 %v2286, %v2486
        %v2551 = vadd.f32 %v2287, %v2487
        %v2552 = vadd.f32 %v2288, %v2488
        %v2553 = vadd.f32 %v2289, %v2489
        %v2554 = vadd.f32 %v2290, %v2490
        %v2555 = vadd.f32 %v2291, %v2491
        %v2556 = vadd.f32 %v2292, %v2492
        %v2557 = vadd.f32 %v2293, %v2493
        %v2558 = vadd.f32 %v2294, %v2494
        %v2559 = vadd.f32 %v2295, %v2495
        %v2560 = vadd.f32 %v2296, %v2496
        %v2561 = vadd.f32 %v2297, %v2497
        %v2562 = vadd.f32 %v2298, %v2498
        %v2563 = vadd.f32 %v2299, %v2499
        %v2564 = vadd.f32 %v2300, %v2500
        %v2565 = vadd.f32 %v2301, %v2501
        %v2566 = vadd.f32 %v2302, %v2502
        %v2567 = vadd.f32 %v2303, %v2503
        %v2568 = vadd.f32 %v2304, %v2504
        %v2569 = vadd.f32 %v2305, %v2505
        %v2570 = vadd.f32 %v2306, %v2506
        %v2571 = vadd.f32 %v2307, %v2507
        %v2572 = vadd.f32 %v2308, %v2508
        %v2573 = vadd.f32 %v2309, %v2509
        %v2574 = vadd.f32 %v2310, %v2510
        %v2575 = vadd.f32 %v2311, %v2511
        %v2576 = vadd.f32 %v2312, %v2512
        %v2577 = vadd.f32 %v2313, %v2513
        %v2578 = vadd.f32 %v2314, %v2514
        %v2579 = vadd.f32 %v2315, %v2515
        %v2580 = vadd.f32 %v2316, %v2516
        %v2581 = vadd.f32 %v2317, %v2517
        %v2582 = vadd.f32 %v2318, %v2518
        %v2583 = vadd.f32 %v2319, %v2519
        %v2584 = vadd.f32 %v2320, %v2520
        %v2585 = vadd.f32 %v2321, %v2521
        %v2586 = vadd.f32 %v2322, %v2522
        %v2587 = vadd.f32 %v2323, %v2523
        %v2588 = vadd.f32 %v2324, %v2524
        %v2589 = vadd.f32 %v2325, %v2525
        %v2590 = vadd.f32 %v2326, %v2526
        %v2591 = vadd.f32 %v2327, %v2527
        %v2592 = vadd.f32 %v2328, %v2528
        %v2593 = vadd.f32 %v2329, %v2529
        %v2594 = vadd.f32 %v2330, %v2530
        %v2595 = vadd.f32 %v2331, %v2531
        %v2596 = vadd.f32 %v2332, %v2532
        %v2597 = vadd.f32 %v2333, %v2533
        %v2598 = vadd.f32 %v2334, %v2534
        %v2599 = vadd.f32 %v2335, %v2535
        %v2600 = vadd.f32 %v2336, %v2536
        %v2601 = vadd.f32 %v2337, %v2537
        %v2602 = vadd.f32 %v2338, %v2538
        %v2603 = vadd.f32 %v2339, %v2539
        %v2604 = vadd.f32 %v2340, %v2540
        %v2605 = vadd.f32 %v2341, %v2541
        %v2606 = vadd.f32 %v2342, %v2542
        %v2607 = vadd.f32 %v2343, %v2543
        %v2608 = vadd.f32 %v2344, %v2544
        %v2609 = vadd.f32 %v2345, %v2545
        %v2610 = vadd.f32 %v2346, %v2546
        %v2611 = vadd.f32 %v2347, %v2547
        %v2612 = vadd.f32 %v2348, %v2548
        %v2613 = vadd.f32 %v2349, %v2549
        %v2614 = vld [vmem:[#allocation2] sm:$0xff]
        %v2615 = vld [vmem:[#allocation2 + $0x8] sm:$0xff]
        %v2616 = vld [vmem:[#allocation2 + $0x10] sm:$0xff]
        %v2617 = vld [vmem:[#allocation2 + $0x18] sm:$0xff]
        %v2618 = vld [vmem:[#allocation2 + $0x20] sm:$0xff]
        %v2619 = vld [vmem:[#allocation2 + $0x28] sm:$0xff]
        %2620 = vmatprep.subr.mxu0 %v2581
        %2621 = vmatpush1.msra.mxu0 %v2580
        %2622 = vmatprep.subr.mxu0 %v2579
        %2623 = vmatpush1.msra.mxu0 %v2578
        %2624 = vmatprep.subr.mxu0 %v2577
        %2625 = vmatpush1.msra.mxu0 %v2576
        %2626 = vmatprep.subr.mxu0 %v2575
        %2627 = vmatpush1.msra.mxu0 %v2574
        %2628 = vmatprep.subr.mxu0 %v2573
        %2629 = vmatpush1.msra.mxu0 %v2572
        %2630 = vmatprep.subr.mxu0 %v2571
        %2631 = vmatpush1.msra.mxu0 %v2570
        %2632 = vmatprep.subr.mxu0 %v2569
        %2633 = vmatpush1.msra.mxu0 %v2568
        %2634 = vmatprep.subr.mxu0 %v2567
        %2635 = vmatpush1.msra.mxu0 %v2566
        %2636 = vmatprep.subr.mxu0 %v2565
        %2637 = vmatpush1.msra.mxu0 %v2564
        %2638 = vmatprep.subr.mxu0 %v2563
        %2639 = vmatpush1.msra.mxu0 %v2562
        %2640 = vmatprep.subr.mxu0 %v2561
        %2641 = vmatpush1.msra.mxu0 %v2560
        %2642 = vmatprep.subr.mxu0 %v2559
        %2643 = vmatpush1.msra.mxu0 %v2558
        %2644 = vmatprep.subr.mxu0 %v2557
        %2645 = vmatpush1.msra.mxu0 %v2556
        %2646 = vmatprep.subr.mxu0 %v2555
        %2647 = vmatpush1.msra.mxu0 %v2554
        %2648 = vmatprep.subr.mxu0 %v2553
        %2649 = vmatpush1.msra.mxu0 %v2552
        %2650 = vmatprep.subr.mxu0 %v2551
        %2651 = vmatpush1.msra.mxu0 %v2550
        %2652 = vmatprep.subr.mxu0 %v2613
        %2653 = vmatpush2.msra.mxu0 %v2612
        %2654 = vmatprep.subr.mxu0 %v2611
        %2655 = vmatpush2.msra.mxu0 %v2610
        %2656 = vmatprep.subr.mxu0 %v2609
        %2657 = vmatpush2.msra.mxu0 %v2608
        %2658 = vmatprep.subr.mxu0 %v2607
        %2659 = vmatpush2.msra.mxu0 %v2606
        %2660 = vmatprep.subr.mxu0 %v2605
        %2661 = vmatpush2.msra.mxu0 %v2604
        %2662 = vmatprep.subr.mxu0 %v2603
        %2663 = vmatpush2.msra.mxu0 %v2602
        %2664 = vmatprep.subr.mxu0 %v2601
        %2665 = vmatpush2.msra.mxu0 %v2600
        %2666 = vmatprep.subr.mxu0 %v2599
        %2667 = vmatpush2.msra.mxu0 %v2598
        %2668 = vmatprep.subr.mxu0 %v2597
        %2669 = vmatpush2.msra.mxu0 %v2596
        %2670 = vmatprep.subr.mxu0 %v2595
        %2671 = vmatpush2.msra.mxu0 %v2594
        %2672 = vmatprep.subr.mxu0 %v2593
        %2673 = vmatpush2.msra.mxu0 %v2592
        %2674 = vmatprep.subr.mxu0 %v2591
        %2675 = vmatpush2.msra.mxu0 %v2590
        %2676 = vmatprep.subr.mxu0 %v2589
        %2677 = vmatpush2.msra.mxu0 %v2588
        %2678 = vmatprep.subr.mxu0 %v2587
        %2679 = vmatpush2.msra.mxu0 %v2586
        %2680 = vmatprep.subr.mxu0 %v2585
        %2681 = vmatpush2.msra.mxu0 %v2584
        %2682 = vmatprep.subr.mxu0 %v2583
        %2683 = vmatpush2.msra.mxu0 %v2582
        %2684 = vmatprep.mubr.f32.mxu0 %v2615
        %2685 = vmatmul.mubr.f32.gmra.mxu0 %v2614
        %v2686 = vpop.f32.mrf.mxu0
        %v2687 = vadd.f32 0.0, %v2686
        %v2688 = vpop.f32.mrf.mxu0
        %v2689 = vadd.f32 0.0, %v2688
        %2690 = vmatprep.mubr.f32.mxu0 %v2617
        %2691 = vmatmul.mubr.f32.gmra.mxu0 %v2616
        %v2692 = vpop.f32.mrf.mxu0
        %v2693 = vadd.f32 0.0, %v2692
        %v2694 = vpop.f32.mrf.mxu0
        %v2695 = vadd.f32 0.0, %v2694
        %2696 = vmatprep.mubr.f32.mxu0 %v2619
        %2697 = vmatmul.mubr.f32.gmra.mxu0 %v2618
        %v2698 = vpop.f32.mrf.mxu0
        %v2699 = vadd.f32 0.0, %v2698
        %v2700 = vpop.f32.mrf.mxu0
        %v2701 = vadd.f32 0.0, %v2700
        %2702 = vdwg.mxu0
        %s2703 = smul.u32 %s27, 256
        %s2704 = sshra.s32 %s2703, 7
        %s2705 = sand.u32 %s2703, 127
        %s2706 = smul.addr %s2704, 8
        %s2707 = scalar_lea.vmem [#allocation3], %s2706
        %v2708 = vld [vmem:[%s2707] sm:$0xff]
        %v2709 = vld [vmem:[%s2707 + $0x8] sm:$0xff]
        %v2710 = vld [vmem:[%s2707 + $0x10] sm:$0xff]
        %v2711 = vld [vmem:[%s2707 + $0x18] sm:$0xff]
        %v2712 = vld [vmem:[%s4] sm:$0xff]
        %v2713 = vld [vmem:[%s4 + $0x8] sm:$0xff]
        %v2714 = vld [vmem:[%s5] sm:$0xff]
        %v2715 = vld [vmem:[%s5 + $0x8] sm:$0xff]
        %2717 = vset.pattern.permute.xlu0 0
        %2718 = vperm.xlu0 %2717, %v2714
        %v2719 = vpop.permute.xlu0 %2718
        %2722 = vset.pattern.permute.xlu0 0
        %2723 = vperm.xlu0 %2722, %v2715
        %v2724 = vpop.permute.xlu0 %2723
        %vm2726 = vcmask 64512
        %v2728 = vsel %vm2726, %v2712, 0
        %v2731 = vsel %vm2726, %v2713, 0
        %2733 = vmatprep.subr.mxu0 0.0
        %2734 = vmatpush1.msra.mxu0 0.0
        %2735 = vmatprep.subr.mxu0 0.0
        %2736 = vmatpush1.msra.mxu0 0.0
        %2737 = vmatprep.subr.mxu0 0.0
        %2738 = vmatpush1.msra.mxu0 0.0
        %2739 = vmatprep.subr.mxu0 0.0
        %2740 = vmatpush1.msra.mxu0 0.0
        %2741 = vmatprep.subr.mxu0 0.0
        %2742 = vmatpush1.msra.mxu0 0.0
        %2743 = vmatprep.subr.mxu0 0.0
        %2744 = vmatpush1.msra.mxu0 0.0
        %2745 = vmatprep.subr.mxu0 0.0
        %2746 = vmatpush1.msra.mxu0 0.0
        %2747 = vmatprep.subr.mxu0 0.0
        %2748 = vmatpush1.msra.mxu0 0.0
        %2749 = vmatprep.subr.mxu0 0.0
        %2750 = vmatpush1.msra.mxu0 0.0
        %2751 = vmatprep.subr.mxu0 0.0
        %2752 = vmatpush1.msra.mxu0 0.0
        %2753 = vmatprep.subr.mxu0 0.0
        %2754 = vmatpush1.msra.mxu0 0.0
        %2755 = vmatprep.subr.mxu0 0.0
        %2756 = vmatpush1.msra.mxu0 0.0
        %2757 = vmatprep.subr.mxu0 0.0
        %2758 = vmatpush1.msra.mxu0 0.0
        %2759 = vmatprep.subr.mxu0 0.0
        %2760 = vmatpush1.msra.mxu0 0.0
        %2761 = vmatprep.subr.mxu0 0.0
        %2762 = vmatpush1.msra.mxu0 0.0
        %2763 = vmatprep.subr.mxu0 %v2689
        %2764 = vmatpush1.msra.mxu0 %v2687
        %2765 = vmatprep.subr.mxu0 0.0
        %2766 = vmatpush2.msra.mxu0 0.0
        %2767 = vmatprep.subr.mxu0 0.0
        %2768 = vmatpush2.msra.mxu0 0.0
        %2769 = vmatprep.subr.mxu0 0.0
        %2770 = vmatpush2.msra.mxu0 0.0
        %2771 = vmatprep.subr.mxu0 0.0
        %2772 = vmatpush2.msra.mxu0 0.0
        %2773 = vmatprep.subr.mxu0 0.0
        %2774 = vmatpush2.msra.mxu0 0.0
        %2775 = vmatprep.subr.mxu0 0.0
        %2776 = vmatpush2.msra.mxu0 0.0
        %2777 = vmatprep.subr.mxu0 0.0
        %2778 = vmatpush2.msra.mxu0 0.0
        %2779 = vmatprep.subr.mxu0 0.0
        %2780 = vmatpush2.msra.mxu0 0.0
        %2781 = vmatprep.subr.mxu0 0.0
        %2782 = vmatpush2.msra.mxu0 0.0
        %2783 = vmatprep.subr.mxu0 0.0
        %2784 = vmatpush2.msra.mxu0 0.0
        %2785 = vmatprep.subr.mxu0 0.0
        %2786 = vmatpush2.msra.mxu0 0.0
        %2787 = vmatprep.subr.mxu0 0.0
        %2788 = vmatpush2.msra.mxu0 0.0
        %2789 = vmatprep.subr.mxu0 0.0
        %2790 = vmatpush2.msra.mxu0 0.0
        %2791 = vmatprep.subr.mxu0 0.0
        %2792 = vmatpush2.msra.mxu0 0.0
        %2793 = vmatprep.subr.mxu0 0.0
        %2794 = vmatpush2.msra.mxu0 0.0
        %2795 = vmatprep.subr.mxu0 0.0
        %2796 = vmatpush2.msra.mxu0 0.0
        %2797 = vmatprep.mubr.f32.mxu0 0.0
        %2798 = vmatmul.mubr.f32.gmra.mxu0 %v2728
        %v2799 = vpop.f32.mrf.mxu0
        %v2800 = vadd.f32 %v2719, %v2799
        %v2801 = vpop.f32.mrf.mxu0
        %v2802 = vadd.f32 %v2719, %v2801
        %2803 = vmatprep.mubr.f32.mxu0 0.0
        %2804 = vmatmul.mubr.f32.gmra.mxu0 %v2731
        %v2805 = vpop.f32.mrf.mxu0
        %v2806 = vadd.f32 %v2724, %v2805
        %v2807 = vpop.f32.mrf.mxu0
        %v2808 = vadd.f32 %v2724, %v2807
        %2809 = vdwg.mxu0
        %v2810 = vmax.f32 %v2800, 0.0
        %v2811 = vmax.f32 %v2802, 0.0
        %v2812 = vmax.f32 %v2806, 0.0
        %v2813 = vmax.f32 %v2808, 0.0
        %v2814 = vadd.f32 %v2810, %v2693
        %v2815 = vadd.f32 %v2811, %v2695
        %v2816 = vadd.f32 %v2812, %v2699
        %v2817 = vadd.f32 %v2813, %v2701
        %v2818 = vadd.f32 %v2814, %v2708
        %v2819 = vadd.f32 %v2815, %v2709
        %v2820 = vadd.f32 %v2816, %v2710
        %v2821 = vadd.f32 %v2817, %v2711
        %v2822 = vld [vmem:[%s6] sm:$0xff]
        %v2823 = vld [vmem:[%s6 + $0x8] sm:$0xff]
        %v2824 = vld [vmem:[%s7] sm:$0xff]
        %v2825 = vld [vmem:[%s7 + $0x8] sm:$0xff]
        %2827 = vset.pattern.permute.xlu0 0
        %2828 = vperm.xlu0 %2827, %v2824
        %v2829 = vpop.permute.xlu0 %2828
        %2832 = vset.pattern.permute.xlu0 0
        %2833 = vperm.xlu0 %2832, %v2825
        %v2834 = vpop.permute.xlu0 %2833
        %vm2836 = vcmask 130048
        %v2838 = vsel %vm2836, %v2822, 0
        %v2841 = vsel %vm2836, %v2823, 0
        %2843 = vmatprep.subr.mxu0 0.0
        %2844 = vmatpush1.msra.mxu0 0.0
        %2845 = vmatprep.subr.mxu0 0.0
        %2846 = vmatpush1.msra.mxu0 0.0
        %2847 = vmatprep.subr.mxu0 0.0
        %2848 = vmatpush1.msra.mxu0 0.0
        %2849 = vmatprep.subr.mxu0 0.0
        %2850 = vmatpush1.msra.mxu0 0.0
        %2851 = vmatprep.subr.mxu0 0.0
        %2852 = vmatpush1.msra.mxu0 0.0
        %2853 = vmatprep.subr.mxu0 0.0
        %2854 = vmatpush1.msra.mxu0 0.0
        %2855 = vmatprep.subr.mxu0 0.0
        %2856 = vmatpush1.msra.mxu0 0.0
        %2857 = vmatprep.subr.mxu0 0.0
        %2858 = vmatpush1.msra.mxu0 0.0
        %2859 = vmatprep.subr.mxu0 0.0
        %2860 = vmatpush1.msra.mxu0 0.0
        %2861 = vmatprep.subr.mxu0 0.0
        %2862 = vmatpush1.msra.mxu0 0.0
        %2863 = vmatprep.subr.mxu0 0.0
        %2864 = vmatpush1.msra.mxu0 0.0
        %2865 = vmatprep.subr.mxu0 0.0
        %2866 = vmatpush1.msra.mxu0 0.0
        %2867 = vmatprep.subr.mxu0 0.0
        %2868 = vmatpush1.msra.mxu0 0.0
        %2869 = vmatprep.subr.mxu0 0.0
        %2870 = vmatpush1.msra.mxu0 0.0
        %2871 = vmatprep.subr.mxu0 %v2821
        %2872 = vmatpush1.msra.mxu0 %v2820
        %2873 = vmatprep.subr.mxu0 %v2819
        %2874 = vmatpush1.msra.mxu0 %v2818
        %2875 = vmatprep.subr.mxu0 0.0
        %2876 = vmatpush2.msra.mxu0 0.0
        %2877 = vmatprep.subr.mxu0 0.0
        %2878 = vmatpush2.msra.mxu0 0.0
        %2879 = vmatprep.subr.mxu0 0.0
        %2880 = vmatpush2.msra.mxu0 0.0
        %2881 = vmatprep.subr.mxu0 0.0
        %2882 = vmatpush2.msra.mxu0 0.0
        %2883 = vmatprep.subr.mxu0 0.0
        %2884 = vmatpush2.msra.mxu0 0.0
        %2885 = vmatprep.subr.mxu0 0.0
        %2886 = vmatpush2.msra.mxu0 0.0
        %2887 = vmatprep.subr.mxu0 0.0
        %2888 = vmatpush2.msra.mxu0 0.0
        %2889 = vmatprep.subr.mxu0 0.0
        %2890 = vmatpush2.msra.mxu0 0.0
        %2891 = vmatprep.subr.mxu0 0.0
        %2892 = vmatpush2.msra.mxu0 0.0
        %2893 = vmatprep.subr.mxu0 0.0
        %2894 = vmatpush2.msra.mxu0 0.0
        %2895 = vmatprep.subr.mxu0 0.0
        %2896 = vmatpush2.msra.mxu0 0.0
        %2897 = vmatprep.subr.mxu0 0.0
        %2898 = vmatpush2.msra.mxu0 0.0
        %2899 = vmatprep.subr.mxu0 0.0
        %2900 = vmatpush2.msra.mxu0 0.0
        %2901 = vmatprep.subr.mxu0 0.0
        %2902 = vmatpush2.msra.mxu0 0.0
        %2903 = vmatprep.subr.mxu0 0.0
        %2904 = vmatpush2.msra.mxu0 0.0
        %2905 = vmatprep.subr.mxu0 0.0
        %2906 = vmatpush2.msra.mxu0 0.0
        %2907 = vmatprep.mubr.f32.mxu0 0.0
        %2908 = vmatmul.mubr.f32.gmra.mxu0 %v2838
        %v2909 = vpop.f32.mrf.mxu0
        %v2910 = vadd.f32 %v2829, %v2909
        %v2911 = vpop.f32.mrf.mxu0
        %v2912 = vadd.f32 %v2829, %v2911
        %2913 = vmatprep.mubr.f32.mxu0 0.0
        %2914 = vmatmul.mubr.f32.gmra.mxu0 %v2841
        %v2915 = vpop.f32.mrf.mxu0
        %v2916 = vadd.f32 %v2834, %v2915
        %v2917 = vpop.f32.mrf.mxu0
        %v2918 = vadd.f32 %v2834, %v2917
        %2919 = vdwg.mxu0
        %v2920 = vmax.f32 %v2910, 0.0
        %v2921 = vmax.f32 %v2912, 0.0
        %v2922 = vmax.f32 %v2916, 0.0
        %v2923 = vmax.f32 %v2918, 0.0
        %2924 = vst [vmem:[%s338] sm:$0xff] %v2920
        %2925 = vst [vmem:[%s338 + $0x8] sm:$0xff] %v2921
        %2926 = vst [vmem:[%s338 + $0x10] sm:$0xff] %v2922
        %2927 = vst [vmem:[%s338 + $0x18] sm:$0xff] %v2923
        %s2928 = sand.u32 %s224, 1
        %s2929 = scalar_lea.sflag [#allocation5], %s2928
        %s2930 = sand.u32 %s224, 1
        %s2931 = smul.addr %s2930, 32
        %s2932 = scalar_lea.vmem [#allocation4], %s2931
        // Predicated region
        $region57: #{tpu_custom_call.1} parent=51 // pred_check
          %p2933 = pneg %p234
        $region58: #{tpu_custom_call.1} parent=51 // pred_check_branch
          %2935 = sbr.rel (%p2933) target = $region60
        $region59: #{tpu_custom_call.1} parent=51 // pred_region
          %s2936 = smul.u32 2, %s27
          %s2938 = ssub.s32 512, 512
          %2939 = vsyncadd %s2929, %s2938
          %s2940 = smul.addr %s26, 4
          %s2941 = sadd.s32 %s2936, %s2940
          %s2942 = smul.addr %s2941, 128
          %s2943 = scalar_lea.hbm %s8, %s2942
          %s2944 = sshll.u32 %s2932, 4
          %s2945 = int_to_ptr.vmem [resolvable:$true] %s2944
          %2950 = dma.vmem_to_hbm [thread:$0]  %s2945, 512, %s2943, %s2929, 256, 256, 16
        $region60: #{tpu_custom_call.1} parent=51 // pred_fallthru
          _
      $region52: #{tpu_custom_call.1} parent=5 // pred_fallthru
        _
      %p2951 = scmp.le.s32.totalorder 2, %s17
      // Predicated region
      $region61: #{tpu_custom_call.1} parent=5 // pred_check
        %p2952 = pneg %p2951
      $region62: #{tpu_custom_call.1} parent=5 // pred_check_branch
        %2954 = sbr.rel (%p2952) target = $region64
      $region63: #{tpu_custom_call.1} parent=5 // pred_region
        %s2955 = ssub.s32 %s17, 2
        // Predicated region
        $region65: #{tpu_custom_call.1} parent=63 // pred_check
          %p2956 = pneg %p240
        $region66: #{tpu_custom_call.1} parent=63 // pred_check_branch
          %2958 = sbr.rel (%p2956) target = $region68
        $region67: #{tpu_custom_call.1} parent=63 // pred_region
          %s2959 = sand.u32 %s225, 1
          %s2960 = scalar_lea.sflag [#allocation5], %s2959
          %s2961 = sand.u32 %s225, 1
          %s2962 = smul.addr %s2961, 32
          %s2963 = scalar_lea.vmem [#allocation4], %s2962
          %2964 = dma.done %s2960, 512
        $region68: #{tpu_custom_call.1} parent=63 // pred_fallthru
          _
      $region64: #{tpu_custom_call.1} parent=5 // pred_fallthru
        _
    $region6: #{tpu_custom_call.1} parent=1 // loop_footer
      %s21 = sadd.s32 1, %s17
    $region7: #{tpu_custom_call.1} parent=1 // loop_footer_branch
      %16 = sbr.rel target = $region3
    $region8: #{tpu_custom_call.1} parent=1 // loop_exit
      _
    %2965 = vsyncpa [#allocation5], 1
    %s2966 = scalar_lea.sflag [#allocation5], 1
    %2967 = vsyncpa %s2966, 1

</llo_original>
